<compile_context>
chip_gen: v7x
topology: tpu7x:2x2x1
jax: 0.10.0
libtpu: 0.0.40
codegen_flags: <defaults>
</compile_context>

<pallas_src>
import math

import jax
import jax.numpy as jnp
from jax.experimental import pallas as pl
from jax.experimental.pallas import tpu as pltpu


_VMEM_LIMIT = 32 * 1024 * 1024  # safe on all generations (v7x physical = 64 MiB)


# ----------------------------------------------------------------------------
# Pallas kernel 1: fused  out = relu(X_bf16 @ W_bf16 + b_f32), M-tiled grid
# ----------------------------------------------------------------------------
def _mm_bias_relu_kernel(x_ref, w_ref, b_ref, o_ref):
    acc = jnp.dot(x_ref[...], w_ref[...], preferred_element_type=jnp.float32)
    acc = jnp.maximum(acc + b_ref[...], 0.0)          # bias + ReLU in f32
    o_ref[...] = acc.astype(o_ref.dtype)


def matmul_bias_relu(x, w, b, *, tile_m=512, out_dtype=jnp.bfloat16):
    """x: (M, K) bf16, w: (K, N) bf16, b: (1, N) f32 -> relu(x @ w + b) : (M, N)."""
    M, K = x.shape
    K2, N = w.shape
    assert K == K2 and b.shape == (1, N)
    tm = min(tile_m, M)                                # clamp tile to array
    grid = (pl.cdiv(M, tm),)
    return pl.pallas_call(
        _mm_bias_relu_kernel,
        out_shape=jax.ShapeDtypeStruct((M, N), out_dtype),
        grid_spec=pltpu.PrefetchScalarGridSpec(
            num_scalar_prefetch=0,
            grid=grid,
            in_specs=[
                pl.BlockSpec((tm, K), lambda i: (i, 0)),   # M-tiled activations
                pl.BlockSpec((K, N), lambda i: (0, 0)),    # weight stays VMEM-resident
                pl.BlockSpec((1, N), lambda i: (0, 0)),    # bias stays VMEM-resident
            ],
            out_specs=pl.BlockSpec((tm, N), lambda i: (i, 0)),
        ),
        compiler_params=pltpu.CompilerParams(
            dimension_semantics=("parallel",),
            vmem_limit_bytes=_VMEM_LIMIT,
        ),
    )(x, w, b)


# ----------------------------------------------------------------------------
# Pallas kernel 2: fused linear1 + bias + ReLU + critic head + bias
# ----------------------------------------------------------------------------
def _linear_relu_critic_kernel(x_ref, w1_ref, b1_ref, wc_ref, bc_ref,
                               h_ref, v_ref):
    h = jnp.dot(x_ref[...], w1_ref[...], preferred_element_type=jnp.float32)
    h = jnp.maximum(h + b1_ref[...], 0.0)              # (tm, 512) f32, lane-dense
    h_ref[...] = h.astype(h_ref.dtype)
    # Critic epilogue: VPU multiply + lane reduce on the in-register hidden.
    v = jnp.sum(h * wc_ref[...], axis=-1, keepdims=True) + bc_ref[...]
    v_ref[...] = v.astype(v_ref.dtype)


def linear_relu_critic(x, w1, b1, wc, bc, *, tile_m=256):
    """x: (M, K) bf16, w1: (K, H) bf16, b1/wc: (1, H) f32, bc: (1, 1) f32."""
    M, K = x.shape
    K2, H = w1.shape
    assert K == K2 and b1.shape == (1, H) and wc.shape == (1, H) and bc.shape == (1, 1)
    tm = min(tile_m, M)
    grid = (pl.cdiv(M, tm),)
    return pl.pallas_call(
        _linear_relu_critic_kernel,
        out_shape=(jax.ShapeDtypeStruct((M, H), jnp.float32),
                   jax.ShapeDtypeStruct((M, 1), jnp.float32)),
        grid_spec=pltpu.PrefetchScalarGridSpec(
            num_scalar_prefetch=0,
            grid=grid,
            in_specs=[
                pl.BlockSpec((tm, K), lambda i: (i, 0)),
                pl.BlockSpec((K, H), lambda i: (0, 0)),
                pl.BlockSpec((1, H), lambda i: (0, 0)),
                pl.BlockSpec((1, H), lambda i: (0, 0)),
                pl.BlockSpec((1, 1), lambda i: (0, 0)),
            ],
            out_specs=[pl.BlockSpec((tm, H), lambda i: (i, 0)),
                       pl.BlockSpec((tm, 1), lambda i: (i, 0))],
        ),
        compiler_params=pltpu.CompilerParams(
            dimension_semantics=("parallel",),
            vmem_limit_bytes=_VMEM_LIMIT,
        ),
    )(x, w1, b1, wc, bc)


# ----------------------------------------------------------------------------
# im2col glue (plain JAX, NHWC, no transposes).  Feature ordering is
# tap-major / channel-minor: f = (i*kw + j)*Cin + c, matching the
# (kh, kw, Cin, Cout) weight flatten in prepare_params().
# ----------------------------------------------------------------------------
def _im2col_nhwc(x, kh, kw, stride):
    N, H, W, C = x.shape
    OH = (H - kh) // stride + 1
    OW = (W - kw) // stride + 1
    cols = []
    for i in range(kh):
        for j in range(kw):
            cols.append(x[:, i:i + stride * OH:stride, j:j + stride * OW:stride, :])
    p = jnp.concatenate(cols, axis=-1)                 # (N, OH, OW, kh*kw*C)
    return p.reshape(N * OH * OW, kh * kw * C), OH, OW


def conv2d_bias_relu(x_nhwc, wmat, b, kh, kw, stride):
    N = x_nhwc.shape[0]
    cout = wmat.shape[1]
    patches, OH, OW = _im2col_nhwc(x_nhwc, kh, kw, stride)
    y = matmul_bias_relu(patches, wmat, b)             # (N*OH*OW, Cout) bf16
    return y.reshape(N, OH, OW, cout)                  # stays NHWC, no transpose


# ----------------------------------------------------------------------------
# Parameter init (PyTorch layout) + one-time kernel-layout prep
# ----------------------------------------------------------------------------
def _orthogonal(key, shape, gain=1.0):
    rows = shape[0]
    cols = int(math.prod(shape[1:]))
    a = jax.random.normal(key, (max(rows, cols), min(rows, cols)), jnp.float32)
    q, r = jnp.linalg.qr(a)
    q = q * jnp.sign(jnp.diagonal(r))
    if rows < cols:
        q = q.T
    return (gain * q[:rows, :cols]).reshape(shape)


def init_params(key):
    """Parameters in the layouts the nn.Module holds them."""
    ks = jax.random.split(key, 10)
    g = math.sqrt(2.0)  # relu gain
    return {
        "conv1_w": _orthogonal(ks[0], (32, 4, 8, 8), g),
        "ab1":     0.1 * jax.random.normal(ks[1], (32,), jnp.float32),
        "conv2_w": _orthogonal(ks[2], (64, 32, 4, 4), g),
        "ab2":     0.1 * jax.random.normal(ks[3], (64,), jnp.float32),
        "conv3_w": _orthogonal(ks[4], (32, 64, 3, 3), g),
        "ab3":     0.1 * jax.random.normal(ks[5], (32,), jnp.float32),
        "linear1_w": _orthogonal(ks[6], (512, 32 * 7 * 7), g),   # torch (out, in)
        "ab_fc1":    0.1 * jax.random.normal(ks[7], (512,), jnp.float32),
        "critic_w":  _orthogonal(ks[8], (1, 512), 1.0),          # torch (out, in)
        "ab_fc2":    0.1 * jax.random.normal(ks[9], (1,), jnp.float32),
    }


def prepare_params(params):
    """One-time, zero-runtime-cost repack:
       * conv weights (Cout,Cin,kh,kw) -> (kh*kw*Cin, Cout) bf16; conv1 also
         scaled by 1/255 so the forward drops the `inputs / 255.0` pass.
       * linear1 (512, 1568 CHW-ordered cols) -> columns permuted to HWC order
         and transposed to (1568, 512) bf16, so the NHWC flatten matches the
         PyTorch NCHW .view() exactly.
       * critic kept f32 as a (1, 512) broadcast row for the fused epilogue."""
    bf16 = jnp.bfloat16

    def conv_w(w):
        co, ci, kh, kw = w.shape
        return w.transpose(2, 3, 1, 0).reshape(kh * kw * ci, co).astype(bf16)

    w_fc1 = params["linear1_w"].reshape(512, 32, 7, 7)            # (out, C, H, W)
    w_fc1 = w_fc1.transpose(2, 3, 1, 0).reshape(7 * 7 * 32, 512)  # rows in HWC order

    return {
        "w1": conv_w(params["conv1_w"] / 255.0),
        "b1": params["ab1"].reshape(1, -1).astype(jnp.float32),
        "w2": conv_w(params["conv2_w"]),
        "b2": params["ab2"].reshape(1, -1).astype(jnp.float32),
        "w3": conv_w(params["conv3_w"]),
        "b3": params["ab3"].reshape(1, -1).astype(jnp.float32),
        "wfc1": w_fc1.astype(bf16),
        "bfc1": params["ab_fc1"].reshape(1, -1).astype(jnp.float32),
        "wcrit": params["critic_w"].reshape(1, 512).astype(jnp.float32),
        "bcrit": params["ab_fc2"].reshape(1, 1).astype(jnp.float32),
    }


# ----------------------------------------------------------------------------
# Forward pass (matches CNNPolicy.forward: returns (value, hidden))
# ----------------------------------------------------------------------------
def cnn_policy_forward(prep, inputs):
    # Single layout fixup at the module boundary; downstream is NHWC bf16.
    x = inputs.transpose(0, 2, 3, 1).astype(jnp.bfloat16)       # (N, 84, 84, 4)
    n = x.shape[0]
    x = conv2d_bias_relu(x, prep["w1"], prep["b1"], 8, 8, 4)    # (N, 20, 20, 32)
    x = conv2d_bias_relu(x, prep["w2"], prep["b2"], 4, 4, 2)    # (N,  9,  9, 64)
    x = conv2d_bias_relu(x, prep["w3"], prep["b3"], 3, 3, 1)    # (N,  7,  7, 32)
    feat = x.reshape(n, 7 * 7 * 32)                             # HWC flatten
    hidden, value = linear_relu_critic(feat, prep["wfc1"], prep["bfc1"],
                                       prep["wcrit"], prep["bcrit"])
    return value, hidden


# Pure-XLA reference mirroring the PyTorch (NCHW) math, with the same bf16
# quantization points as the kernel pipeline (bf16 operands, f32 accumulate).
def reference_forward(params, inputs):
    bf16 = jnp.bfloat16

    def conv(x, w, b, s):
        y = jax.lax.conv_general_dilated(
            x.astype(bf16), w.astype(bf16), (s, s), "VALID",
            dimension_numbers=("NCHW", "OIHW", "NCHW"),
            preferred_element_type=jnp.float32)
        return jnp.maximum(y + b.reshape(1, -1, 1, 1), 0.0)

    x = conv(inputs, params["conv1_w"] / 255.0, params["ab1"], 4)
    x = conv(x, params["conv2_w"], params["ab2"], 2)
    x = conv(x, params["conv3_w"], params["ab3"], 1)
    x = x.reshape(x.shape[0], -1)                                # CHW flatten
    h = jnp.dot(x.astype(bf16), params["linear1_w"].T.astype(bf16),
                preferred_element_type=jnp.float32) + params["ab_fc1"]
    h = jnp.maximum(h, 0.0)
    value = jnp.dot(h, params["critic_w"].T) + params["ab_fc2"]
    return value, h


if __name__ == "__main__":
    key = jax.random.PRNGKey(0)
    pkey, xkey = jax.random.split(key)
    params = init_params(pkey)
    prep = prepare_params(params)

    # Atari frame stack: batch=2, 4 channels, 84x84 (84x84 is required so the
    # conv stack yields exactly 32*7*7 features for linear1).
    inputs = jax.random.uniform(xkey, (2, 4, 84, 84), jnp.float32, 0.0, 255.0)

    fwd = jax.jit(cnn_policy_forward)
    value, hidden = jax.block_until_ready(fwd(prep, inputs))
    value_ref, hidden_ref = jax.block_until_ready(reference_forward(params, inputs))

    assert value.shape == (2, 1) and hidden.shape == (2, 512)
    assert value.dtype == jnp.float32 and hidden.dtype == jnp.float32
    assert jnp.allclose(value, value_ref, rtol=2e-2, atol=2e-2), (
        "value mismatch, max abs err = %f" % float(jnp.max(jnp.abs(value - value_ref))))
    assert jnp.allclose(hidden, hidden_ref, rtol=2e-2, atol=2e-2), (
        "hidden mismatch, max abs err = %f" % float(jnp.max(jnp.abs(hidden - hidden_ref))))

    print("KERNEL_OK")
</pallas_src>

<mosaic_0001>
module attributes {stable_mosaic.version = 11 : i64} {
  func.func @_mm_bias_relu_kernel(%arg0: i32, %arg1: memref<512x256xbf16, #tpu.memory_space<vmem>>, %arg2: memref<256x32xbf16, #tpu.memory_space<vmem>>, %arg3: memref<1x32xf32, #tpu.memory_space<vmem>>, %arg4: memref<512x32xbf16, #tpu.memory_space<vmem>>) attributes {dimension_semantics = [#tpu.dimension_semantics<parallel>], iteration_bounds = array<i64: 2>, scalar_prefetch = 0 : i64, scratch_operands = 0 : i64, tpu.core_type = #tpu.core_type<tc>, window_params = [{transform_indices = @transform_0, window_bounds = array<i64: 512, 256>}, {pipeline_mode = #tpu.pipeline_mode<synchronous>, transform_indices = @transform_1, window_bounds = array<i64: 256, 32>}, {pipeline_mode = #tpu.pipeline_mode<synchronous>, transform_indices = @transform_2, window_bounds = array<i64: 1, 32>}, {transform_indices = @transform_3, window_bounds = array<i64: 512, 32>}]} {
    %c0 = arith.constant 0 : index
    %c0_0 = arith.constant 0 : index
    %0 = vector.load %arg1[%c0, %c0_0] : memref<512x256xbf16, #tpu.memory_space<vmem>>, vector<512x256xbf16>
    %c0_1 = arith.constant 0 : index
    %c0_2 = arith.constant 0 : index
    %1 = vector.load %arg2[%c0_1, %c0_2] : memref<256x32xbf16, #tpu.memory_space<vmem>>, vector<256x32xbf16>
    %cst = arith.constant dense<0.000000e+00> : vector<512x32xf32>
    %2 = tpu.matmul %0, %1, %cst {dimension_numbers = #tpu.dot_dimension_numbers<[1], [0], [0], [1], [0, 0, 1, 1], [], []>} : vector<512x256xbf16>, vector<256x32xbf16>, vector<512x32xf32> -> vector<512x32xf32>
    %c0_3 = arith.constant 0 : index
    %c0_4 = arith.constant 0 : index
    %3 = vector.load %arg3[%c0_3, %c0_4] : memref<1x32xf32, #tpu.memory_space<vmem>>, vector<1x32xf32>
    %4 = vector.broadcast %3 : vector<1x32xf32> to vector<512x32xf32>
    %5 = arith.addf %2, %4 : vector<512x32xf32>
    %cst_5 = arith.constant 0.000000e+00 : f32
    %6 = vector.broadcast %cst_5 : f32 to vector<512x32xf32>
    %7 = arith.maximumf %5, %6 : vector<512x32xf32>
    %8 = arith.truncf %7 : vector<512x32xf32> to vector<512x32xbf16>
    %c0_6 = arith.constant 0 : index
    %c0_7 = arith.constant 0 : index
    %9 = vector.load %arg4[%c0_6, %c0_7] : memref<512x32xbf16, #tpu.memory_space<vmem>>, vector<512x32xbf16>
    tpu.vector_store %arg4[%c0_6, %c0_7], %8 {strides = array<i32>} : memref<512x32xbf16, #tpu.memory_space<vmem>>, vector<512x32xbf16>,
    return
  }
  func.func @transform_0(%arg0: i32) -> (i32, i32) {
    %c0_i32 = arith.constant 0 : i32
    %c0_i32_0 = arith.constant 0 : i32
    return %arg0, %c0_i32 : i32, i32
  }
  func.func @transform_1(%arg0: i32) -> (i32, i32) {
    %c0_i32 = arith.constant 0 : i32
    %c0_i32_0 = arith.constant 0 : i32
    %c0_i32_1 = arith.constant 0 : i32
    return %c0_i32, %c0_i32_0 : i32, i32
  }
  func.func @transform_2(%arg0: i32) -> (i32, i32) {
    %c0_i32 = arith.constant 0 : i32
    %c0_i32_0 = arith.constant 0 : i32
    %c0_i32_1 = arith.constant 0 : i32
    return %c0_i32, %c0_i32_0 : i32, i32
  }
  func.func @transform_3(%arg0: i32) -> (i32, i32) {
    %c0_i32 = arith.constant 0 : i32
    %c0_i32_0 = arith.constant 0 : i32
    return %arg0, %c0_i32 : i32, i32
  }
}

module attributes {stable_mosaic.version = 11 : i64} {
  func.func @_mm_bias_relu_kernel(%arg0: i32, %arg1: memref<162x512xbf16, #tpu.memory_space<vmem>>, %arg2: memref<512x64xbf16, #tpu.memory_space<vmem>>, %arg3: memref<1x64xf32, #tpu.memory_space<vmem>>, %arg4: memref<162x64xbf16, #tpu.memory_space<vmem>>) attributes {dimension_semantics = [#tpu.dimension_semantics<parallel>], iteration_bounds = array<i64: 1>, scalar_prefetch = 0 : i64, scratch_operands = 0 : i64, tpu.core_type = #tpu.core_type<tc>, window_params = [{transform_indices = @transform_0, window_bounds = array<i64: 162, 512>}, {pipeline_mode = #tpu.pipeline_mode<synchronous>, transform_indices = @transform_1, window_bounds = array<i64: 512, 64>}, {pipeline_mode = #tpu.pipeline_mode<synchronous>, transform_indices = @transform_2, window_bounds = array<i64: 1, 64>}, {transform_indices = @transform_3, window_bounds = array<i64: 162, 64>}]} {
    %c0 = arith.constant 0 : index
    %c0_0 = arith.constant 0 : index
    %0 = vector.load %arg1[%c0, %c0_0] : memref<162x512xbf16, #tpu.memory_space<vmem>>, vector<162x512xbf16>
    %c0_1 = arith.constant 0 : index
    %c0_2 = arith.constant 0 : index
    %1 = vector.load %arg2[%c0_1, %c0_2] : memref<512x64xbf16, #tpu.memory_space<vmem>>, vector<512x64xbf16>
    %cst = arith.constant dense<0.000000e+00> : vector<162x64xf32>
    %2 = tpu.matmul %0, %1, %cst {dimension_numbers = #tpu.dot_dimension_numbers<[1], [0], [0], [1], [0, 0, 1, 1], [], []>} : vector<162x512xbf16>, vector<512x64xbf16>, vector<162x64xf32> -> vector<162x64xf32>
    %c0_3 = arith.constant 0 : index
    %c0_4 = arith.constant 0 : index
    %3 = vector.load %arg3[%c0_3, %c0_4] : memref<1x64xf32, #tpu.memory_space<vmem>>, vector<1x64xf32>
    %4 = vector.broadcast %3 : vector<1x64xf32> to vector<162x64xf32>
    %5 = arith.addf %2, %4 : vector<162x64xf32>
    %cst_5 = arith.constant 0.000000e+00 : f32
    %6 = vector.broadcast %cst_5 : f32 to vector<162x64xf32>
    %7 = arith.maximumf %5, %6 : vector<162x64xf32>
    %8 = arith.truncf %7 : vector<162x64xf32> to vector<162x64xbf16>
    %c0_6 = arith.constant 0 : index
    %c0_7 = arith.constant 0 : index
    %9 = vector.load %arg4[%c0_6, %c0_7] : memref<162x64xbf16, #tpu.memory_space<vmem>>, vector<162x64xbf16>
    tpu.vector_store %arg4[%c0_6, %c0_7], %8 {strides = array<i32>} : memref<162x64xbf16, #tpu.memory_space<vmem>>, vector<162x64xbf16>,
    return
  }
  func.func @transform_0(%arg0: i32) -> (i32, i32) {
    %c0_i32 = arith.constant 0 : i32
    %c0_i32_0 = arith.constant 0 : i32
    return %arg0, %c0_i32 : i32, i32
  }
  func.func @transform_1(%arg0: i32) -> (i32, i32) {
    %c0_i32 = arith.constant 0 : i32
    %c0_i32_0 = arith.constant 0 : i32
    %c0_i32_1 = arith.constant 0 : i32
    return %c0_i32, %c0_i32_0 : i32, i32
  }
  func.func @transform_2(%arg0: i32) -> (i32, i32) {
    %c0_i32 = arith.constant 0 : i32
    %c0_i32_0 = arith.constant 0 : i32
    %c0_i32_1 = arith.constant 0 : i32
    return %c0_i32, %c0_i32_0 : i32, i32
  }
  func.func @transform_3(%arg0: i32) -> (i32, i32) {
    %c0_i32 = arith.constant 0 : i32
    %c0_i32_0 = arith.constant 0 : i32
    return %arg0, %c0_i32 : i32, i32
  }
}

module attributes {stable_mosaic.version = 11 : i64} {
  func.func @_mm_bias_relu_kernel(%arg0: i32, %arg1: memref<98x576xbf16, #tpu.memory_space<vmem>>, %arg2: memref<576x32xbf16, #tpu.memory_space<vmem>>, %arg3: memref<1x32xf32, #tpu.memory_space<vmem>>, %arg4: memref<98x32xbf16, #tpu.memory_space<vmem>>) attributes {dimension_semantics = [#tpu.dimension_semantics<parallel>], iteration_bounds = array<i64: 1>, scalar_prefetch = 0 : i64, scratch_operands = 0 : i64, tpu.core_type = #tpu.core_type<tc>, window_params = [{transform_indices = @transform_0, window_bounds = array<i64: 98, 576>}, {pipeline_mode = #tpu.pipeline_mode<synchronous>, transform_indices = @transform_1, window_bounds = array<i64: 576, 32>}, {pipeline_mode = #tpu.pipeline_mode<synchronous>, transform_indices = @transform_2, window_bounds = array<i64: 1, 32>}, {transform_indices = @transform_3, window_bounds = array<i64: 98, 32>}]} {
    %c0 = arith.constant 0 : index
    %c0_0 = arith.constant 0 : index
    %0 = vector.load %arg1[%c0, %c0_0] : memref<98x576xbf16, #tpu.memory_space<vmem>>, vector<98x576xbf16>
    %c0_1 = arith.constant 0 : index
    %c0_2 = arith.constant 0 : index
    %1 = vector.load %arg2[%c0_1, %c0_2] : memref<576x32xbf16, #tpu.memory_space<vmem>>, vector<576x32xbf16>
    %cst = arith.constant dense<0.000000e+00> : vector<98x32xf32>
    %2 = tpu.matmul %0, %1, %cst {dimension_numbers = #tpu.dot_dimension_numbers<[1], [0], [0], [1], [0, 0, 1, 1], [], []>} : vector<98x576xbf16>, vector<576x32xbf16>, vector<98x32xf32> -> vector<98x32xf32>
    %c0_3 = arith.constant 0 : index
    %c0_4 = arith.constant 0 : index
    %3 = vector.load %arg3[%c0_3, %c0_4] : memref<1x32xf32, #tpu.memory_space<vmem>>, vector<1x32xf32>
    %4 = vector.broadcast %3 : vector<1x32xf32> to vector<98x32xf32>
    %5 = arith.addf %2, %4 : vector<98x32xf32>
    %cst_5 = arith.constant 0.000000e+00 : f32
    %6 = vector.broadcast %cst_5 : f32 to vector<98x32xf32>
    %7 = arith.maximumf %5, %6 : vector<98x32xf32>
    %8 = arith.truncf %7 : vector<98x32xf32> to vector<98x32xbf16>
    %c0_6 = arith.constant 0 : index
    %c0_7 = arith.constant 0 : index
    %9 = vector.load %arg4[%c0_6, %c0_7] : memref<98x32xbf16, #tpu.memory_space<vmem>>, vector<98x32xbf16>
    tpu.vector_store %arg4[%c0_6, %c0_7], %8 {strides = array<i32>} : memref<98x32xbf16, #tpu.memory_space<vmem>>, vector<98x32xbf16>,
    return
  }
  func.func @transform_0(%arg0: i32) -> (i32, i32) {
    %c0_i32 = arith.constant 0 : i32
    %c0_i32_0 = arith.constant 0 : i32
    return %arg0, %c0_i32 : i32, i32
  }
  func.func @transform_1(%arg0: i32) -> (i32, i32) {
    %c0_i32 = arith.constant 0 : i32
    %c0_i32_0 = arith.constant 0 : i32
    %c0_i32_1 = arith.constant 0 : i32
    return %c0_i32, %c0_i32_0 : i32, i32
  }
  func.func @transform_2(%arg0: i32) -> (i32, i32) {
    %c0_i32 = arith.constant 0 : i32
    %c0_i32_0 = arith.constant 0 : i32
    %c0_i32_1 = arith.constant 0 : i32
    return %c0_i32, %c0_i32_0 : i32, i32
  }
  func.func @transform_3(%arg0: i32) -> (i32, i32) {
    %c0_i32 = arith.constant 0 : i32
    %c0_i32_0 = arith.constant 0 : i32
    return %arg0, %c0_i32 : i32, i32
  }
}

module attributes {stable_mosaic.version = 11 : i64} {
  func.func @_linear_relu_critic_kernel(%arg0: i32, %arg1: memref<2x1568xbf16, #tpu.memory_space<vmem>>, %arg2: memref<1568x512xbf16, #tpu.memory_space<vmem>>, %arg3: memref<1x512xf32, #tpu.memory_space<vmem>>, %arg4: memref<1x512xf32, #tpu.memory_space<vmem>>, %arg5: memref<1x1xf32, #tpu.memory_space<vmem>>, %arg6: memref<2x512xf32, #tpu.memory_space<vmem>>, %arg7: memref<2x1xf32, #tpu.memory_space<vmem>>) attributes {dimension_semantics = [#tpu.dimension_semantics<parallel>], iteration_bounds = array<i64: 1>, scalar_prefetch = 0 : i64, scratch_operands = 0 : i64, tpu.core_type = #tpu.core_type<tc>, window_params = [{transform_indices = @transform_0, window_bounds = array<i64: 2, 1568>}, {pipeline_mode = #tpu.pipeline_mode<synchronous>, transform_indices = @transform_1, window_bounds = array<i64: 1568, 512>}, {pipeline_mode = #tpu.pipeline_mode<synchronous>, transform_indices = @transform_2, window_bounds = array<i64: 1, 512>}, {pipeline_mode = #tpu.pipeline_mode<synchronous>, transform_indices = @transform_3, window_bounds = array<i64: 1, 512>}, {pipeline_mode = #tpu.pipeline_mode<synchronous>, transform_indices = @transform_4, window_bounds = array<i64: 1, 1>}, {transform_indices = @transform_5, window_bounds = array<i64: 2, 512>}, {transform_indices = @transform_6, window_bounds = array<i64: 2, 1>}]} {
    %c0 = arith.constant 0 : index
    %c0_0 = arith.constant 0 : index
    %0 = vector.load %arg1[%c0, %c0_0] : memref<2x1568xbf16, #tpu.memory_space<vmem>>, vector<2x1568xbf16>
    %c0_1 = arith.constant 0 : index
    %c0_2 = arith.constant 0 : index
    %1 = vector.load %arg2[%c0_1, %c0_2] : memref<1568x512xbf16, #tpu.memory_space<vmem>>, vector<1568x512xbf16>
    %cst = arith.constant dense<0.000000e+00> : vector<2x512xf32>
    %2 = tpu.matmul %0, %1, %cst {dimension_numbers = #tpu.dot_dimension_numbers<[1], [0], [0], [1], [0, 0, 1, 1], [], []>} : vector<2x1568xbf16>, vector<1568x512xbf16>, vector<2x512xf32> -> vector<2x512xf32>
    %c0_3 = arith.constant 0 : index
    %c0_4 = arith.constant 0 : index
    %3 = vector.load %arg3[%c0_3, %c0_4] : memref<1x512xf32, #tpu.memory_space<vmem>>, vector<1x512xf32>
    %4 = vector.broadcast %3 : vector<1x512xf32> to vector<2x512xf32>
    %5 = arith.addf %2, %4 : vector<2x512xf32>
    %cst_5 = arith.constant 0.000000e+00 : f32
    %6 = vector.broadcast %cst_5 : f32 to vector<2x512xf32>
    %7 = arith.maximumf %5, %6 : vector<2x512xf32>
    %c0_6 = arith.constant 0 : index
    %c0_7 = arith.constant 0 : index
    %8 = vector.load %arg6[%c0_6, %c0_7] : memref<2x512xf32, #tpu.memory_space<vmem>>, vector<2x512xf32>
    tpu.vector_store %arg6[%c0_6, %c0_7], %7 {strides = array<i32>} : memref<2x512xf32, #tpu.memory_space<vmem>>, vector<2x512xf32>,
    %c0_8 = arith.constant 0 : index
    %c0_9 = arith.constant 0 : index
    %9 = vector.load %arg4[%c0_8, %c0_9] : memref<1x512xf32, #tpu.memory_space<vmem>>, vector<1x512xf32>
    %10 = vector.broadcast %9 : vector<1x512xf32> to vector<2x512xf32>
    %11 = arith.mulf %7, %10 : vector<2x512xf32>
    %cst_10 = arith.constant dense<0.000000e+00> : vector<2xf32>
    %12 = vector.multi_reduction <add>, %11, %cst_10 [1] : vector<2x512xf32> to vector<2xf32>
    %13 = vector.shape_cast %12 : vector<2xf32> to vector<2x1xf32>
    %c0_11 = arith.constant 0 : index
    %c0_12 = arith.constant 0 : index
    %14 = vector.load %arg5[%c0_11, %c0_12] : memref<1x1xf32, #tpu.memory_space<vmem>>, vector<1x1xf32>
    %15 = vector.broadcast %14 : vector<1x1xf32> to vector<2x1xf32>
    %16 = arith.addf %13, %15 : vector<2x1xf32>
    %c0_13 = arith.constant 0 : index
    %c0_14 = arith.constant 0 : index
    %17 = vector.load %arg7[%c0_13, %c0_14] : memref<2x1xf32, #tpu.memory_space<vmem>>, vector<2x1xf32>
    tpu.vector_store %arg7[%c0_13, %c0_14], %16 {strides = array<i32>} : memref<2x1xf32, #tpu.memory_space<vmem>>, vector<2x1xf32>,
    return
  }
  func.func @transform_0(%arg0: i32) -> (i32, i32) {
    %c0_i32 = arith.constant 0 : i32
    %c0_i32_0 = arith.constant 0 : i32
    return %arg0, %c0_i32 : i32, i32
  }
  func.func @transform_1(%arg0: i32) -> (i32, i32) {
    %c0_i32 = arith.constant 0 : i32
    %c0_i32_0 = arith.constant 0 : i32
    %c0_i32_1 = arith.constant 0 : i32
    return %c0_i32, %c0_i32_0 : i32, i32
  }
  func.func @transform_2(%arg0: i32) -> (i32, i32) {
    %c0_i32 = arith.constant 0 : i32
    %c0_i32_0 = arith.constant 0 : i32
    %c0_i32_1 = arith.constant 0 : i32
    return %c0_i32, %c0_i32_0 : i32, i32
  }
  func.func @transform_3(%arg0: i32) -> (i32, i32) {
    %c0_i32 = arith.constant 0 : i32
    %c0_i32_0 = arith.constant 0 : i32
    %c0_i32_1 = arith.constant 0 : i32
    return %c0_i32, %c0_i32_0 : i32, i32
  }
  func.func @transform_4(%arg0: i32) -> (i32, i32) {
    %c0_i32 = arith.constant 0 : i32
    %c0_i32_0 = arith.constant 0 : i32
    %c0_i32_1 = arith.constant 0 : i32
    return %c0_i32, %c0_i32_0 : i32, i32
  }
  func.func @transform_5(%arg0: i32) -> (i32, i32) {
    %c0_i32 = arith.constant 0 : i32
    %c0_i32_0 = arith.constant 0 : i32
    return %arg0, %c0_i32 : i32, i32
  }
  func.func @transform_6(%arg0: i32) -> (i32, i32) {
    %c0_i32 = arith.constant 0 : i32
    %c0_i32_0 = arith.constant 0 : i32
    return %arg0, %c0_i32 : i32, i32
  }
}

</mosaic_0001>

<llo_original>
// kernel: cnn_policy_forward.4
$region0: #{cnn_policy_forward.4}
  #allocation0 [shape = 'u32[]', space=smem, size = 0x4, offset = 0x4, fixed_abs, tag = 'smem constant byte address 0x4 - core index']
  #allocation1 [shape = 'u32[144,128]{1,0:T(1,128)}', space=vmem, size = 0x12000, scoped, tag = 'internal scratch']
  %s0 = inlined_call_operand.vmem [shape: bf16[800,256], index: 0, kind: input, shape index: {}]
  %s1 = inlined_call_operand.vmem [shape: bf16[256,32], index: 1, kind: input, shape index: {}]
  %s2 = inlined_call_operand.vmem [shape: f32[1,32], index: 2, kind: input, shape index: {}]
  %s3 = inlined_call_operand.vmem [shape: bf16[800,32], index: 3, kind: output, shape index: {}]
  %s4 = sld [smem:[#allocation0]]
  $region89: #{cnn_policy_forward.4} parent=0
    _
  %s6 = ssub.s32 1, %s4
  %s7 = scalar_select 0, %s6, %s4
  $region1: #{cnn_policy_forward.4} parent=0
    #allocation2 [shape = 'u8[262144]{0}', space=vmem, size = 0x40000, scoped, tag = 'output window, operand 0']
    loop: start=0, step=1, limit=4
    $region2: #{cnn_policy_forward.4} parent=1 // loop_pre_header
      _
    $region3: #{cnn_policy_forward.4} parent=1 // loop_header
      %s9 = sphi 0, %s13
      %p10 = scmp.ge.s32.totalorder %s9, 4
      %s19 = sphi 0, %s21
      %s22 = sphi 0, %s19
      %s23 = sphi 0, %s22
      %s39 = sphi 0, %s23
      %s43 = sphi 0, %s43
      %s45 = sphi 0, %s43
      %s46 = sphi 0, %s45
      %s60 = sphi 0, %s46
      %s64 = sphi 0, %s64
      %s66 = sphi 0, %s64
      %s67 = sphi 0, %s66
      %s81 = sphi 0, %s67
      %s87 = sphi 0, %s89
      %s90 = sphi 0, %s87
      %s91 = sphi 0, %s90
      %s107 = sphi 0, %s91
    $region4: #{cnn_policy_forward.4} parent=1 // loop_header_branch
      %12 = sbr.rel (%p10) target = $region8
    $region5: #{cnn_policy_forward.4} parent=1 // loop_body
      %s14 = ssub.s32 %s9, 1
      %s15 = ssub.s32 %s9, 2
      %s16 = sadd.s32 %s9, 1
      %s17 = ssub.s32 %s9, %s16
      %p18 = scmp.eq.s32.totalorder %s17, 0
      %s20 = sadd.s32 %s19, 1
      %s21 = scalar_select %p18, %s19, %s20
      %p24 = pneg %p18
      %p25 = scmp.eq.s32.totalorder %s9, 1
      %p26 = por %p24, %p25
      %p27 = scmp.ne.s32.totalorder %s19, %s22
      %p28 = scmp.eq.s32.totalorder %s9, 0
      %p29 = por %p27, %p28
      %p30 = scmp.ne.s32.totalorder %s19, %s22
      %p31 = scmp.eq.s32.totalorder %s14, 1
      %p32 = por %p30, %p31
      %p33 = scmp.ne.s32.totalorder %s22, %s23
      %p34 = scmp.eq.s32.totalorder %s14, 0
      %p35 = por %p33, %p34
      %p36 = scmp.ne.s32.totalorder %s22, %s23
      %p37 = scmp.eq.s32.totalorder %s15, 1
      %p38 = por %p36, %p37
      %p40 = scmp.ne.s32.totalorder %s23, %s39
      %p41 = scmp.eq.s32.totalorder %s15, 0
      %p42 = por %p40, %p41
      %s44 = sadd.s32 %s43, 1
      %p47 = scmp.eq.s32.totalorder %s9, 1
      %p48 = scmp.ne.s32.totalorder %s43, %s45
      %p49 = scmp.eq.s32.totalorder %s9, 0
      %p50 = por %p48, %p49
      %p51 = scmp.ne.s32.totalorder %s43, %s45
      %p52 = scmp.eq.s32.totalorder %s14, 1
      %p53 = por %p51, %p52
      %p54 = scmp.ne.s32.totalorder %s45, %s46
      %p55 = scmp.eq.s32.totalorder %s14, 0
      %p56 = por %p54, %p55
      %p57 = scmp.ne.s32.totalorder %s45, %s46
      %p58 = scmp.eq.s32.totalorder %s15, 1
      %p59 = por %p57, %p58
      %p61 = scmp.ne.s32.totalorder %s46, %s60
      %p62 = scmp.eq.s32.totalorder %s15, 0
      %p63 = por %p61, %p62
      %s65 = sadd.s32 %s64, 1
      %p68 = scmp.eq.s32.totalorder %s9, 1
      %p69 = scmp.ne.s32.totalorder %s64, %s66
      %p70 = scmp.eq.s32.totalorder %s9, 0
      %p71 = por %p69, %p70
      %p72 = scmp.ne.s32.totalorder %s64, %s66
      %p73 = scmp.eq.s32.totalorder %s14, 1
      %p74 = por %p72, %p73
      %p75 = scmp.ne.s32.totalorder %s66, %s67
      %p76 = scmp.eq.s32.totalorder %s14, 0
      %p77 = por %p75, %p76
      %p78 = scmp.ne.s32.totalorder %s66, %s67
      %p79 = scmp.eq.s32.totalorder %s15, 1
      %p80 = por %p78, %p79
      %p82 = scmp.ne.s32.totalorder %s67, %s81
      %p83 = scmp.eq.s32.totalorder %s15, 0
      %p84 = por %p82, %p83
      %s85 = ssub.s32 %s9, %s16
      %p86 = scmp.eq.s32.totalorder %s85, 0
      %s88 = sadd.s32 %s87, 1
      %s89 = scalar_select %p86, %s87, %s88
      %p92 = pneg %p86
      %p93 = scmp.eq.s32.totalorder %s9, 1
      %p94 = por %p92, %p93
      %p95 = scmp.ne.s32.totalorder %s87, %s90
      %p96 = scmp.eq.s32.totalorder %s9, 0
      %p97 = por %p95, %p96
      %p98 = scmp.ne.s32.totalorder %s87, %s90
      %p99 = scmp.eq.s32.totalorder %s14, 1
      %p100 = por %p98, %p99
      %p101 = scmp.ne.s32.totalorder %s90, %s91
      %p102 = scmp.eq.s32.totalorder %s14, 0
      %p103 = por %p101, %p102
      %p104 = scmp.ne.s32.totalorder %s90, %s91
      %p105 = scmp.eq.s32.totalorder %s15, 1
      %p106 = por %p104, %p105
      %p108 = scmp.ne.s32.totalorder %s91, %s107
      %p109 = scmp.eq.s32.totalorder %s15, 0
      %p110 = por %p108, %p109
      %p111 = scmp.le.s32.totalorder 1, %s9
      %p112 = scmp.lt.s32.totalorder %s9, 3
      %p113 = pnand %p111, %p112
      %p114 = pneg %p113
      // Predicated region
      $region9: #{cnn_policy_forward.4} parent=5 // pred_check
        _
      $region10: #{cnn_policy_forward.4} parent=5 // pred_check_branch
        %116 = sbr.rel (%p113) target = $region12
      $region11: #{cnn_policy_forward.4} parent=5 // pred_region
        %s117 = ssub.s32 %s9, 1
        // Predicated region
        $region13: #{cnn_policy_forward.4} parent=11 // pred_check
          %p118 = pneg %p56
        $region14: #{cnn_policy_forward.4} parent=11 // pred_check_branch
          %120 = sbr.rel (%p118) target = $region16
        $region15: #{cnn_policy_forward.4} parent=11 // pred_region
          _
        $region16: #{cnn_policy_forward.4} parent=11 // pred_fallthru
          _
        // Predicated region
        $region17: #{cnn_policy_forward.4} parent=11 // pred_check
          %p121 = pneg %p77
        $region18: #{cnn_policy_forward.4} parent=11 // pred_check_branch
          %123 = sbr.rel (%p121) target = $region20
        $region19: #{cnn_policy_forward.4} parent=11 // pred_region
          _
        $region20: #{cnn_policy_forward.4} parent=11 // pred_fallthru
          _
      $region12: #{cnn_policy_forward.4} parent=5 // pred_fallthru
        _
      %p124 = scmp.lt.s32.totalorder %s9, 2
      // Predicated region
      $region21: #{cnn_policy_forward.4} parent=5 // pred_check
        %p125 = pneg %p124
      $region22: #{cnn_policy_forward.4} parent=5 // pred_check_branch
        %127 = sbr.rel (%p125) target = $region24
      $region23: #{cnn_policy_forward.4} parent=5 // pred_region
        // Predicated region
        $region25: #{cnn_policy_forward.4} parent=23 // pred_check
          %p128 = pneg %p29
        $region26: #{cnn_policy_forward.4} parent=23 // pred_check_branch
          %130 = sbr.rel (%p128) target = $region28
        $region27: #{cnn_policy_forward.4} parent=23 // pred_region
          %s131 = smul.u32 64, %s9
          %s132 = ssub.s32 100, %s131
          %p133 = scmp.lt.s32.totalorder %s132, 64
          %s134 = scalar_select %p133, %s132, 64
          %s135 = smul.u32 64, %s134
          %s136 = smul.u32 %s135, 2
          %p137 = scmp.lt.s32.totalorder %s131, 99
          %s138 = scalar_select %p137, %s131, 99
          %s139 = smul.addr %s138, 2
          %s140 = smul.addr %s139, 4
          %s141 = scalar_lea.vmem %s0, %s140
          %s142 = smul.u32 64, %s9
          %s143 = ssub.s32 100, %s142
          %p144 = scmp.lt.s32.totalorder %s143, 64
          %s145 = scalar_select %p144, %s143, 64
          %s146 = smul.u32 64, %s145
          %s147 = smul.u32 %s146, 2
        $region28: #{cnn_policy_forward.4} parent=23 // pred_fallthru
          _
      $region24: #{cnn_policy_forward.4} parent=5 // pred_fallthru
        _
      %p148 = scmp.le.s32.totalorder 1, %s9
      %p149 = scmp.lt.s32.totalorder %s9, 3
      %p150 = pnand %p148, %p149
      %p151 = pneg %p150
      // Predicated region
      $region29: #{cnn_policy_forward.4} parent=5 // pred_check
        _
      $region30: #{cnn_policy_forward.4} parent=5 // pred_check_branch
        %153 = sbr.rel (%p150) target = $region32
      $region31: #{cnn_policy_forward.4} parent=5 // pred_region
        %s154 = ssub.s32 %s9, 1
        %s155 = smul.u32 64, %s14
        %s156 = ssub.s32 100, %s155
        %p157 = scmp.lt.s32.totalorder %s156, 64
        %s158 = scalar_select %p157, %s156, 64
        %s159 = smul.u32 64, %s158
        %s160 = smul.u32 %s159, 2
        %p161 = scmp.lt.s32.totalorder %s155, 99
        %s162 = scalar_select %p161, %s155, 99
        %s163 = smul.addr %s162, 2
        %s164 = smul.addr %s163, 4
        %s165 = scalar_lea.vmem %s0, %s164
        %p166 = pneg %p35
        %p167 = pneg %p32
        %p168 = pneg %p56
        %p169 = pneg %p53
        %p170 = pneg %p77
        %p171 = pneg %p74
        %p172 = pneg %p103
        %p173 = pneg %p100
        %s174 = sand.u32 %s90, 1
        %s175 = sand.u32 %s90, 1
        %s176 = smul.addr %s175, 256
        %s177 = scalar_lea.vmem [#allocation2], %s176
        %s178 = smul.u32 64, %s14
        %s179 = ssub.s32 100, %s178
        %p180 = scmp.lt.s32.totalorder %s179, 64
        %s181 = scalar_select %p180, %s179, 64
        %s182 = smul.u32 64, %s181
        %s183 = smul.u32 %s182, 2
        %p184 = scmp.lt.s32.totalorder %s178, 99
        %s185 = scalar_select %p184, %s178, 99
        %s186 = smul.addr %s185, 2
        %s187 = smul.addr %s186, 4
        %s188 = scalar_lea.vmem %s0, %s187
        %s189 = smul.u32 64, %s14
        %s190 = ssub.s32 100, %s189
        %p191 = scmp.lt.s32.totalorder %s190, 64
        %s192 = scalar_select %p191, %s190, 64
        %s193 = smul.u32 64, %s192
        %s194 = smul.u32 %s193, 2
        %s195 = smul.u32 64, %s14
        %s196 = ssub.s32 100, %s195
        %p197 = scmp.lt.s32.totalorder %s196, 64
        %s198 = scalar_select %p197, %s196, 64
        %s199 = smul.u32 64, %s198
        %v201 = vld [vmem:[%s188] sm:$0xff]
        %v202 = vld [vmem:[%s188 + $0x8] sm:$0xff]
        %v203 = vld [vmem:[%s188 + $0x10] sm:$0xff]
        %v204 = vld [vmem:[%s188 + $0x18] sm:$0xff]
        %v205 = vld [vmem:[%s188 + $0x20] sm:$0xff]
        %v206 = vld [vmem:[%s188 + $0x28] sm:$0xff]
        %v207 = vld [vmem:[%s188 + $0x30] sm:$0xff]
        %v208 = vld [vmem:[%s188 + $0x38] sm:$0xff]
        %v209 = vld [vmem:[%s188 + $0x40] sm:$0xff]
        %v210 = vld [vmem:[%s188 + $0x48] sm:$0xff]
        %v211 = vld [vmem:[%s188 + $0x50] sm:$0xff]
        %v212 = vld [vmem:[%s188 + $0x58] sm:$0xff]
        %v213 = vld [vmem:[%s188 + $0x60] sm:$0xff]
        %v214 = vld [vmem:[%s188 + $0x68] sm:$0xff]
        %v215 = vld [vmem:[%s188 + $0x70] sm:$0xff]
        %v216 = vld [vmem:[%s188 + $0x78] sm:$0xff]
        %v217 = vld [vmem:[%s188 + $0x80] sm:$0xff]
        %v218 = vld [vmem:[%s188 + $0x88] sm:$0xff]
        %v219 = vld [vmem:[%s188 + $0x90] sm:$0xff]
        %v220 = vld [vmem:[%s188 + $0x98] sm:$0xff]
        %v221 = vld [vmem:[%s188 + $0xa0] sm:$0xff]
        %v222 = vld [vmem:[%s188 + $0xa8] sm:$0xff]
        %v223 = vld [vmem:[%s188 + $0xb0] sm:$0xff]
        %v224 = vld [vmem:[%s188 + $0xb8] sm:$0xff]
        %v225 = vld [vmem:[%s188 + $0xc0] sm:$0xff]
        %v226 = vld [vmem:[%s188 + $0xc8] sm:$0xff]
        %v227 = vld [vmem:[%s188 + $0xd0] sm:$0xff]
        %v228 = vld [vmem:[%s188 + $0xd8] sm:$0xff]
        %v229 = vld [vmem:[%s188 + $0xe0] sm:$0xff]
        %v230 = vld [vmem:[%s188 + $0xe8] sm:$0xff]
        %v231 = vld [vmem:[%s188 + $0xf0] sm:$0xff]
        %v232 = vld [vmem:[%s188 + $0xf8] sm:$0xff]
        %v233 = vld [vmem:[%s188 + $0x100] sm:$0xff]
        %v234 = vld [vmem:[%s188 + $0x108] sm:$0xff]
        %v235 = vld [vmem:[%s188 + $0x110] sm:$0xff]
        %v236 = vld [vmem:[%s188 + $0x118] sm:$0xff]
        %v237 = vld [vmem:[%s188 + $0x120] sm:$0xff]
        %v238 = vld [vmem:[%s188 + $0x128] sm:$0xff]
        %v239 = vld [vmem:[%s188 + $0x130] sm:$0xff]
        %v240 = vld [vmem:[%s188 + $0x138] sm:$0xff]
        %v241 = vld [vmem:[%s188 + $0x140] sm:$0xff]
        %v242 = vld [vmem:[%s188 + $0x148] sm:$0xff]
        %v243 = vld [vmem:[%s188 + $0x150] sm:$0xff]
        %v244 = vld [vmem:[%s188 + $0x158] sm:$0xff]
        %v245 = vld [vmem:[%s188 + $0x160] sm:$0xff]
        %v246 = vld [vmem:[%s188 + $0x168] sm:$0xff]
        %v247 = vld [vmem:[%s188 + $0x170] sm:$0xff]
        %v248 = vld [vmem:[%s188 + $0x178] sm:$0xff]
        %v249 = vld [vmem:[%s188 + $0x180] sm:$0xff]
        %v250 = vld [vmem:[%s188 + $0x188] sm:$0xff]
        %v251 = vld [vmem:[%s188 + $0x190] sm:$0xff]
        %v252 = vld [vmem:[%s188 + $0x198] sm:$0xff]
        %v253 = vld [vmem:[%s188 + $0x1a0] sm:$0xff]
        %v254 = vld [vmem:[%s188 + $0x1a8] sm:$0xff]
        %v255 = vld [vmem:[%s188 + $0x1b0] sm:$0xff]
        %v256 = vld [vmem:[%s188 + $0x1b8] sm:$0xff]
        %v257 = vld [vmem:[%s188 + $0x1c0] sm:$0xff]
        %v258 = vld [vmem:[%s188 + $0x1c8] sm:$0xff]
        %v259 = vld [vmem:[%s188 + $0x1d0] sm:$0xff]
        %v260 = vld [vmem:[%s188 + $0x1d8] sm:$0xff]
        %v261 = vld [vmem:[%s188 + $0x1e0] sm:$0xff]
        %v262 = vld [vmem:[%s188 + $0x1e8] sm:$0xff]
        %v263 = vld [vmem:[%s188 + $0x1f0] sm:$0xff]
        %v264 = vld [vmem:[%s188 + $0x1f8] sm:$0xff]
        %v265 = vld [vmem:[%s1] sm:$0xf]
        %v266 = vld [vmem:[%s1 + $0x4] sm:$0xf]
        %v267 = vld [vmem:[%s1 + $0x8] sm:$0xf]
        %v268 = vld [vmem:[%s1 + $0xc] sm:$0xf]
        %v269 = vld [vmem:[%s1 + $0x10] sm:$0xf]
        %v270 = vld [vmem:[%s1 + $0x14] sm:$0xf]
        %v271 = vld [vmem:[%s1 + $0x18] sm:$0xf]
        %v272 = vld [vmem:[%s1 + $0x1c] sm:$0xf]
        %v273 = vld [vmem:[%s1 + $0x20] sm:$0xf]
        %v274 = vld [vmem:[%s1 + $0x24] sm:$0xf]
        %v275 = vld [vmem:[%s1 + $0x28] sm:$0xf]
        %v276 = vld [vmem:[%s1 + $0x2c] sm:$0xf]
        %v277 = vld [vmem:[%s1 + $0x30] sm:$0xf]
        %v278 = vld [vmem:[%s1 + $0x34] sm:$0xf]
        %v279 = vld [vmem:[%s1 + $0x38] sm:$0xf]
        %v280 = vld [vmem:[%s1 + $0x3c] sm:$0xf]
        %v281 = vld [vmem:[%s1 + $0x40] sm:$0xf]
        %v282 = vld [vmem:[%s1 + $0x44] sm:$0xf]
        %v283 = vld [vmem:[%s1 + $0x48] sm:$0xf]
        %v284 = vld [vmem:[%s1 + $0x4c] sm:$0xf]
        %v285 = vld [vmem:[%s1 + $0x50] sm:$0xf]
        %v286 = vld [vmem:[%s1 + $0x54] sm:$0xf]
        %v287 = vld [vmem:[%s1 + $0x58] sm:$0xf]
        %v288 = vld [vmem:[%s1 + $0x5c] sm:$0xf]
        %v289 = vld [vmem:[%s1 + $0x60] sm:$0xf]
        %v290 = vld [vmem:[%s1 + $0x64] sm:$0xf]
        %v291 = vld [vmem:[%s1 + $0x68] sm:$0xf]
        %v292 = vld [vmem:[%s1 + $0x6c] sm:$0xf]
        %v293 = vld [vmem:[%s1 + $0x70] sm:$0xf]
        %v294 = vld [vmem:[%s1 + $0x74] sm:$0xf]
        %v295 = vld [vmem:[%s1 + $0x78] sm:$0xf]
        %v296 = vld [vmem:[%s1 + $0x7c] sm:$0xf]
        %v297 = vld [vmem:[%s2] sm:$0x1]
        %v299 = vlaneseq
        %v300 = vshrl.u32 %v299, 7
        %v301 = vsub.s32 0, %v300
        %v302 = vrot.slane %v297, %v301
        %v368 = vunpack.c.l.b16 %v201
        %v369 = vunpack.c.h.b16 %v201
        %v370 = vunpack.c.l.b16 %v202
        %v371 = vunpack.c.h.b16 %v202
        %v372 = vunpack.c.l.b16 %v203
        %v373 = vunpack.c.h.b16 %v203
        %v374 = vunpack.c.l.b16 %v204
        %v375 = vunpack.c.h.b16 %v204
        %v376 = vunpack.c.l.b16 %v205
        %v377 = vunpack.c.h.b16 %v205
        %v378 = vunpack.c.l.b16 %v206
        %v379 = vunpack.c.h.b16 %v206
        %v380 = vunpack.c.l.b16 %v207
        %v381 = vunpack.c.h.b16 %v207
        %v382 = vunpack.c.l.b16 %v208
        %v383 = vunpack.c.h.b16 %v208
        %v384 = vunpack.c.l.b16 %v209
        %v385 = vunpack.c.h.b16 %v209
        %v386 = vunpack.c.l.b16 %v210
        %v387 = vunpack.c.h.b16 %v210
        %v388 = vunpack.c.l.b16 %v211
        %v389 = vunpack.c.h.b16 %v211
        %v390 = vunpack.c.l.b16 %v212
        %v391 = vunpack.c.h.b16 %v212
        %v392 = vunpack.c.l.b16 %v213
        %v393 = vunpack.c.h.b16 %v213
        %v394 = vunpack.c.l.b16 %v214
        %v395 = vunpack.c.h.b16 %v214
        %v396 = vunpack.c.l.b16 %v215
        %v397 = vunpack.c.h.b16 %v215
        %v398 = vunpack.c.l.b16 %v216
        %v399 = vunpack.c.h.b16 %v216
        %v400 = vunpack.c.l.b16 %v217
        %v401 = vunpack.c.h.b16 %v217
        %v402 = vunpack.c.l.b16 %v218
        %v403 = vunpack.c.h.b16 %v218
        %v404 = vunpack.c.l.b16 %v219
        %v405 = vunpack.c.h.b16 %v219
        %v406 = vunpack.c.l.b16 %v220
        %v407 = vunpack.c.h.b16 %v220
        %v408 = vunpack.c.l.b16 %v221
        %v409 = vunpack.c.h.b16 %v221
        %v410 = vunpack.c.l.b16 %v222
        %v411 = vunpack.c.h.b16 %v222
        %v412 = vunpack.c.l.b16 %v223
        %v413 = vunpack.c.h.b16 %v223
        %v414 = vunpack.c.l.b16 %v224
        %v415 = vunpack.c.h.b16 %v224
        %v416 = vunpack.c.l.b16 %v225
        %v417 = vunpack.c.h.b16 %v225
        %v418 = vunpack.c.l.b16 %v226
        %v419 = vunpack.c.h.b16 %v226
        %v420 = vunpack.c.l.b16 %v227
        %v421 = vunpack.c.h.b16 %v227
        %v422 = vunpack.c.l.b16 %v228
        %v423 = vunpack.c.h.b16 %v228
        %v424 = vunpack.c.l.b16 %v229
        %v425 = vunpack.c.h.b16 %v229
        %v426 = vunpack.c.l.b16 %v230
        %v427 = vunpack.c.h.b16 %v230
        %v428 = vunpack.c.l.b16 %v231
        %v429 = vunpack.c.h.b16 %v231
        %v430 = vunpack.c.l.b16 %v232
        %v431 = vunpack.c.h.b16 %v232
        %v432 = vunpack.c.l.b16 %v233
        %v433 = vunpack.c.h.b16 %v233
        %v434 = vunpack.c.l.b16 %v234
        %v435 = vunpack.c.h.b16 %v234
        %v436 = vunpack.c.l.b16 %v235
        %v437 = vunpack.c.h.b16 %v235
        %v438 = vunpack.c.l.b16 %v236
        %v439 = vunpack.c.h.b16 %v236
        %v440 = vunpack.c.l.b16 %v237
        %v441 = vunpack.c.h.b16 %v237
        %v442 = vunpack.c.l.b16 %v238
        %v443 = vunpack.c.h.b16 %v238
        %v444 = vunpack.c.l.b16 %v239
        %v445 = vunpack.c.h.b16 %v239
        %v446 = vunpack.c.l.b16 %v240
        %v447 = vunpack.c.h.b16 %v240
        %v448 = vunpack.c.l.b16 %v241
        %v449 = vunpack.c.h.b16 %v241
        %v450 = vunpack.c.l.b16 %v242
        %v451 = vunpack.c.h.b16 %v242
        %v452 = vunpack.c.l.b16 %v243
        %v453 = vunpack.c.h.b16 %v243
        %v454 = vunpack.c.l.b16 %v244
        %v455 = vunpack.c.h.b16 %v244
        %v456 = vunpack.c.l.b16 %v245
        %v457 = vunpack.c.h.b16 %v245
        %v458 = vunpack.c.l.b16 %v246
        %v459 = vunpack.c.h.b16 %v246
        %v460 = vunpack.c.l.b16 %v247
        %v461 = vunpack.c.h.b16 %v247
        %v462 = vunpack.c.l.b16 %v248
        %v463 = vunpack.c.h.b16 %v248
        %v464 = vunpack.c.l.b16 %v249
        %v465 = vunpack.c.h.b16 %v249
        %v466 = vunpack.c.l.b16 %v250
        %v467 = vunpack.c.h.b16 %v250
        %v468 = vunpack.c.l.b16 %v251
        %v469 = vunpack.c.h.b16 %v251
        %v470 = vunpack.c.l.b16 %v252
        %v471 = vunpack.c.h.b16 %v252
        %v472 = vunpack.c.l.b16 %v253
        %v473 = vunpack.c.h.b16 %v253
        %v474 = vunpack.c.l.b16 %v254
        %v475 = vunpack.c.h.b16 %v254
        %v476 = vunpack.c.l.b16 %v255
        %v477 = vunpack.c.h.b16 %v255
        %v478 = vunpack.c.l.b16 %v256
        %v479 = vunpack.c.h.b16 %v256
        %v480 = vunpack.c.l.b16 %v257
        %v481 = vunpack.c.h.b16 %v257
        %v482 = vunpack.c.l.b16 %v258
        %v483 = vunpack.c.h.b16 %v258
        %v484 = vunpack.c.l.b16 %v259
        %v485 = vunpack.c.h.b16 %v259
        %v486 = vunpack.c.l.b16 %v260
        %v487 = vunpack.c.h.b16 %v260
        %v488 = vunpack.c.l.b16 %v261
        %v489 = vunpack.c.h.b16 %v261
        %v490 = vunpack.c.l.b16 %v262
        %v491 = vunpack.c.h.b16 %v262
        %v492 = vunpack.c.l.b16 %v263
        %v493 = vunpack.c.h.b16 %v263
        %v494 = vunpack.c.l.b16 %v264
        %v495 = vunpack.c.h.b16 %v264
        %v496 = vpack.c.b16 %v370, %v368
        %v497 = vpack.c.b16 %v371, %v369
        %v498 = vpack.c.b16 %v374, %v372
        %v499 = vpack.c.b16 %v375, %v373
        %v500 = vpack.c.b16 %v378, %v376
        %v501 = vpack.c.b16 %v379, %v377
        %v502 = vpack.c.b16 %v382, %v380
        %v503 = vpack.c.b16 %v383, %v381
        %v504 = vpack.c.b16 %v386, %v384
        %v505 = vpack.c.b16 %v387, %v385
        %v506 = vpack.c.b16 %v390, %v388
        %v507 = vpack.c.b16 %v391, %v389
        %v508 = vpack.c.b16 %v394, %v392
        %v509 = vpack.c.b16 %v395, %v393
        %v510 = vpack.c.b16 %v398, %v396
        %v511 = vpack.c.b16 %v399, %v397
        %v512 = vpack.c.b16 %v402, %v400
        %v513 = vpack.c.b16 %v403, %v401
        %v514 = vpack.c.b16 %v406, %v404
        %v515 = vpack.c.b16 %v407, %v405
        %v516 = vpack.c.b16 %v410, %v408
        %v517 = vpack.c.b16 %v411, %v409
        %v518 = vpack.c.b16 %v414, %v412
        %v519 = vpack.c.b16 %v415, %v413
        %v520 = vpack.c.b16 %v418, %v416
        %v521 = vpack.c.b16 %v419, %v417
        %v522 = vpack.c.b16 %v422, %v420
        %v523 = vpack.c.b16 %v423, %v421
        %v524 = vpack.c.b16 %v426, %v424
        %v525 = vpack.c.b16 %v427, %v425
        %v526 = vpack.c.b16 %v430, %v428
        %v527 = vpack.c.b16 %v431, %v429
        %v528 = vpack.c.b16 %v434, %v432
        %v529 = vpack.c.b16 %v435, %v433
        %v530 = vpack.c.b16 %v438, %v436
        %v531 = vpack.c.b16 %v439, %v437
        %v532 = vpack.c.b16 %v442, %v440
        %v533 = vpack.c.b16 %v443, %v441
        %v534 = vpack.c.b16 %v446, %v444
        %v535 = vpack.c.b16 %v447, %v445
        %v536 = vpack.c.b16 %v450, %v448
        %v537 = vpack.c.b16 %v451, %v449
        %v538 = vpack.c.b16 %v454, %v452
        %v539 = vpack.c.b16 %v455, %v453
        %v540 = vpack.c.b16 %v458, %v456
        %v541 = vpack.c.b16 %v459, %v457
        %v542 = vpack.c.b16 %v462, %v460
        %v543 = vpack.c.b16 %v463, %v461
        %v544 = vpack.c.b16 %v466, %v464
        %v545 = vpack.c.b16 %v467, %v465
        %v546 = vpack.c.b16 %v470, %v468
        %v547 = vpack.c.b16 %v471, %v469
        %v548 = vpack.c.b16 %v474, %v472
        %v549 = vpack.c.b16 %v475, %v473
        %v550 = vpack.c.b16 %v478, %v476
        %v551 = vpack.c.b16 %v479, %v477
        %v552 = vpack.c.b16 %v482, %v480
        %v553 = vpack.c.b16 %v483, %v481
        %v554 = vpack.c.b16 %v486, %v484
        %v555 = vpack.c.b16 %v487, %v485
        %v556 = vpack.c.b16 %v490, %v488
        %v557 = vpack.c.b16 %v491, %v489
        %v558 = vpack.c.b16 %v494, %v492
        %v559 = vpack.c.b16 %v495, %v493
        %v656 = vunpack.c.l.b16 %v265
        %v657 = vunpack.c.l.b16 %v266
        %v658 = vunpack.c.l.b16 %v267
        %v659 = vunpack.c.l.b16 %v268
        %v660 = vunpack.c.l.b16 %v269
        %v661 = vunpack.c.l.b16 %v270
        %v662 = vunpack.c.l.b16 %v271
        %v663 = vunpack.c.l.b16 %v272
        %v664 = vunpack.c.l.b16 %v273
        %v665 = vunpack.c.l.b16 %v274
        %v666 = vunpack.c.l.b16 %v275
        %v667 = vunpack.c.l.b16 %v276
        %v668 = vunpack.c.l.b16 %v277
        %v669 = vunpack.c.l.b16 %v278
        %v670 = vunpack.c.l.b16 %v279
        %v671 = vunpack.c.l.b16 %v280
        %v672 = vunpack.c.l.b16 %v281
        %v673 = vunpack.c.l.b16 %v282
        %v674 = vunpack.c.l.b16 %v283
        %v675 = vunpack.c.l.b16 %v284
        %v676 = vunpack.c.l.b16 %v285
        %v677 = vunpack.c.l.b16 %v286
        %v678 = vunpack.c.l.b16 %v287
        %v679 = vunpack.c.l.b16 %v288
        %v680 = vunpack.c.l.b16 %v289
        %v681 = vunpack.c.l.b16 %v290
        %v682 = vunpack.c.l.b16 %v291
        %v683 = vunpack.c.l.b16 %v292
        %v684 = vunpack.c.l.b16 %v293
        %v685 = vunpack.c.l.b16 %v294
        %v686 = vunpack.c.l.b16 %v295
        %v687 = vunpack.c.l.b16 %v296
        %v688 = vpack.c.b16 %v657, %v656
        %v689 = vpack.c.b16 %v659, %v658
        %v690 = vpack.c.b16 %v661, %v660
        %v691 = vpack.c.b16 %v663, %v662
        %v692 = vpack.c.b16 %v665, %v664
        %v693 = vpack.c.b16 %v667, %v666
        %v694 = vpack.c.b16 %v669, %v668
        %v695 = vpack.c.b16 %v671, %v670
        %v696 = vpack.c.b16 %v673, %v672
        %v697 = vpack.c.b16 %v675, %v674
        %v698 = vpack.c.b16 %v677, %v676
        %v699 = vpack.c.b16 %v679, %v678
        %v700 = vpack.c.b16 %v681, %v680
        %v701 = vpack.c.b16 %v683, %v682
        %v702 = vpack.c.b16 %v685, %v684
        %v703 = vpack.c.b16 %v687, %v686
        %720 = vmatprep.subr.bf16.mxu0 0
        %721 = vmatpush1.bf16.msra.mxu0 %v688
        %722 = vmatprep.subr.bf16.mxu0 0
        %723 = vmatpush1.bf16.msra.mxu0 %v689
        %724 = vmatprep.subr.bf16.mxu0 0
        %725 = vmatpush1.bf16.msra.mxu0 %v690
        %726 = vmatprep.subr.bf16.mxu0 0
        %727 = vmatpush1.bf16.msra.mxu0 %v691
        %728 = vmatprep.subr.bf16.mxu0 0
        %729 = vmatpush1.bf16.msra.mxu0 %v692
        %730 = vmatprep.subr.bf16.mxu0 0
        %731 = vmatpush1.bf16.msra.mxu0 %v693
        %732 = vmatprep.subr.bf16.mxu0 0
        %733 = vmatpush1.bf16.msra.mxu0 %v694
        %734 = vmatprep.subr.bf16.mxu0 0
        %735 = vmatpush1.bf16.msra.mxu0 %v695
        %736 = vmatprep.subr.bf16.mxu0 0
        %737 = vmatpush1.bf16.msra.mxu0 %v696
        %738 = vmatprep.subr.bf16.mxu0 0
        %739 = vmatpush1.bf16.msra.mxu0 %v697
        %740 = vmatprep.subr.bf16.mxu0 0
        %741 = vmatpush1.bf16.msra.mxu0 %v698
        %742 = vmatprep.subr.bf16.mxu0 0
        %743 = vmatpush1.bf16.msra.mxu0 %v699
        %744 = vmatprep.subr.bf16.mxu0 0
        %745 = vmatpush1.bf16.msra.mxu0 %v700
        %746 = vmatprep.subr.bf16.mxu0 0
        %747 = vmatpush1.bf16.msra.mxu0 %v701
        %748 = vmatprep.subr.bf16.mxu0 0
        %749 = vmatpush1.bf16.msra.mxu0 %v702
        %750 = vmatprep.subr.bf16.mxu0 0
        %751 = vmatpush1.bf16.msra.mxu0 %v703
        %752 = vmatprep.mubr.bf16.mxu0 %v497
        %753 = vmatmul.mubr.bf16.gmra.mrb[0].mxu0 %v496
        %v754 = vpop.f32.mrb[0].mxu0
        %v755 = vadd.f32 %v302, %v754
        %v756 = vpop.f32.mrb[0].mxu0
        %v757 = vpop.f32.mrb[0].mxu0
        %v758 = vadd.f32 %v302, %v757
        %v759 = vpop.f32.mrb[0].mxu0
        %760 = vmatprep.mubr.bf16.mxu0 %v499
        %761 = vmatmul.mubr.bf16.gmra.mrb[0].mxu0 %v498
        %v762 = vpop.f32.mrb[0].mxu0
        %v763 = vadd.f32 %v302, %v762
        %v764 = vpop.f32.mrb[0].mxu0
        %v765 = vpop.f32.mrb[0].mxu0
        %v766 = vadd.f32 %v302, %v765
        %v767 = vpop.f32.mrb[0].mxu0
        %768 = vmatprep.mubr.bf16.mxu0 %v501
        %769 = vmatmul.mubr.bf16.gmra.mrb[0].mxu0 %v500
        %v770 = vpop.f32.mrb[0].mxu0
        %v771 = vadd.f32 %v302, %v770
        %v772 = vpop.f32.mrb[0].mxu0
        %v773 = vpop.f32.mrb[0].mxu0
        %v774 = vadd.f32 %v302, %v773
        %v775 = vpop.f32.mrb[0].mxu0
        %776 = vmatprep.mubr.bf16.mxu0 %v503
        %777 = vmatmul.mubr.bf16.gmra.mrb[0].mxu0 %v502
        %v778 = vpop.f32.mrb[0].mxu0
        %v779 = vadd.f32 %v302, %v778
        %v780 = vpop.f32.mrb[0].mxu0
        %v781 = vpop.f32.mrb[0].mxu0
        %v782 = vadd.f32 %v302, %v781
        %v783 = vpop.f32.mrb[0].mxu0
        %784 = vmatprep.mubr.bf16.mxu0 %v505
        %785 = vmatmul.mubr.bf16.gmra.mrb[0].mxu0 %v504
        %v786 = vpop.f32.mrb[0].mxu0
        %v787 = vadd.f32 %v302, %v786
        %v788 = vpop.f32.mrb[0].mxu0
        %v789 = vpop.f32.mrb[0].mxu0
        %v790 = vadd.f32 %v302, %v789
        %v791 = vpop.f32.mrb[0].mxu0
        %792 = vmatprep.mubr.bf16.mxu0 %v507
        %793 = vmatmul.mubr.bf16.gmra.mrb[0].mxu0 %v506
        %v794 = vpop.f32.mrb[0].mxu0
        %v795 = vadd.f32 %v302, %v794
        %v796 = vpop.f32.mrb[0].mxu0
        %v797 = vpop.f32.mrb[0].mxu0
        %v798 = vadd.f32 %v302, %v797
        %v799 = vpop.f32.mrb[0].mxu0
        %800 = vmatprep.mubr.bf16.mxu0 %v509
        %801 = vmatmul.mubr.bf16.gmra.mrb[0].mxu0 %v508
        %v802 = vpop.f32.mrb[0].mxu0
        %v803 = vadd.f32 %v302, %v802
        %v804 = vpop.f32.mrb[0].mxu0
        %v805 = vpop.f32.mrb[0].mxu0
        %v806 = vadd.f32 %v302, %v805
        %v807 = vpop.f32.mrb[0].mxu0
        %808 = vmatprep.mubr.bf16.mxu0 %v511
        %809 = vmatmul.mubr.bf16.gmra.mrb[0].mxu0 %v510
        %v810 = vpop.f32.mrb[0].mxu0
        %v811 = vadd.f32 %v302, %v810
        %v812 = vpop.f32.mrb[0].mxu0
        %v813 = vpop.f32.mrb[0].mxu0
        %v814 = vadd.f32 %v302, %v813
        %v815 = vpop.f32.mrb[0].mxu0
        %816 = vmatprep.mubr.bf16.mxu0 %v513
        %817 = vmatmul.mubr.bf16.gmra.mrb[0].mxu0 %v512
        %v818 = vpop.f32.mrb[0].mxu0
        %v819 = vadd.f32 %v302, %v818
        %v820 = vpop.f32.mrb[0].mxu0
        %v821 = vpop.f32.mrb[0].mxu0
        %v822 = vadd.f32 %v302, %v821
        %v823 = vpop.f32.mrb[0].mxu0
        %824 = vmatprep.mubr.bf16.mxu0 %v515
        %825 = vmatmul.mubr.bf16.gmra.mrb[0].mxu0 %v514
        %v826 = vpop.f32.mrb[0].mxu0
        %v827 = vadd.f32 %v302, %v826
        %v828 = vpop.f32.mrb[0].mxu0
        %v829 = vpop.f32.mrb[0].mxu0
        %v830 = vadd.f32 %v302, %v829
        %v831 = vpop.f32.mrb[0].mxu0
        %832 = vmatprep.mubr.bf16.mxu0 %v517
        %833 = vmatmul.mubr.bf16.gmra.mrb[0].mxu0 %v516
        %v834 = vpop.f32.mrb[0].mxu0
        %v835 = vadd.f32 %v302, %v834
        %v836 = vpop.f32.mrb[0].mxu0
        %v837 = vpop.f32.mrb[0].mxu0
        %v838 = vadd.f32 %v302, %v837
        %v839 = vpop.f32.mrb[0].mxu0
        %840 = vmatprep.mubr.bf16.mxu0 %v519
        %841 = vmatmul.mubr.bf16.gmra.mrb[0].mxu0 %v518
        %v842 = vpop.f32.mrb[0].mxu0
        %v843 = vadd.f32 %v302, %v842
        %v844 = vpop.f32.mrb[0].mxu0
        %v845 = vpop.f32.mrb[0].mxu0
        %v846 = vadd.f32 %v302, %v845
        %v847 = vpop.f32.mrb[0].mxu0
        %848 = vmatprep.mubr.bf16.mxu0 %v521
        %849 = vmatmul.mubr.bf16.gmra.mrb[0].mxu0 %v520
        %v850 = vpop.f32.mrb[0].mxu0
        %v851 = vadd.f32 %v302, %v850
        %v852 = vpop.f32.mrb[0].mxu0
        %v853 = vpop.f32.mrb[0].mxu0
        %v854 = vadd.f32 %v302, %v853
        %v855 = vpop.f32.mrb[0].mxu0
        %856 = vmatprep.mubr.bf16.mxu0 %v523
        %857 = vmatmul.mubr.bf16.gmra.mrb[0].mxu0 %v522
        %v858 = vpop.f32.mrb[0].mxu0
        %v859 = vadd.f32 %v302, %v858
        %v860 = vpop.f32.mrb[0].mxu0
        %v861 = vpop.f32.mrb[0].mxu0
        %v862 = vadd.f32 %v302, %v861
        %v863 = vpop.f32.mrb[0].mxu0
        %864 = vmatprep.mubr.bf16.mxu0 %v525
        %865 = vmatmul.mubr.bf16.gmra.mrb[0].mxu0 %v524
        %v866 = vpop.f32.mrb[0].mxu0
        %v867 = vadd.f32 %v302, %v866
        %v868 = vpop.f32.mrb[0].mxu0
        %v869 = vpop.f32.mrb[0].mxu0
        %v870 = vadd.f32 %v302, %v869
        %v871 = vpop.f32.mrb[0].mxu0
        %872 = vmatprep.mubr.bf16.mxu0 %v527
        %873 = vmatmul.mubr.bf16.gmra.mrb[0].mxu0 %v526
        %v874 = vpop.f32.mrb[0].mxu0
        %v875 = vadd.f32 %v302, %v874
        %v876 = vpop.f32.mrb[0].mxu0
        %v877 = vpop.f32.mrb[0].mxu0
        %v878 = vadd.f32 %v302, %v877
        %v879 = vpop.f32.mrb[0].mxu0
        %880 = vmatprep.mubr.bf16.mxu0 %v529
        %881 = vmatmul.mubr.bf16.gmra.mrb[0].mxu0 %v528
        %v882 = vpop.f32.mrb[0].mxu0
        %v883 = vadd.f32 %v302, %v882
        %v884 = vpop.f32.mrb[0].mxu0
        %v885 = vpop.f32.mrb[0].mxu0
        %v886 = vadd.f32 %v302, %v885
        %v887 = vpop.f32.mrb[0].mxu0
        %888 = vmatprep.mubr.bf16.mxu0 %v531
        %889 = vmatmul.mubr.bf16.gmra.mrb[0].mxu0 %v530
        %v890 = vpop.f32.mrb[0].mxu0
        %v891 = vadd.f32 %v302, %v890
        %v892 = vpop.f32.mrb[0].mxu0
        %v893 = vpop.f32.mrb[0].mxu0
        %v894 = vadd.f32 %v302, %v893
        %v895 = vpop.f32.mrb[0].mxu0
        %896 = vmatprep.mubr.bf16.mxu0 %v533
        %897 = vmatmul.mubr.bf16.gmra.mrb[0].mxu0 %v532
        %v898 = vpop.f32.mrb[0].mxu0
        %v899 = vadd.f32 %v302, %v898
        %v900 = vpop.f32.mrb[0].mxu0
        %v901 = vpop.f32.mrb[0].mxu0
        %v902 = vadd.f32 %v302, %v901
        %v903 = vpop.f32.mrb[0].mxu0
        %904 = vmatprep.mubr.bf16.mxu0 %v535
        %905 = vmatmul.mubr.bf16.gmra.mrb[0].mxu0 %v534
        %v906 = vpop.f32.mrb[0].mxu0
        %v907 = vadd.f32 %v302, %v906
        %v908 = vpop.f32.mrb[0].mxu0
        %v909 = vpop.f32.mrb[0].mxu0
        %v910 = vadd.f32 %v302, %v909
        %v911 = vpop.f32.mrb[0].mxu0
        %912 = vmatprep.mubr.bf16.mxu0 %v537
        %913 = vmatmul.mubr.bf16.gmra.mrb[0].mxu0 %v536
        %v914 = vpop.f32.mrb[0].mxu0
        %v915 = vadd.f32 %v302, %v914
        %v916 = vpop.f32.mrb[0].mxu0
        %v917 = vpop.f32.mrb[0].mxu0
        %v918 = vadd.f32 %v302, %v917
        %v919 = vpop.f32.mrb[0].mxu0
        %920 = vmatprep.mubr.bf16.mxu0 %v539
        %921 = vmatmul.mubr.bf16.gmra.mrb[0].mxu0 %v538
        %v922 = vpop.f32.mrb[0].mxu0
        %v923 = vadd.f32 %v302, %v922
        %v924 = vpop.f32.mrb[0].mxu0
        %v925 = vpop.f32.mrb[0].mxu0
        %v926 = vadd.f32 %v302, %v925
        %v927 = vpop.f32.mrb[0].mxu0
        %928 = vmatprep.mubr.bf16.mxu0 %v541
        %929 = vmatmul.mubr.bf16.gmra.mrb[0].mxu0 %v540
        %v930 = vpop.f32.mrb[0].mxu0
        %v931 = vadd.f32 %v302, %v930
        %v932 = vpop.f32.mrb[0].mxu0
        %v933 = vpop.f32.mrb[0].mxu0
        %v934 = vadd.f32 %v302, %v933
        %v935 = vpop.f32.mrb[0].mxu0
        %936 = vmatprep.mubr.bf16.mxu0 %v543
        %937 = vmatmul.mubr.bf16.gmra.mrb[0].mxu0 %v542
        %v938 = vpop.f32.mrb[0].mxu0
        %v939 = vadd.f32 %v302, %v938
        %v940 = vpop.f32.mrb[0].mxu0
        %v941 = vpop.f32.mrb[0].mxu0
        %v942 = vadd.f32 %v302, %v941
        %v943 = vpop.f32.mrb[0].mxu0
        %944 = vmatprep.mubr.bf16.mxu0 %v545
        %945 = vmatmul.mubr.bf16.gmra.mrb[0].mxu0 %v544
        %v946 = vpop.f32.mrb[0].mxu0
        %v947 = vadd.f32 %v302, %v946
        %v948 = vpop.f32.mrb[0].mxu0
        %v949 = vpop.f32.mrb[0].mxu0
        %v950 = vadd.f32 %v302, %v949
        %v951 = vpop.f32.mrb[0].mxu0
        %952 = vmatprep.mubr.bf16.mxu0 %v547
        %953 = vmatmul.mubr.bf16.gmra.mrb[0].mxu0 %v546
        %v954 = vpop.f32.mrb[0].mxu0
        %v955 = vadd.f32 %v302, %v954
        %v956 = vpop.f32.mrb[0].mxu0
        %v957 = vpop.f32.mrb[0].mxu0
        %v958 = vadd.f32 %v302, %v957
        %v959 = vpop.f32.mrb[0].mxu0
        %960 = vmatprep.mubr.bf16.mxu0 %v549
        %961 = vmatmul.mubr.bf16.gmra.mrb[0].mxu0 %v548
        %v962 = vpop.f32.mrb[0].mxu0
        %v963 = vadd.f32 %v302, %v962
        %v964 = vpop.f32.mrb[0].mxu0
        %v965 = vpop.f32.mrb[0].mxu0
        %v966 = vadd.f32 %v302, %v965
        %v967 = vpop.f32.mrb[0].mxu0
        %968 = vmatprep.mubr.bf16.mxu0 %v551
        %969 = vmatmul.mubr.bf16.gmra.mrb[0].mxu0 %v550
        %v970 = vpop.f32.mrb[0].mxu0
        %v971 = vadd.f32 %v302, %v970
        %v972 = vpop.f32.mrb[0].mxu0
        %v973 = vpop.f32.mrb[0].mxu0
        %v974 = vadd.f32 %v302, %v973
        %v975 = vpop.f32.mrb[0].mxu0
        %976 = vmatprep.mubr.bf16.mxu0 %v553
        %977 = vmatmul.mubr.bf16.gmra.mrb[0].mxu0 %v552
        %v978 = vpop.f32.mrb[0].mxu0
        %v979 = vadd.f32 %v302, %v978
        %v980 = vpop.f32.mrb[0].mxu0
        %v981 = vpop.f32.mrb[0].mxu0
        %v982 = vadd.f32 %v302, %v981
        %v983 = vpop.f32.mrb[0].mxu0
        %984 = vmatprep.mubr.bf16.mxu0 %v555
        %985 = vmatmul.mubr.bf16.gmra.mrb[0].mxu0 %v554
        %v986 = vpop.f32.mrb[0].mxu0
        %v987 = vadd.f32 %v302, %v986
        %v988 = vpop.f32.mrb[0].mxu0
        %v989 = vpop.f32.mrb[0].mxu0
        %v990 = vadd.f32 %v302, %v989
        %v991 = vpop.f32.mrb[0].mxu0
        %992 = vmatprep.mubr.bf16.mxu0 %v557
        %993 = vmatmul.mubr.bf16.gmra.mrb[0].mxu0 %v556
        %v994 = vpop.f32.mrb[0].mxu0
        %v995 = vadd.f32 %v302, %v994
        %v996 = vpop.f32.mrb[0].mxu0
        %v997 = vpop.f32.mrb[0].mxu0
        %v998 = vadd.f32 %v302, %v997
        %v999 = vpop.f32.mrb[0].mxu0
        %1000 = vmatprep.mubr.bf16.mxu0 %v559
        %1001 = vmatmul.mubr.bf16.gmra.mrb[0].mxu0 %v558
        %v1002 = vpop.f32.mrb[0].mxu0
        %v1003 = vadd.f32 %v302, %v1002
        %v1004 = vpop.f32.mrb[0].mxu0
        %v1005 = vpop.f32.mrb[0].mxu0
        %v1006 = vadd.f32 %v302, %v1005
        %v1007 = vpop.f32.mrb[0].mxu0
        %1008 = vdwg.mxu0
        %v1009 = vmax.f32 %v755, 0.0
        %v1010 = vmax.f32 %v758, 0.0
        %v1011 = vmax.f32 %v763, 0.0
        %v1012 = vmax.f32 %v766, 0.0
        %v1013 = vmax.f32 %v771, 0.0
        %v1014 = vmax.f32 %v774, 0.0
        %v1015 = vmax.f32 %v779, 0.0
        %v1016 = vmax.f32 %v782, 0.0
        %v1017 = vmax.f32 %v787, 0.0
        %v1018 = vmax.f32 %v790, 0.0
        %v1019 = vmax.f32 %v795, 0.0
        %v1020 = vmax.f32 %v798, 0.0
        %v1021 = vmax.f32 %v803, 0.0
        %v1022 = vmax.f32 %v806, 0.0
        %v1023 = vmax.f32 %v811, 0.0
        %v1024 = vmax.f32 %v814, 0.0
        %v1025 = vmax.f32 %v819, 0.0
        %v1026 = vmax.f32 %v822, 0.0
        %v1027 = vmax.f32 %v827, 0.0
        %v1028 = vmax.f32 %v830, 0.0
        %v1029 = vmax.f32 %v835, 0.0
        %v1030 = vmax.f32 %v838, 0.0
        %v1031 = vmax.f32 %v843, 0.0
        %v1032 = vmax.f32 %v846, 0.0
        %v1033 = vmax.f32 %v851, 0.0
        %v1034 = vmax.f32 %v854, 0.0
        %v1035 = vmax.f32 %v859, 0.0
        %v1036 = vmax.f32 %v862, 0.0
        %v1037 = vmax.f32 %v867, 0.0
        %v1038 = vmax.f32 %v870, 0.0
        %v1039 = vmax.f32 %v875, 0.0
        %v1040 = vmax.f32 %v878, 0.0
        %v1041 = vmax.f32 %v883, 0.0
        %v1042 = vmax.f32 %v886, 0.0
        %v1043 = vmax.f32 %v891, 0.0
        %v1044 = vmax.f32 %v894, 0.0
        %v1045 = vmax.f32 %v899, 0.0
        %v1046 = vmax.f32 %v902, 0.0
        %v1047 = vmax.f32 %v907, 0.0
        %v1048 = vmax.f32 %v910, 0.0
        %v1049 = vmax.f32 %v915, 0.0
        %v1050 = vmax.f32 %v918, 0.0
        %v1051 = vmax.f32 %v923, 0.0
        %v1052 = vmax.f32 %v926, 0.0
        %v1053 = vmax.f32 %v931, 0.0
        %v1054 = vmax.f32 %v934, 0.0
        %v1055 = vmax.f32 %v939, 0.0
        %v1056 = vmax.f32 %v942, 0.0
        %v1057 = vmax.f32 %v947, 0.0
        %v1058 = vmax.f32 %v950, 0.0
        %v1059 = vmax.f32 %v955, 0.0
        %v1060 = vmax.f32 %v958, 0.0
        %v1061 = vmax.f32 %v963, 0.0
        %v1062 = vmax.f32 %v966, 0.0
        %v1063 = vmax.f32 %v971, 0.0
        %v1064 = vmax.f32 %v974, 0.0
        %v1065 = vmax.f32 %v979, 0.0
        %v1066 = vmax.f32 %v982, 0.0
        %v1067 = vmax.f32 %v987, 0.0
        %v1068 = vmax.f32 %v990, 0.0
        %v1069 = vmax.f32 %v995, 0.0
        %v1070 = vmax.f32 %v998, 0.0
        %v1071 = vmax.f32 %v1003, 0.0
        %v1072 = vmax.f32 %v1006, 0.0
        %v1073 = vpack.c.bf16 %v1010, %v1009
        %v1074 = vpack.c.bf16 %v1012, %v1011
        %v1075 = vpack.c.bf16 %v1014, %v1013
        %v1076 = vpack.c.bf16 %v1016, %v1015
        %v1077 = vpack.c.bf16 %v1018, %v1017
        %v1078 = vpack.c.bf16 %v1020, %v1019
        %v1079 = vpack.c.bf16 %v1022, %v1021
        %v1080 = vpack.c.bf16 %v1024, %v1023
        %v1081 = vpack.c.bf16 %v1026, %v1025
        %v1082 = vpack.c.bf16 %v1028, %v1027
        %v1083 = vpack.c.bf16 %v1030, %v1029
        %v1084 = vpack.c.bf16 %v1032, %v1031
        %v1085 = vpack.c.bf16 %v1034, %v1033
        %v1086 = vpack.c.bf16 %v1036, %v1035
        %v1087 = vpack.c.bf16 %v1038, %v1037
        %v1088 = vpack.c.bf16 %v1040, %v1039
        %v1089 = vpack.c.bf16 %v1042, %v1041
        %v1090 = vpack.c.bf16 %v1044, %v1043
        %v1091 = vpack.c.bf16 %v1046, %v1045
        %v1092 = vpack.c.bf16 %v1048, %v1047
        %v1093 = vpack.c.bf16 %v1050, %v1049
        %v1094 = vpack.c.bf16 %v1052, %v1051
        %v1095 = vpack.c.bf16 %v1054, %v1053
        %v1096 = vpack.c.bf16 %v1056, %v1055
        %v1097 = vpack.c.bf16 %v1058, %v1057
        %v1098 = vpack.c.bf16 %v1060, %v1059
        %v1099 = vpack.c.bf16 %v1062, %v1061
        %v1100 = vpack.c.bf16 %v1064, %v1063
        %v1101 = vpack.c.bf16 %v1066, %v1065
        %v1102 = vpack.c.bf16 %v1068, %v1067
        %v1103 = vpack.c.bf16 %v1070, %v1069
        %v1104 = vpack.c.bf16 %v1072, %v1071
        %v1137 = vunpack.c.l.b16 %v1073
        %v1138 = vunpack.c.h.b16 %v1073
        %v1139 = vunpack.c.l.b16 %v1074
        %v1140 = vunpack.c.h.b16 %v1074
        %v1141 = vunpack.c.l.b16 %v1075
        %v1142 = vunpack.c.h.b16 %v1075
        %v1143 = vunpack.c.l.b16 %v1076
        %v1144 = vunpack.c.h.b16 %v1076
        %v1145 = vunpack.c.l.b16 %v1077
        %v1146 = vunpack.c.h.b16 %v1077
        %v1147 = vunpack.c.l.b16 %v1078
        %v1148 = vunpack.c.h.b16 %v1078
        %v1149 = vunpack.c.l.b16 %v1079
        %v1150 = vunpack.c.h.b16 %v1079
        %v1151 = vunpack.c.l.b16 %v1080
        %v1152 = vunpack.c.h.b16 %v1080
        %v1153 = vunpack.c.l.b16 %v1081
        %v1154 = vunpack.c.h.b16 %v1081
        %v1155 = vunpack.c.l.b16 %v1082
        %v1156 = vunpack.c.h.b16 %v1082
        %v1157 = vunpack.c.l.b16 %v1083
        %v1158 = vunpack.c.h.b16 %v1083
        %v1159 = vunpack.c.l.b16 %v1084
        %v1160 = vunpack.c.h.b16 %v1084
        %v1161 = vunpack.c.l.b16 %v1085
        %v1162 = vunpack.c.h.b16 %v1085
        %v1163 = vunpack.c.l.b16 %v1086
        %v1164 = vunpack.c.h.b16 %v1086
        %v1165 = vunpack.c.l.b16 %v1087
        %v1166 = vunpack.c.h.b16 %v1087
        %v1167 = vunpack.c.l.b16 %v1088
        %v1168 = vunpack.c.h.b16 %v1088
        %v1169 = vunpack.c.l.b16 %v1089
        %v1170 = vunpack.c.h.b16 %v1089
        %v1171 = vunpack.c.l.b16 %v1090
        %v1172 = vunpack.c.h.b16 %v1090
        %v1173 = vunpack.c.l.b16 %v1091
        %v1174 = vunpack.c.h.b16 %v1091
        %v1175 = vunpack.c.l.b16 %v1092
        %v1176 = vunpack.c.h.b16 %v1092
        %v1177 = vunpack.c.l.b16 %v1093
        %v1178 = vunpack.c.h.b16 %v1093
        %v1179 = vunpack.c.l.b16 %v1094
        %v1180 = vunpack.c.h.b16 %v1094
        %v1181 = vunpack.c.l.b16 %v1095
        %v1182 = vunpack.c.h.b16 %v1095
        %v1183 = vunpack.c.l.b16 %v1096
        %v1184 = vunpack.c.h.b16 %v1096
        %v1185 = vunpack.c.l.b16 %v1097
        %v1186 = vunpack.c.h.b16 %v1097
        %v1187 = vunpack.c.l.b16 %v1098
        %v1188 = vunpack.c.h.b16 %v1098
        %v1189 = vunpack.c.l.b16 %v1099
        %v1190 = vunpack.c.h.b16 %v1099
        %v1191 = vunpack.c.l.b16 %v1100
        %v1192 = vunpack.c.h.b16 %v1100
        %v1193 = vunpack.c.l.b16 %v1101
        %v1194 = vunpack.c.h.b16 %v1101
        %v1195 = vunpack.c.l.b16 %v1102
        %v1196 = vunpack.c.h.b16 %v1102
        %v1197 = vunpack.c.l.b16 %v1103
        %v1198 = vunpack.c.h.b16 %v1103
        %v1199 = vunpack.c.l.b16 %v1104
        %v1200 = vunpack.c.h.b16 %v1104
        %v1201 = vpack.c.b16 %v1137, %v1137
        %v1202 = vpack.c.b16 %v1138, %v1138
        %v1203 = vpack.c.b16 %v1139, %v1139
        %v1204 = vpack.c.b16 %v1140, %v1140
        %v1205 = vpack.c.b16 %v1141, %v1141
        %v1206 = vpack.c.b16 %v1142, %v1142
        %v1207 = vpack.c.b16 %v1143, %v1143
        %v1208 = vpack.c.b16 %v1144, %v1144
        %v1209 = vpack.c.b16 %v1145, %v1145
        %v1210 = vpack.c.b16 %v1146, %v1146
        %v1211 = vpack.c.b16 %v1147, %v1147
        %v1212 = vpack.c.b16 %v1148, %v1148
        %v1213 = vpack.c.b16 %v1149, %v1149
        %v1214 = vpack.c.b16 %v1150, %v1150
        %v1215 = vpack.c.b16 %v1151, %v1151
        %v1216 = vpack.c.b16 %v1152, %v1152
        %v1217 = vpack.c.b16 %v1153, %v1153
        %v1218 = vpack.c.b16 %v1154, %v1154
        %v1219 = vpack.c.b16 %v1155, %v1155
        %v1220 = vpack.c.b16 %v1156, %v1156
        %v1221 = vpack.c.b16 %v1157, %v1157
        %v1222 = vpack.c.b16 %v1158, %v1158
        %v1223 = vpack.c.b16 %v1159, %v1159
        %v1224 = vpack.c.b16 %v1160, %v1160
        %v1225 = vpack.c.b16 %v1161, %v1161
        %v1226 = vpack.c.b16 %v1162, %v1162
        %v1227 = vpack.c.b16 %v1163, %v1163
        %v1228 = vpack.c.b16 %v1164, %v1164
        %v1229 = vpack.c.b16 %v1165, %v1165
        %v1230 = vpack.c.b16 %v1166, %v1166
        %v1231 = vpack.c.b16 %v1167, %v1167
        %v1232 = vpack.c.b16 %v1168, %v1168
        %v1233 = vpack.c.b16 %v1169, %v1169
        %v1234 = vpack.c.b16 %v1170, %v1170
        %v1235 = vpack.c.b16 %v1171, %v1171
        %v1236 = vpack.c.b16 %v1172, %v1172
        %v1237 = vpack.c.b16 %v1173, %v1173
        %v1238 = vpack.c.b16 %v1174, %v1174
        %v1239 = vpack.c.b16 %v1175, %v1175
        %v1240 = vpack.c.b16 %v1176, %v1176
        %v1241 = vpack.c.b16 %v1177, %v1177
        %v1242 = vpack.c.b16 %v1178, %v1178
        %v1243 = vpack.c.b16 %v1179, %v1179
        %v1244 = vpack.c.b16 %v1180, %v1180
        %v1245 = vpack.c.b16 %v1181, %v1181
        %v1246 = vpack.c.b16 %v1182, %v1182
        %v1247 = vpack.c.b16 %v1183, %v1183
        %v1248 = vpack.c.b16 %v1184, %v1184
        %v1249 = vpack.c.b16 %v1185, %v1185
        %v1250 = vpack.c.b16 %v1186, %v1186
        %v1251 = vpack.c.b16 %v1187, %v1187
        %v1252 = vpack.c.b16 %v1188, %v1188
        %v1253 = vpack.c.b16 %v1189, %v1189
        %v1254 = vpack.c.b16 %v1190, %v1190
        %v1255 = vpack.c.b16 %v1191, %v1191
        %v1256 = vpack.c.b16 %v1192, %v1192
        %v1257 = vpack.c.b16 %v1193, %v1193
        %v1258 = vpack.c.b16 %v1194, %v1194
        %v1259 = vpack.c.b16 %v1195, %v1195
        %v1260 = vpack.c.b16 %v1196, %v1196
        %v1261 = vpack.c.b16 %v1197, %v1197
        %v1262 = vpack.c.b16 %v1198, %v1198
        %v1263 = vpack.c.b16 %v1199, %v1199
        %v1264 = vpack.c.b16 %v1200, %v1200
        %vm1329 = vcmask 257024
        %1330 = vst.msk [vmem:[%s177] sm:$0xf] %vm1329, %v1201
        %1331 = vst.msk [vmem:[%s177 + $0x4] sm:$0xf] %vm1329, %v1202
        %1332 = vst.msk [vmem:[%s177 + $0x8] sm:$0xf] %vm1329, %v1203
        %1333 = vst.msk [vmem:[%s177 + $0xc] sm:$0xf] %vm1329, %v1204
        %1334 = vst.msk [vmem:[%s177 + $0x10] sm:$0xf] %vm1329, %v1205
        %1335 = vst.msk [vmem:[%s177 + $0x14] sm:$0xf] %vm1329, %v1206
        %1336 = vst.msk [vmem:[%s177 + $0x18] sm:$0xf] %vm1329, %v1207
        %1337 = vst.msk [vmem:[%s177 + $0x1c] sm:$0xf] %vm1329, %v1208
        %1338 = vst.msk [vmem:[%s177 + $0x20] sm:$0xf] %vm1329, %v1209
        %1339 = vst.msk [vmem:[%s177 + $0x24] sm:$0xf] %vm1329, %v1210
        %1340 = vst.msk [vmem:[%s177 + $0x28] sm:$0xf] %vm1329, %v1211
        %1341 = vst.msk [vmem:[%s177 + $0x2c] sm:$0xf] %vm1329, %v1212
        %1342 = vst.msk [vmem:[%s177 + $0x30] sm:$0xf] %vm1329, %v1213
        %1343 = vst.msk [vmem:[%s177 + $0x34] sm:$0xf] %vm1329, %v1214
        %1344 = vst.msk [vmem:[%s177 + $0x38] sm:$0xf] %vm1329, %v1215
        %1345 = vst.msk [vmem:[%s177 + $0x3c] sm:$0xf] %vm1329, %v1216
        %1346 = vst.msk [vmem:[%s177 + $0x40] sm:$0xf] %vm1329, %v1217
        %1347 = vst.msk [vmem:[%s177 + $0x44] sm:$0xf] %vm1329, %v1218
        %1348 = vst.msk [vmem:[%s177 + $0x48] sm:$0xf] %vm1329, %v1219
        %1349 = vst.msk [vmem:[%s177 + $0x4c] sm:$0xf] %vm1329, %v1220
        %1350 = vst.msk [vmem:[%s177 + $0x50] sm:$0xf] %vm1329, %v1221
        %1351 = vst.msk [vmem:[%s177 + $0x54] sm:$0xf] %vm1329, %v1222
        %1352 = vst.msk [vmem:[%s177 + $0x58] sm:$0xf] %vm1329, %v1223
        %1353 = vst.msk [vmem:[%s177 + $0x5c] sm:$0xf] %vm1329, %v1224
        %1354 = vst.msk [vmem:[%s177 + $0x60] sm:$0xf] %vm1329, %v1225
        %1355 = vst.msk [vmem:[%s177 + $0x64] sm:$0xf] %vm1329, %v1226
        %1356 = vst.msk [vmem:[%s177 + $0x68] sm:$0xf] %vm1329, %v1227
        %1357 = vst.msk [vmem:[%s177 + $0x6c] sm:$0xf] %vm1329, %v1228
        %1358 = vst.msk [vmem:[%s177 + $0x70] sm:$0xf] %vm1329, %v1229
        %1359 = vst.msk [vmem:[%s177 + $0x74] sm:$0xf] %vm1329, %v1230
        %1360 = vst.msk [vmem:[%s177 + $0x78] sm:$0xf] %vm1329, %v1231
        %1361 = vst.msk [vmem:[%s177 + $0x7c] sm:$0xf] %vm1329, %v1232
        %1362 = vst.msk [vmem:[%s177 + $0x80] sm:$0xf] %vm1329, %v1233
        %1363 = vst.msk [vmem:[%s177 + $0x84] sm:$0xf] %vm1329, %v1234
        %1364 = vst.msk [vmem:[%s177 + $0x88] sm:$0xf] %vm1329, %v1235
        %1365 = vst.msk [vmem:[%s177 + $0x8c] sm:$0xf] %vm1329, %v1236
        %1366 = vst.msk [vmem:[%s177 + $0x90] sm:$0xf] %vm1329, %v1237
        %1367 = vst.msk [vmem:[%s177 + $0x94] sm:$0xf] %vm1329, %v1238
        %1368 = vst.msk [vmem:[%s177 + $0x98] sm:$0xf] %vm1329, %v1239
        %1369 = vst.msk [vmem:[%s177 + $0x9c] sm:$0xf] %vm1329, %v1240
        %1370 = vst.msk [vmem:[%s177 + $0xa0] sm:$0xf] %vm1329, %v1241
        %1371 = vst.msk [vmem:[%s177 + $0xa4] sm:$0xf] %vm1329, %v1242
        %1372 = vst.msk [vmem:[%s177 + $0xa8] sm:$0xf] %vm1329, %v1243
        %1373 = vst.msk [vmem:[%s177 + $0xac] sm:$0xf] %vm1329, %v1244
        %1374 = vst.msk [vmem:[%s177 + $0xb0] sm:$0xf] %vm1329, %v1245
        %1375 = vst.msk [vmem:[%s177 + $0xb4] sm:$0xf] %vm1329, %v1246
        %1376 = vst.msk [vmem:[%s177 + $0xb8] sm:$0xf] %vm1329, %v1247
        %1377 = vst.msk [vmem:[%s177 + $0xbc] sm:$0xf] %vm1329, %v1248
        %1378 = vst.msk [vmem:[%s177 + $0xc0] sm:$0xf] %vm1329, %v1249
        %1379 = vst.msk [vmem:[%s177 + $0xc4] sm:$0xf] %vm1329, %v1250
        %1380 = vst.msk [vmem:[%s177 + $0xc8] sm:$0xf] %vm1329, %v1251
        %1381 = vst.msk [vmem:[%s177 + $0xcc] sm:$0xf] %vm1329, %v1252
        %1382 = vst.msk [vmem:[%s177 + $0xd0] sm:$0xf] %vm1329, %v1253
        %1383 = vst.msk [vmem:[%s177 + $0xd4] sm:$0xf] %vm1329, %v1254
        %1384 = vst.msk [vmem:[%s177 + $0xd8] sm:$0xf] %vm1329, %v1255
        %1385 = vst.msk [vmem:[%s177 + $0xdc] sm:$0xf] %vm1329, %v1256
        %1386 = vst.msk [vmem:[%s177 + $0xe0] sm:$0xf] %vm1329, %v1257
        %1387 = vst.msk [vmem:[%s177 + $0xe4] sm:$0xf] %vm1329, %v1258
        %1388 = vst.msk [vmem:[%s177 + $0xe8] sm:$0xf] %vm1329, %v1259
        %1389 = vst.msk [vmem:[%s177 + $0xec] sm:$0xf] %vm1329, %v1260
        %1390 = vst.msk [vmem:[%s177 + $0xf0] sm:$0xf] %vm1329, %v1261
        %1391 = vst.msk [vmem:[%s177 + $0xf4] sm:$0xf] %vm1329, %v1262
        %1392 = vst.msk [vmem:[%s177 + $0xf8] sm:$0xf] %vm1329, %v1263
        %1393 = vst.msk [vmem:[%s177 + $0xfc] sm:$0xf] %vm1329, %v1264
        %s1394 = sand.u32 %s90, 1
        %s1395 = sand.u32 %s90, 1
        %s1396 = smul.addr %s1395, 256
        %s1397 = scalar_lea.vmem [#allocation2], %s1396
        // Predicated region
        $region33: #{cnn_policy_forward.4} parent=31 // pred_check
          %p1398 = pneg %p100
        $region34: #{cnn_policy_forward.4} parent=31 // pred_check_branch
          %1400 = sbr.rel (%p1398) target = $region36
        $region35: #{cnn_policy_forward.4} parent=31 // pred_region
          %s1401 = smul.u32 64, %s14
          %s1402 = ssub.s32 100, %s1401
          %p1403 = scmp.lt.s32.totalorder %s1402, 64
          %s1404 = scalar_select %p1403, %s1402, 64
          %s1405 = smul.u32 64, %s1404
          %p1406 = scmp.ne.s32.totalorder 0, %s1405
          %s1407 = smul.addr %s1401, 4
          %s1408 = scalar_lea.vmem %s3, %s1407
          // Predicated region
          $region37: #{cnn_policy_forward.4} parent=35 // pred_check
            %p1409 = pneg %p1406
          $region38: #{cnn_policy_forward.4} parent=35 // pred_check_branch
            %1411 = sbr.rel (%p1409) target = $region40
          $region39: #{cnn_policy_forward.4} parent=35 // pred_region
            // Predicated region
            $region41: #{cnn_policy_forward.4} parent=39 // pred_check
              _
            $region42: #{cnn_policy_forward.4} parent=39 // pred_check_branch
              %1413 = sbr.rel target = $region44
            $region43: #{cnn_policy_forward.4} parent=39 // pred_region
              // Predicated region
              $region63: #{cnn_policy_forward.4} parent=43 // pred_check
                _
              $region64: #{cnn_policy_forward.4} parent=43 // pred_check_branch
                %1588 = sbr.rel (0) target = $region66
              $region65: #{cnn_policy_forward.4} parent=43 // pred_region
                %s1590 = sshrl.u32 %s1404, 6
                // While loop
                $region67: #{cnn_policy_forward.4} parent=65 // loop_pre_header
                  _
                $region68: #{cnn_policy_forward.4} parent=65 // loop_header
                  %s1592 = sphi 0, %s1594
                  %p1593 = scmp.ge.s32.totalorder %s1592, %s1590
                  %s1597 = sphi 0, %s1730
                  %s1598 = sphi %s1397, %s1733
                  %s1599 = sphi %s1408, %s1734
                $region69: #{cnn_policy_forward.4} parent=65 // loop_header_branch
                  %1596 = sbr.rel (%p1593) target = $region73
                $region70: #{cnn_policy_forward.4} parent=65 // loop_body
                  %v1600 = vld [vmem:[%s1598] sm:$0xf]
                  %1601 = vst [vmem:[%s1599] sm:$0xf] %v1600
                  %v1602 = vld [vmem:[%s1598 + $0x4] sm:$0xf]
                  %1603 = vst [vmem:[%s1599 + $0x4] sm:$0xf] %v1602
                  %v1604 = vld [vmem:[%s1598 + $0x8] sm:$0xf]
                  %1605 = vst [vmem:[%s1599 + $0x8] sm:$0xf] %v1604
                  %v1606 = vld [vmem:[%s1598 + $0xc] sm:$0xf]
                  %1607 = vst [vmem:[%s1599 + $0xc] sm:$0xf] %v1606
                  %v1608 = vld [vmem:[%s1598 + $0x10] sm:$0xf]
                  %1609 = vst [vmem:[%s1599 + $0x10] sm:$0xf] %v1608
                  %v1610 = vld [vmem:[%s1598 + $0x14] sm:$0xf]
                  %1611 = vst [vmem:[%s1599 + $0x14] sm:$0xf] %v1610
                  %v1612 = vld [vmem:[%s1598 + $0x18] sm:$0xf]
                  %1613 = vst [vmem:[%s1599 + $0x18] sm:$0xf] %v1612
                  %v1614 = vld [vmem:[%s1598 + $0x1c] sm:$0xf]
                  %1615 = vst [vmem:[%s1599 + $0x1c] sm:$0xf] %v1614
                  %v1616 = vld [vmem:[%s1598 + $0x20] sm:$0xf]
                  %1617 = vst [vmem:[%s1599 + $0x20] sm:$0xf] %v1616
                  %v1618 = vld [vmem:[%s1598 + $0x24] sm:$0xf]
                  %1619 = vst [vmem:[%s1599 + $0x24] sm:$0xf] %v1618
                  %v1620 = vld [vmem:[%s1598 + $0x28] sm:$0xf]
                  %1621 = vst [vmem:[%s1599 + $0x28] sm:$0xf] %v1620
                  %v1622 = vld [vmem:[%s1598 + $0x2c] sm:$0xf]
                  %1623 = vst [vmem:[%s1599 + $0x2c] sm:$0xf] %v1622
                  %v1624 = vld [vmem:[%s1598 + $0x30] sm:$0xf]
                  %1625 = vst [vmem:[%s1599 + $0x30] sm:$0xf] %v1624
                  %v1626 = vld [vmem:[%s1598 + $0x34] sm:$0xf]
                  %1627 = vst [vmem:[%s1599 + $0x34] sm:$0xf] %v1626
                  %v1628 = vld [vmem:[%s1598 + $0x38] sm:$0xf]
                  %1629 = vst [vmem:[%s1599 + $0x38] sm:$0xf] %v1628
                  %v1630 = vld [vmem:[%s1598 + $0x3c] sm:$0xf]
                  %1631 = vst [vmem:[%s1599 + $0x3c] sm:$0xf] %v1630
                  %v1632 = vld [vmem:[%s1598 + $0x40] sm:$0xf]
                  %1633 = vst [vmem:[%s1599 + $0x40] sm:$0xf] %v1632
                  %v1634 = vld [vmem:[%s1598 + $0x44] sm:$0xf]
                  %1635 = vst [vmem:[%s1599 + $0x44] sm:$0xf] %v1634
                  %v1636 = vld [vmem:[%s1598 + $0x48] sm:$0xf]
                  %1637 = vst [vmem:[%s1599 + $0x48] sm:$0xf] %v1636
                  %v1638 = vld [vmem:[%s1598 + $0x4c] sm:$0xf]
                  %1639 = vst [vmem:[%s1599 + $0x4c] sm:$0xf] %v1638
                  %v1640 = vld [vmem:[%s1598 + $0x50] sm:$0xf]
                  %1641 = vst [vmem:[%s1599 + $0x50] sm:$0xf] %v1640
                  %v1642 = vld [vmem:[%s1598 + $0x54] sm:$0xf]
                  %1643 = vst [vmem:[%s1599 + $0x54] sm:$0xf] %v1642
                  %v1644 = vld [vmem:[%s1598 + $0x58] sm:$0xf]
                  %1645 = vst [vmem:[%s1599 + $0x58] sm:$0xf] %v1644
                  %v1646 = vld [vmem:[%s1598 + $0x5c] sm:$0xf]
                  %1647 = vst [vmem:[%s1599 + $0x5c] sm:$0xf] %v1646
                  %v1648 = vld [vmem:[%s1598 + $0x60] sm:$0xf]
                  %1649 = vst [vmem:[%s1599 + $0x60] sm:$0xf] %v1648
                  %v1650 = vld [vmem:[%s1598 + $0x64] sm:$0xf]
                  %1651 = vst [vmem:[%s1599 + $0x64] sm:$0xf] %v1650
                  %v1652 = vld [vmem:[%s1598 + $0x68] sm:$0xf]
                  %1653 = vst [vmem:[%s1599 + $0x68] sm:$0xf] %v1652
                  %v1654 = vld [vmem:[%s1598 + $0x6c] sm:$0xf]
                  %1655 = vst [vmem:[%s1599 + $0x6c] sm:$0xf] %v1654
                  %v1656 = vld [vmem:[%s1598 + $0x70] sm:$0xf]
                  %1657 = vst [vmem:[%s1599 + $0x70] sm:$0xf] %v1656
                  %v1658 = vld [vmem:[%s1598 + $0x74] sm:$0xf]
                  %1659 = vst [vmem:[%s1599 + $0x74] sm:$0xf] %v1658
                  %v1660 = vld [vmem:[%s1598 + $0x78] sm:$0xf]
                  %1661 = vst [vmem:[%s1599 + $0x78] sm:$0xf] %v1660
                  %v1662 = vld [vmem:[%s1598 + $0x7c] sm:$0xf]
                  %1663 = vst [vmem:[%s1599 + $0x7c] sm:$0xf] %v1662
                  %v1664 = vld [vmem:[%s1598 + $0x80] sm:$0xf]
                  %1665 = vst [vmem:[%s1599 + $0x80] sm:$0xf] %v1664
                  %v1666 = vld [vmem:[%s1598 + $0x84] sm:$0xf]
                  %1667 = vst [vmem:[%s1599 + $0x84] sm:$0xf] %v1666
                  %v1668 = vld [vmem:[%s1598 + $0x88] sm:$0xf]
                  %1669 = vst [vmem:[%s1599 + $0x88] sm:$0xf] %v1668
                  %v1670 = vld [vmem:[%s1598 + $0x8c] sm:$0xf]
                  %1671 = vst [vmem:[%s1599 + $0x8c] sm:$0xf] %v1670
                  %v1672 = vld [vmem:[%s1598 + $0x90] sm:$0xf]
                  %1673 = vst [vmem:[%s1599 + $0x90] sm:$0xf] %v1672
                  %v1674 = vld [vmem:[%s1598 + $0x94] sm:$0xf]
                  %1675 = vst [vmem:[%s1599 + $0x94] sm:$0xf] %v1674
                  %v1676 = vld [vmem:[%s1598 + $0x98] sm:$0xf]
                  %1677 = vst [vmem:[%s1599 + $0x98] sm:$0xf] %v1676
                  %v1678 = vld [vmem:[%s1598 + $0x9c] sm:$0xf]
                  %1679 = vst [vmem:[%s1599 + $0x9c] sm:$0xf] %v1678
                  %v1680 = vld [vmem:[%s1598 + $0xa0] sm:$0xf]
                  %1681 = vst [vmem:[%s1599 + $0xa0] sm:$0xf] %v1680
                  %v1682 = vld [vmem:[%s1598 + $0xa4] sm:$0xf]
                  %1683 = vst [vmem:[%s1599 + $0xa4] sm:$0xf] %v1682
                  %v1684 = vld [vmem:[%s1598 + $0xa8] sm:$0xf]
                  %1685 = vst [vmem:[%s1599 + $0xa8] sm:$0xf] %v1684
                  %v1686 = vld [vmem:[%s1598 + $0xac] sm:$0xf]
                  %1687 = vst [vmem:[%s1599 + $0xac] sm:$0xf] %v1686
                  %v1688 = vld [vmem:[%s1598 + $0xb0] sm:$0xf]
                  %1689 = vst [vmem:[%s1599 + $0xb0] sm:$0xf] %v1688
                  %v1690 = vld [vmem:[%s1598 + $0xb4] sm:$0xf]
                  %1691 = vst [vmem:[%s1599 + $0xb4] sm:$0xf] %v1690
                  %v1692 = vld [vmem:[%s1598 + $0xb8] sm:$0xf]
                  %1693 = vst [vmem:[%s1599 + $0xb8] sm:$0xf] %v1692
                  %v1694 = vld [vmem:[%s1598 + $0xbc] sm:$0xf]
                  %1695 = vst [vmem:[%s1599 + $0xbc] sm:$0xf] %v1694
                  %v1696 = vld [vmem:[%s1598 + $0xc0] sm:$0xf]
                  %1697 = vst [vmem:[%s1599 + $0xc0] sm:$0xf] %v1696
                  %v1698 = vld [vmem:[%s1598 + $0xc4] sm:$0xf]
                  %1699 = vst [vmem:[%s1599 + $0xc4] sm:$0xf] %v1698
                  %v1700 = vld [vmem:[%s1598 + $0xc8] sm:$0xf]
                  %1701 = vst [vmem:[%s1599 + $0xc8] sm:$0xf] %v1700
                  %v1702 = vld [vmem:[%s1598 + $0xcc] sm:$0xf]
                  %1703 = vst [vmem:[%s1599 + $0xcc] sm:$0xf] %v1702
                  %v1704 = vld [vmem:[%s1598 + $0xd0] sm:$0xf]
                  %1705 = vst [vmem:[%s1599 + $0xd0] sm:$0xf] %v1704
                  %v1706 = vld [vmem:[%s1598 + $0xd4] sm:$0xf]
                  %1707 = vst [vmem:[%s1599 + $0xd4] sm:$0xf] %v1706
                  %v1708 = vld [vmem:[%s1598 + $0xd8] sm:$0xf]
                  %1709 = vst [vmem:[%s1599 + $0xd8] sm:$0xf] %v1708
                  %v1710 = vld [vmem:[%s1598 + $0xdc] sm:$0xf]
                  %1711 = vst [vmem:[%s1599 + $0xdc] sm:$0xf] %v1710
                  %v1712 = vld [vmem:[%s1598 + $0xe0] sm:$0xf]
                  %1713 = vst [vmem:[%s1599 + $0xe0] sm:$0xf] %v1712
                  %v1714 = vld [vmem:[%s1598 + $0xe4] sm:$0xf]
                  %1715 = vst [vmem:[%s1599 + $0xe4] sm:$0xf] %v1714
                  %v1716 = vld [vmem:[%s1598 + $0xe8] sm:$0xf]
                  %1717 = vst [vmem:[%s1599 + $0xe8] sm:$0xf] %v1716
                  %v1718 = vld [vmem:[%s1598 + $0xec] sm:$0xf]
                  %1719 = vst [vmem:[%s1599 + $0xec] sm:$0xf] %v1718
                  %v1720 = vld [vmem:[%s1598 + $0xf0] sm:$0xf]
                  %1721 = vst [vmem:[%s1599 + $0xf0] sm:$0xf] %v1720
                  %v1722 = vld [vmem:[%s1598 + $0xf4] sm:$0xf]
                  %1723 = vst [vmem:[%s1599 + $0xf4] sm:$0xf] %v1722
                  %v1724 = vld [vmem:[%s1598 + $0xf8] sm:$0xf]
                  %1725 = vst [vmem:[%s1599 + $0xf8] sm:$0xf] %v1724
                  %v1726 = vld [vmem:[%s1598 + $0xfc] sm:$0xf]
                  %1727 = vst [vmem:[%s1599 + $0xfc] sm:$0xf] %v1726
                  %s1728 = sadd.s32 1, %s1597
                  %p1729 = scmp.ge.s32.totalorder %s1728, %s1590
                  %s1730 = scalar_select %p1729, 0, %s1728
                  %s1731 = smul.u32 %s1730, 256
                  %s1732 = smul.u32 %s1730, 256
                  %s1733 = scalar_lea.vmem %s1397, %s1731 [#allocation2]
                  %s1734 = scalar_lea.vmem %s1408, %s1732
                $region71: #{cnn_policy_forward.4} parent=65 // loop_footer
                  %s1594 = sadd.s32 %s1592, 1
                $region72: #{cnn_policy_forward.4} parent=65 // loop_footer_branch
                  %1591 = sbr.rel target = $region68
                $region73: #{cnn_policy_forward.4} parent=65 // loop_exit
                  _
                %s1735 = sshrl.u32 %s1404, 6
                %s1736 = sand.u32 %s1404, 63
                %s1737 = smul.u32 %s1735, 64
                %s1738 = smul.u32 4, %s1737
                %s1739 = scalar_lea.vmem %s1397, %s1738 [#allocation2]
                %s1740 = smul.u32 4, %s1737
                %s1741 = scalar_lea.vmem %s1408, %s1740
                // While loop
                $region74: #{cnn_policy_forward.4} parent=65 // loop_pre_header
                  _
                $region75: #{cnn_policy_forward.4} parent=65 // loop_header
                  %s1743 = sphi 0, %s1745
                  %p1744 = scmp.ge.s32.totalorder %s1743, %s1736
                  %s1748 = sphi 0, %s1755
                  %s1749 = sphi %s1739, %s1758
                  %s1750 = sphi %s1741, %s1759
                $region76: #{cnn_policy_forward.4} parent=65 // loop_header_branch
                  %1747 = sbr.rel (%p1744) target = $region80
                $region77: #{cnn_policy_forward.4} parent=65 // loop_body
                  %v1751 = vld [vmem:[%s1749] sm:$0xf]
                  %1752 = vst [vmem:[%s1750] sm:$0xf] %v1751
                  %s1753 = sadd.s32 1, %s1748
                  %p1754 = scmp.ge.s32.totalorder %s1753, %s1736
                  %s1755 = scalar_select %p1754, 0, %s1753
                  %s1756 = smul.u32 %s1755, 4
                  %s1757 = smul.u32 %s1755, 4
                  %s1758 = scalar_lea.vmem %s1739, %s1756 [#allocation2]
                  %s1759 = scalar_lea.vmem %s1741, %s1757
                $region78: #{cnn_policy_forward.4} parent=65 // loop_footer
                  %s1745 = sadd.s32 %s1743, 1
                $region79: #{cnn_policy_forward.4} parent=65 // loop_footer_branch
                  %1742 = sbr.rel target = $region75
                $region80: #{cnn_policy_forward.4} parent=65 // loop_exit
                  _
              $region66: #{cnn_policy_forward.4} parent=43 // pred_fallthru
                _
            $region44: #{cnn_policy_forward.4} parent=39 // pred_fallthru
              _
            // Predicated region
            $region45: #{cnn_policy_forward.4} parent=39 // pred_check
              _
            $region46: #{cnn_policy_forward.4} parent=39 // pred_check_branch
              %1415 = sbr.rel (0) target = $region48
            $region47: #{cnn_policy_forward.4} parent=39 // pred_region
              %s1417 = sshrl.u32 %s1404, 6
              // While loop
              $region49: #{cnn_policy_forward.4} parent=47 // loop_pre_header
                _
              $region50: #{cnn_policy_forward.4} parent=47 // loop_header
                %s1419 = sphi 0, %s1421
                %p1420 = scmp.ge.s32.totalorder %s1419, %s1417
                %s1424 = sphi 0, %s1557
                %s1425 = sphi %s1397, %s1560
                %s1426 = sphi %s1408, %s1561
              $region51: #{cnn_policy_forward.4} parent=47 // loop_header_branch
                %1423 = sbr.rel (%p1420) target = $region55
              $region52: #{cnn_policy_forward.4} parent=47 // loop_body
                %v1427 = vld [vmem:[%s1425] sm:$0xf]
                %1428 = vst [vmem:[%s1426] sm:$0xf] %v1427
                %v1429 = vld [vmem:[%s1425 + $0x4] sm:$0xf]
                %1430 = vst [vmem:[%s1426 + $0x4] sm:$0xf] %v1429
                %v1431 = vld [vmem:[%s1425 + $0x8] sm:$0xf]
                %1432 = vst [vmem:[%s1426 + $0x8] sm:$0xf] %v1431
                %v1433 = vld [vmem:[%s1425 + $0xc] sm:$0xf]
                %1434 = vst [vmem:[%s1426 + $0xc] sm:$0xf] %v1433
                %v1435 = vld [vmem:[%s1425 + $0x10] sm:$0xf]
                %1436 = vst [vmem:[%s1426 + $0x10] sm:$0xf] %v1435
                %v1437 = vld [vmem:[%s1425 + $0x14] sm:$0xf]
                %1438 = vst [vmem:[%s1426 + $0x14] sm:$0xf] %v1437
                %v1439 = vld [vmem:[%s1425 + $0x18] sm:$0xf]
                %1440 = vst [vmem:[%s1426 + $0x18] sm:$0xf] %v1439
                %v1441 = vld [vmem:[%s1425 + $0x1c] sm:$0xf]
                %1442 = vst [vmem:[%s1426 + $0x1c] sm:$0xf] %v1441
                %v1443 = vld [vmem:[%s1425 + $0x20] sm:$0xf]
                %1444 = vst [vmem:[%s1426 + $0x20] sm:$0xf] %v1443
                %v1445 = vld [vmem:[%s1425 + $0x24] sm:$0xf]
                %1446 = vst [vmem:[%s1426 + $0x24] sm:$0xf] %v1445
                %v1447 = vld [vmem:[%s1425 + $0x28] sm:$0xf]
                %1448 = vst [vmem:[%s1426 + $0x28] sm:$0xf] %v1447
                %v1449 = vld [vmem:[%s1425 + $0x2c] sm:$0xf]
                %1450 = vst [vmem:[%s1426 + $0x2c] sm:$0xf] %v1449
                %v1451 = vld [vmem:[%s1425 + $0x30] sm:$0xf]
                %1452 = vst [vmem:[%s1426 + $0x30] sm:$0xf] %v1451
                %v1453 = vld [vmem:[%s1425 + $0x34] sm:$0xf]
                %1454 = vst [vmem:[%s1426 + $0x34] sm:$0xf] %v1453
                %v1455 = vld [vmem:[%s1425 + $0x38] sm:$0xf]
                %1456 = vst [vmem:[%s1426 + $0x38] sm:$0xf] %v1455
                %v1457 = vld [vmem:[%s1425 + $0x3c] sm:$0xf]
                %1458 = vst [vmem:[%s1426 + $0x3c] sm:$0xf] %v1457
                %v1459 = vld [vmem:[%s1425 + $0x40] sm:$0xf]
                %1460 = vst [vmem:[%s1426 + $0x40] sm:$0xf] %v1459
                %v1461 = vld [vmem:[%s1425 + $0x44] sm:$0xf]
                %1462 = vst [vmem:[%s1426 + $0x44] sm:$0xf] %v1461
                %v1463 = vld [vmem:[%s1425 + $0x48] sm:$0xf]
                %1464 = vst [vmem:[%s1426 + $0x48] sm:$0xf] %v1463
                %v1465 = vld [vmem:[%s1425 + $0x4c] sm:$0xf]
                %1466 = vst [vmem:[%s1426 + $0x4c] sm:$0xf] %v1465
                %v1467 = vld [vmem:[%s1425 + $0x50] sm:$0xf]
                %1468 = vst [vmem:[%s1426 + $0x50] sm:$0xf] %v1467
                %v1469 = vld [vmem:[%s1425 + $0x54] sm:$0xf]
                %1470 = vst [vmem:[%s1426 + $0x54] sm:$0xf] %v1469
                %v1471 = vld [vmem:[%s1425 + $0x58] sm:$0xf]
                %1472 = vst [vmem:[%s1426 + $0x58] sm:$0xf] %v1471
                %v1473 = vld [vmem:[%s1425 + $0x5c] sm:$0xf]
                %1474 = vst [vmem:[%s1426 + $0x5c] sm:$0xf] %v1473
                %v1475 = vld [vmem:[%s1425 + $0x60] sm:$0xf]
                %1476 = vst [vmem:[%s1426 + $0x60] sm:$0xf] %v1475
                %v1477 = vld [vmem:[%s1425 + $0x64] sm:$0xf]
                %1478 = vst [vmem:[%s1426 + $0x64] sm:$0xf] %v1477
                %v1479 = vld [vmem:[%s1425 + $0x68] sm:$0xf]
                %1480 = vst [vmem:[%s1426 + $0x68] sm:$0xf] %v1479
                %v1481 = vld [vmem:[%s1425 + $0x6c] sm:$0xf]
                %1482 = vst [vmem:[%s1426 + $0x6c] sm:$0xf] %v1481
                %v1483 = vld [vmem:[%s1425 + $0x70] sm:$0xf]
                %1484 = vst [vmem:[%s1426 + $0x70] sm:$0xf] %v1483
                %v1485 = vld [vmem:[%s1425 + $0x74] sm:$0xf]
                %1486 = vst [vmem:[%s1426 + $0x74] sm:$0xf] %v1485
                %v1487 = vld [vmem:[%s1425 + $0x78] sm:$0xf]
                %1488 = vst [vmem:[%s1426 + $0x78] sm:$0xf] %v1487
                %v1489 = vld [vmem:[%s1425 + $0x7c] sm:$0xf]
                %1490 = vst [vmem:[%s1426 + $0x7c] sm:$0xf] %v1489
                %v1491 = vld [vmem:[%s1425 + $0x80] sm:$0xf]
                %1492 = vst [vmem:[%s1426 + $0x80] sm:$0xf] %v1491
                %v1493 = vld [vmem:[%s1425 + $0x84] sm:$0xf]
                %1494 = vst [vmem:[%s1426 + $0x84] sm:$0xf] %v1493
                %v1495 = vld [vmem:[%s1425 + $0x88] sm:$0xf]
                %1496 = vst [vmem:[%s1426 + $0x88] sm:$0xf] %v1495
                %v1497 = vld [vmem:[%s1425 + $0x8c] sm:$0xf]
                %1498 = vst [vmem:[%s1426 + $0x8c] sm:$0xf] %v1497
                %v1499 = vld [vmem:[%s1425 + $0x90] sm:$0xf]
                %1500 = vst [vmem:[%s1426 + $0x90] sm:$0xf] %v1499
                %v1501 = vld [vmem:[%s1425 + $0x94] sm:$0xf]
                %1502 = vst [vmem:[%s1426 + $0x94] sm:$0xf] %v1501
                %v1503 = vld [vmem:[%s1425 + $0x98] sm:$0xf]
                %1504 = vst [vmem:[%s1426 + $0x98] sm:$0xf] %v1503
                %v1505 = vld [vmem:[%s1425 + $0x9c] sm:$0xf]
                %1506 = vst [vmem:[%s1426 + $0x9c] sm:$0xf] %v1505
                %v1507 = vld [vmem:[%s1425 + $0xa0] sm:$0xf]
                %1508 = vst [vmem:[%s1426 + $0xa0] sm:$0xf] %v1507
                %v1509 = vld [vmem:[%s1425 + $0xa4] sm:$0xf]
                %1510 = vst [vmem:[%s1426 + $0xa4] sm:$0xf] %v1509
                %v1511 = vld [vmem:[%s1425 + $0xa8] sm:$0xf]
                %1512 = vst [vmem:[%s1426 + $0xa8] sm:$0xf] %v1511
                %v1513 = vld [vmem:[%s1425 + $0xac] sm:$0xf]
                %1514 = vst [vmem:[%s1426 + $0xac] sm:$0xf] %v1513
                %v1515 = vld [vmem:[%s1425 + $0xb0] sm:$0xf]
                %1516 = vst [vmem:[%s1426 + $0xb0] sm:$0xf] %v1515
                %v1517 = vld [vmem:[%s1425 + $0xb4] sm:$0xf]
                %1518 = vst [vmem:[%s1426 + $0xb4] sm:$0xf] %v1517
                %v1519 = vld [vmem:[%s1425 + $0xb8] sm:$0xf]
                %1520 = vst [vmem:[%s1426 + $0xb8] sm:$0xf] %v1519
                %v1521 = vld [vmem:[%s1425 + $0xbc] sm:$0xf]
                %1522 = vst [vmem:[%s1426 + $0xbc] sm:$0xf] %v1521
                %v1523 = vld [vmem:[%s1425 + $0xc0] sm:$0xf]
                %1524 = vst [vmem:[%s1426 + $0xc0] sm:$0xf] %v1523
                %v1525 = vld [vmem:[%s1425 + $0xc4] sm:$0xf]
                %1526 = vst [vmem:[%s1426 + $0xc4] sm:$0xf] %v1525
                %v1527 = vld [vmem:[%s1425 + $0xc8] sm:$0xf]
                %1528 = vst [vmem:[%s1426 + $0xc8] sm:$0xf] %v1527
                %v1529 = vld [vmem:[%s1425 + $0xcc] sm:$0xf]
                %1530 = vst [vmem:[%s1426 + $0xcc] sm:$0xf] %v1529
                %v1531 = vld [vmem:[%s1425 + $0xd0] sm:$0xf]
                %1532 = vst [vmem:[%s1426 + $0xd0] sm:$0xf] %v1531
                %v1533 = vld [vmem:[%s1425 + $0xd4] sm:$0xf]
                %1534 = vst [vmem:[%s1426 + $0xd4] sm:$0xf] %v1533
                %v1535 = vld [vmem:[%s1425 + $0xd8] sm:$0xf]
                %1536 = vst [vmem:[%s1426 + $0xd8] sm:$0xf] %v1535
                %v1537 = vld [vmem:[%s1425 + $0xdc] sm:$0xf]
                %1538 = vst [vmem:[%s1426 + $0xdc] sm:$0xf] %v1537
                %v1539 = vld [vmem:[%s1425 + $0xe0] sm:$0xf]
                %1540 = vst [vmem:[%s1426 + $0xe0] sm:$0xf] %v1539
                %v1541 = vld [vmem:[%s1425 + $0xe4] sm:$0xf]
                %1542 = vst [vmem:[%s1426 + $0xe4] sm:$0xf] %v1541
                %v1543 = vld [vmem:[%s1425 + $0xe8] sm:$0xf]
                %1544 = vst [vmem:[%s1426 + $0xe8] sm:$0xf] %v1543
                %v1545 = vld [vmem:[%s1425 + $0xec] sm:$0xf]
                %1546 = vst [vmem:[%s1426 + $0xec] sm:$0xf] %v1545
                %v1547 = vld [vmem:[%s1425 + $0xf0] sm:$0xf]
                %1548 = vst [vmem:[%s1426 + $0xf0] sm:$0xf] %v1547
                %v1549 = vld [vmem:[%s1425 + $0xf4] sm:$0xf]
                %1550 = vst [vmem:[%s1426 + $0xf4] sm:$0xf] %v1549
                %v1551 = vld [vmem:[%s1425 + $0xf8] sm:$0xf]
                %1552 = vst [vmem:[%s1426 + $0xf8] sm:$0xf] %v1551
                %v1553 = vld [vmem:[%s1425 + $0xfc] sm:$0xf]
                %1554 = vst [vmem:[%s1426 + $0xfc] sm:$0xf] %v1553
                %s1555 = sadd.s32 1, %s1424
                %p1556 = scmp.ge.s32.totalorder %s1555, %s1417
                %s1557 = scalar_select %p1556, 0, %s1555
                %s1558 = smul.u32 %s1557, 256
                %s1559 = smul.u32 %s1557, 256
                %s1560 = scalar_lea.vmem %s1397, %s1558 [#allocation2]
                %s1561 = scalar_lea.vmem %s1408, %s1559
              $region53: #{cnn_policy_forward.4} parent=47 // loop_footer
                %s1421 = sadd.s32 %s1419, 1
              $region54: #{cnn_policy_forward.4} parent=47 // loop_footer_branch
                %1418 = sbr.rel target = $region50
              $region55: #{cnn_policy_forward.4} parent=47 // loop_exit
                _
              %s1562 = sshrl.u32 %s1404, 6
              %s1563 = sand.u32 %s1404, 63
              %s1564 = smul.u32 %s1562, 64
              %s1565 = smul.u32 4, %s1564
              %s1566 = scalar_lea.vmem %s1397, %s1565 [#allocation2]
              %s1567 = smul.u32 4, %s1564
              %s1568 = scalar_lea.vmem %s1408, %s1567
              // While loop
              $region56: #{cnn_policy_forward.4} parent=47 // loop_pre_header
                _
              $region57: #{cnn_policy_forward.4} parent=47 // loop_header
                %s1570 = sphi 0, %s1572
                %p1571 = scmp.ge.s32.totalorder %s1570, %s1563
                %s1575 = sphi 0, %s1582
                %s1576 = sphi %s1566, %s1585
                %s1577 = sphi %s1568, %s1586
              $region58: #{cnn_policy_forward.4} parent=47 // loop_header_branch
                %1574 = sbr.rel (%p1571) target = $region62
              $region59: #{cnn_policy_forward.4} parent=47 // loop_body
                %v1578 = vld [vmem:[%s1576] sm:$0xf]
                %1579 = vst [vmem:[%s1577] sm:$0xf] %v1578
                %s1580 = sadd.s32 1, %s1575
                %p1581 = scmp.ge.s32.totalorder %s1580, %s1563
                %s1582 = scalar_select %p1581, 0, %s1580
                %s1583 = smul.u32 %s1582, 4
                %s1584 = smul.u32 %s1582, 4
                %s1585 = scalar_lea.vmem %s1566, %s1583 [#allocation2]
                %s1586 = scalar_lea.vmem %s1568, %s1584
              $region60: #{cnn_policy_forward.4} parent=47 // loop_footer
                %s1572 = sadd.s32 %s1570, 1
              $region61: #{cnn_policy_forward.4} parent=47 // loop_footer_branch
                %1569 = sbr.rel target = $region57
              $region62: #{cnn_policy_forward.4} parent=47 // loop_exit
                _
            $region48: #{cnn_policy_forward.4} parent=39 // pred_fallthru
              _
          $region40: #{cnn_policy_forward.4} parent=35 // pred_fallthru
            _
          %1760 = vnop
        $region36: #{cnn_policy_forward.4} parent=31 // pred_fallthru
          _
      $region32: #{cnn_policy_forward.4} parent=5 // pred_fallthru
        _
      %p1761 = scmp.le.s32.totalorder 2, %s9
      // Predicated region
      $region81: #{cnn_policy_forward.4} parent=5 // pred_check
        %p1762 = pneg %p1761
      $region82: #{cnn_policy_forward.4} parent=5 // pred_check_branch
        %1764 = sbr.rel (%p1762) target = $region84
      $region83: #{cnn_policy_forward.4} parent=5 // pred_region
        %s1765 = ssub.s32 %s9, 2
        // Predicated region
        $region85: #{cnn_policy_forward.4} parent=83 // pred_check
          %p1766 = pneg %p106
        $region86: #{cnn_policy_forward.4} parent=83 // pred_check_branch
          %1768 = sbr.rel (%p1766) target = $region88
        $region87: #{cnn_policy_forward.4} parent=83 // pred_region
          %s1769 = sand.u32 %s91, 1
          %s1770 = sand.u32 %s91, 1
          %s1771 = smul.addr %s1770, 256
          %s1772 = scalar_lea.vmem [#allocation2], %s1771
        $region88: #{cnn_policy_forward.4} parent=83 // pred_fallthru
          _
      $region84: #{cnn_policy_forward.4} parent=5 // pred_fallthru
        _
    $region6: #{cnn_policy_forward.4} parent=1 // loop_footer
      %s13 = sadd.s32 1, %s9
    $region7: #{cnn_policy_forward.4} parent=1 // loop_footer_branch
      %8 = sbr.rel target = $region3
    $region8: #{cnn_policy_forward.4} parent=1 // loop_exit
      _

// kernel: cnn_policy_forward.5
$region0: #{cnn_policy_forward.5}
  #allocation0 [shape = 'u32[]', space=smem, size = 0x4, offset = 0x4, fixed_abs, tag = 'smem constant byte address 0x4 - core index']
  #allocation1 [shape = 'u32[144,128]{1,0:T(1,128)}', space=vmem, size = 0x12000, scoped, tag = 'internal scratch']
  %s0 = inlined_call_operand.vmem [shape: bf16[162,512], index: 0, kind: input, shape index: {}]
  %s1 = inlined_call_operand.vmem [shape: bf16[512,64], index: 1, kind: input, shape index: {}]
  %s2 = inlined_call_operand.vmem [shape: f32[1,64], index: 2, kind: input, shape index: {}]
  %s3 = inlined_call_operand.vmem [shape: bf16[162,64], index: 3, kind: output, shape index: {}]
  %s4 = sld [smem:[#allocation0]]
  $region22: #{cnn_policy_forward.5} parent=0
    _
  %s6 = ssub.s32 1, %s4
  %s7 = scalar_select 0, %s6, %s4
  // Predicated region
  $region2: #{cnn_policy_forward.5} parent=0 // pred_check
    _
  $region3: #{cnn_policy_forward.5} parent=0 // pred_check_branch
    %9 = sbr.rel (0) target = $region5
  $region4: #{cnn_policy_forward.5} parent=0 // pred_region
    _
  $region5: #{cnn_policy_forward.5} parent=0 // pred_fallthru
    _
  // Predicated region
  $region6: #{cnn_policy_forward.5} parent=0 // pred_check
    _
  $region7: #{cnn_policy_forward.5} parent=0 // pred_check_branch
    %11 = sbr.rel (0) target = $region9
  $region8: #{cnn_policy_forward.5} parent=0 // pred_region
    _
  $region9: #{cnn_policy_forward.5} parent=0 // pred_fallthru
    _
  // Predicated region
  $region10: #{cnn_policy_forward.5} parent=0 // pred_check
    _
  $region11: #{cnn_policy_forward.5} parent=0 // pred_check_branch
    %13 = sbr.rel (0) target = $region13
  $region12: #{cnn_policy_forward.5} parent=0 // pred_region
    _
  $region13: #{cnn_policy_forward.5} parent=0 // pred_fallthru
    _
  %v15 = vld [vmem:[%s0] sm:$0xff]
  %v16 = vld [vmem:[%s0 + $0x8] sm:$0xff]
  %v17 = vld [vmem:[%s0 + $0x10] sm:$0xff]
  %v18 = vld [vmem:[%s0 + $0x18] sm:$0xff]
  %v19 = vld [vmem:[%s0 + $0x20] sm:$0xff]
  %v20 = vld [vmem:[%s0 + $0x28] sm:$0xff]
  %v21 = vld [vmem:[%s0 + $0x30] sm:$0xff]
  %v22 = vld [vmem:[%s0 + $0x38] sm:$0xff]
  %v23 = vld [vmem:[%s0 + $0x40] sm:$0xff]
  %v24 = vld [vmem:[%s0 + $0x48] sm:$0xff]
  %v25 = vld [vmem:[%s0 + $0x50] sm:$0xff]
  %v26 = vld [vmem:[%s0 + $0x58] sm:$0xff]
  %v27 = vld [vmem:[%s0 + $0x60] sm:$0xff]
  %v28 = vld [vmem:[%s0 + $0x68] sm:$0xff]
  %v29 = vld [vmem:[%s0 + $0x70] sm:$0xff]
  %v30 = vld [vmem:[%s0 + $0x78] sm:$0xff]
  %v31 = vld [vmem:[%s0 + $0x80] sm:$0xff]
  %v32 = vld [vmem:[%s0 + $0x88] sm:$0xff]
  %v33 = vld [vmem:[%s0 + $0x90] sm:$0xff]
  %v34 = vld [vmem:[%s0 + $0x98] sm:$0xff]
  %v35 = vld [vmem:[%s0 + $0xa0] sm:$0xff]
  %v36 = vld [vmem:[%s0 + $0xa8] sm:$0xff]
  %v37 = vld [vmem:[%s0 + $0xb0] sm:$0xff]
  %v38 = vld [vmem:[%s0 + $0xb8] sm:$0xff]
  %v39 = vld [vmem:[%s0 + $0xc0] sm:$0xff]
  %v40 = vld [vmem:[%s0 + $0xc8] sm:$0xff]
  %v41 = vld [vmem:[%s0 + $0xd0] sm:$0xff]
  %v42 = vld [vmem:[%s0 + $0xd8] sm:$0xff]
  %v43 = vld [vmem:[%s0 + $0xe0] sm:$0xff]
  %v44 = vld [vmem:[%s0 + $0xe8] sm:$0xff]
  %v45 = vld [vmem:[%s0 + $0xf0] sm:$0xff]
  %v46 = vld [vmem:[%s0 + $0xf8] sm:$0xff]
  %v47 = vld [vmem:[%s0 + $0x100] sm:$0xff]
  %v48 = vld [vmem:[%s0 + $0x108] sm:$0xff]
  %v49 = vld [vmem:[%s0 + $0x110] sm:$0xff]
  %v50 = vld [vmem:[%s0 + $0x118] sm:$0xff]
  %v51 = vld [vmem:[%s0 + $0x120] sm:$0xff]
  %v52 = vld [vmem:[%s0 + $0x128] sm:$0xff]
  %v53 = vld [vmem:[%s0 + $0x130] sm:$0xff]
  %v54 = vld [vmem:[%s0 + $0x138] sm:$0xff]
  %v55 = vld [vmem:[%s0 + $0x140] sm:$0x11]
  %v56 = vld [vmem:[%s0 + $0x148] sm:$0x11]
  %v57 = vld [vmem:[%s1] sm:$0xf]
  %v58 = vld [vmem:[%s1 + $0x4] sm:$0xf]
  %v59 = vld [vmem:[%s1 + $0x8] sm:$0xf]
  %v60 = vld [vmem:[%s1 + $0xc] sm:$0xf]
  %v61 = vld [vmem:[%s1 + $0x10] sm:$0xf]
  %v62 = vld [vmem:[%s1 + $0x14] sm:$0xf]
  %v63 = vld [vmem:[%s1 + $0x18] sm:$0xf]
  %v64 = vld [vmem:[%s1 + $0x1c] sm:$0xf]
  %v65 = vld [vmem:[%s1 + $0x20] sm:$0xf]
  %v66 = vld [vmem:[%s1 + $0x24] sm:$0xf]
  %v67 = vld [vmem:[%s1 + $0x28] sm:$0xf]
  %v68 = vld [vmem:[%s1 + $0x2c] sm:$0xf]
  %v69 = vld [vmem:[%s1 + $0x30] sm:$0xf]
  %v70 = vld [vmem:[%s1 + $0x34] sm:$0xf]
  %v71 = vld [vmem:[%s1 + $0x38] sm:$0xf]
  %v72 = vld [vmem:[%s1 + $0x3c] sm:$0xf]
  %v73 = vld [vmem:[%s1 + $0x40] sm:$0xf]
  %v74 = vld [vmem:[%s1 + $0x44] sm:$0xf]
  %v75 = vld [vmem:[%s1 + $0x48] sm:$0xf]
  %v76 = vld [vmem:[%s1 + $0x4c] sm:$0xf]
  %v77 = vld [vmem:[%s1 + $0x50] sm:$0xf]
  %v78 = vld [vmem:[%s1 + $0x54] sm:$0xf]
  %v79 = vld [vmem:[%s1 + $0x58] sm:$0xf]
  %v80 = vld [vmem:[%s1 + $0x5c] sm:$0xf]
  %v81 = vld [vmem:[%s1 + $0x60] sm:$0xf]
  %v82 = vld [vmem:[%s1 + $0x64] sm:$0xf]
  %v83 = vld [vmem:[%s1 + $0x68] sm:$0xf]
  %v84 = vld [vmem:[%s1 + $0x6c] sm:$0xf]
  %v85 = vld [vmem:[%s1 + $0x70] sm:$0xf]
  %v86 = vld [vmem:[%s1 + $0x74] sm:$0xf]
  %v87 = vld [vmem:[%s1 + $0x78] sm:$0xf]
  %v88 = vld [vmem:[%s1 + $0x7c] sm:$0xf]
  %v89 = vld [vmem:[%s1 + $0x80] sm:$0xf]
  %v90 = vld [vmem:[%s1 + $0x84] sm:$0xf]
  %v91 = vld [vmem:[%s1 + $0x88] sm:$0xf]
  %v92 = vld [vmem:[%s1 + $0x8c] sm:$0xf]
  %v93 = vld [vmem:[%s1 + $0x90] sm:$0xf]
  %v94 = vld [vmem:[%s1 + $0x94] sm:$0xf]
  %v95 = vld [vmem:[%s1 + $0x98] sm:$0xf]
  %v96 = vld [vmem:[%s1 + $0x9c] sm:$0xf]
  %v97 = vld [vmem:[%s1 + $0xa0] sm:$0xf]
  %v98 = vld [vmem:[%s1 + $0xa4] sm:$0xf]
  %v99 = vld [vmem:[%s1 + $0xa8] sm:$0xf]
  %v100 = vld [vmem:[%s1 + $0xac] sm:$0xf]
  %v101 = vld [vmem:[%s1 + $0xb0] sm:$0xf]
  %v102 = vld [vmem:[%s1 + $0xb4] sm:$0xf]
  %v103 = vld [vmem:[%s1 + $0xb8] sm:$0xf]
  %v104 = vld [vmem:[%s1 + $0xbc] sm:$0xf]
  %v105 = vld [vmem:[%s1 + $0xc0] sm:$0xf]
  %v106 = vld [vmem:[%s1 + $0xc4] sm:$0xf]
  %v107 = vld [vmem:[%s1 + $0xc8] sm:$0xf]
  %v108 = vld [vmem:[%s1 + $0xcc] sm:$0xf]
  %v109 = vld [vmem:[%s1 + $0xd0] sm:$0xf]
  %v110 = vld [vmem:[%s1 + $0xd4] sm:$0xf]
  %v111 = vld [vmem:[%s1 + $0xd8] sm:$0xf]
  %v112 = vld [vmem:[%s1 + $0xdc] sm:$0xf]
  %v113 = vld [vmem:[%s1 + $0xe0] sm:$0xf]
  %v114 = vld [vmem:[%s1 + $0xe4] sm:$0xf]
  %v115 = vld [vmem:[%s1 + $0xe8] sm:$0xf]
  %v116 = vld [vmem:[%s1 + $0xec] sm:$0xf]
  %v117 = vld [vmem:[%s1 + $0xf0] sm:$0xf]
  %v118 = vld [vmem:[%s1 + $0xf4] sm:$0xf]
  %v119 = vld [vmem:[%s1 + $0xf8] sm:$0xf]
  %v120 = vld [vmem:[%s1 + $0xfc] sm:$0xf]
  %v121 = vld [vmem:[%s2] sm:$0x1]
  %v123 = vlaneseq
  %v124 = vshrl.u32 %v123, 7
  %v125 = vsub.s32 0, %v124
  %v126 = vrot.slane %v121, %v125
  %v170 = vunpack.c.l.b16 %v15
  %v171 = vunpack.c.h.b16 %v15
  %v172 = vunpack.c.l.b16 %v16
  %v173 = vunpack.c.h.b16 %v16
  %v174 = vunpack.c.l.b16 %v17
  %v175 = vunpack.c.h.b16 %v17
  %v176 = vunpack.c.l.b16 %v18
  %v177 = vunpack.c.h.b16 %v18
  %v178 = vunpack.c.l.b16 %v19
  %v179 = vunpack.c.h.b16 %v19
  %v180 = vunpack.c.l.b16 %v20
  %v181 = vunpack.c.h.b16 %v20
  %v182 = vunpack.c.l.b16 %v21
  %v183 = vunpack.c.h.b16 %v21
  %v184 = vunpack.c.l.b16 %v22
  %v185 = vunpack.c.h.b16 %v22
  %v186 = vunpack.c.l.b16 %v23
  %v187 = vunpack.c.h.b16 %v23
  %v188 = vunpack.c.l.b16 %v24
  %v189 = vunpack.c.h.b16 %v24
  %v190 = vunpack.c.l.b16 %v25
  %v191 = vunpack.c.h.b16 %v25
  %v192 = vunpack.c.l.b16 %v26
  %v193 = vunpack.c.h.b16 %v26
  %v194 = vunpack.c.l.b16 %v27
  %v195 = vunpack.c.h.b16 %v27
  %v196 = vunpack.c.l.b16 %v28
  %v197 = vunpack.c.h.b16 %v28
  %v198 = vunpack.c.l.b16 %v29
  %v199 = vunpack.c.h.b16 %v29
  %v200 = vunpack.c.l.b16 %v30
  %v201 = vunpack.c.h.b16 %v30
  %v202 = vunpack.c.l.b16 %v31
  %v203 = vunpack.c.h.b16 %v31
  %v204 = vunpack.c.l.b16 %v32
  %v205 = vunpack.c.h.b16 %v32
  %v206 = vunpack.c.l.b16 %v33
  %v207 = vunpack.c.h.b16 %v33
  %v208 = vunpack.c.l.b16 %v34
  %v209 = vunpack.c.h.b16 %v34
  %v210 = vunpack.c.l.b16 %v35
  %v211 = vunpack.c.h.b16 %v35
  %v212 = vunpack.c.l.b16 %v36
  %v213 = vunpack.c.h.b16 %v36
  %v214 = vunpack.c.l.b16 %v37
  %v215 = vunpack.c.h.b16 %v37
  %v216 = vunpack.c.l.b16 %v38
  %v217 = vunpack.c.h.b16 %v38
  %v218 = vunpack.c.l.b16 %v39
  %v219 = vunpack.c.h.b16 %v39
  %v220 = vunpack.c.l.b16 %v40
  %v221 = vunpack.c.h.b16 %v40
  %v222 = vunpack.c.l.b16 %v41
  %v223 = vunpack.c.h.b16 %v41
  %v224 = vunpack.c.l.b16 %v42
  %v225 = vunpack.c.h.b16 %v42
  %v226 = vunpack.c.l.b16 %v43
  %v227 = vunpack.c.h.b16 %v43
  %v228 = vunpack.c.l.b16 %v44
  %v229 = vunpack.c.h.b16 %v44
  %v230 = vunpack.c.l.b16 %v45
  %v231 = vunpack.c.h.b16 %v45
  %v232 = vunpack.c.l.b16 %v46
  %v233 = vunpack.c.h.b16 %v46
  %v234 = vunpack.c.l.b16 %v47
  %v235 = vunpack.c.h.b16 %v47
  %v236 = vunpack.c.l.b16 %v48
  %v237 = vunpack.c.h.b16 %v48
  %v238 = vunpack.c.l.b16 %v49
  %v239 = vunpack.c.h.b16 %v49
  %v240 = vunpack.c.l.b16 %v50
  %v241 = vunpack.c.h.b16 %v50
  %v242 = vunpack.c.l.b16 %v51
  %v243 = vunpack.c.h.b16 %v51
  %v244 = vunpack.c.l.b16 %v52
  %v245 = vunpack.c.h.b16 %v52
  %v246 = vunpack.c.l.b16 %v53
  %v247 = vunpack.c.h.b16 %v53
  %v248 = vunpack.c.l.b16 %v54
  %v249 = vunpack.c.h.b16 %v54
  %v250 = vunpack.c.l.b16 %v55
  %v251 = vunpack.c.h.b16 %v55
  %v252 = vunpack.c.l.b16 %v56
  %v253 = vunpack.c.h.b16 %v56
  %v254 = vpack.c.b16 %v174, %v170
  %v255 = vpack.c.b16 %v175, %v171
  %v256 = vpack.c.b16 %v176, %v172
  %v257 = vpack.c.b16 %v177, %v173
  %v258 = vpack.c.b16 %v182, %v178
  %v259 = vpack.c.b16 %v183, %v179
  %v260 = vpack.c.b16 %v184, %v180
  %v261 = vpack.c.b16 %v185, %v181
  %v262 = vpack.c.b16 %v190, %v186
  %v263 = vpack.c.b16 %v191, %v187
  %v264 = vpack.c.b16 %v192, %v188
  %v265 = vpack.c.b16 %v193, %v189
  %v266 = vpack.c.b16 %v198, %v194
  %v267 = vpack.c.b16 %v199, %v195
  %v268 = vpack.c.b16 %v200, %v196
  %v269 = vpack.c.b16 %v201, %v197
  %v270 = vpack.c.b16 %v206, %v202
  %v271 = vpack.c.b16 %v207, %v203
  %v272 = vpack.c.b16 %v208, %v204
  %v273 = vpack.c.b16 %v209, %v205
  %v274 = vpack.c.b16 %v214, %v210
  %v275 = vpack.c.b16 %v215, %v211
  %v276 = vpack.c.b16 %v216, %v212
  %v277 = vpack.c.b16 %v217, %v213
  %v278 = vpack.c.b16 %v222, %v218
  %v279 = vpack.c.b16 %v223, %v219
  %v280 = vpack.c.b16 %v224, %v220
  %v281 = vpack.c.b16 %v225, %v221
  %v282 = vpack.c.b16 %v230, %v226
  %v283 = vpack.c.b16 %v231, %v227
  %v284 = vpack.c.b16 %v232, %v228
  %v285 = vpack.c.b16 %v233, %v229
  %v286 = vpack.c.b16 %v238, %v234
  %v287 = vpack.c.b16 %v239, %v235
  %v288 = vpack.c.b16 %v240, %v236
  %v289 = vpack.c.b16 %v241, %v237
  %v290 = vpack.c.b16 %v246, %v242
  %v291 = vpack.c.b16 %v247, %v243
  %v292 = vpack.c.b16 %v248, %v244
  %v293 = vpack.c.b16 %v249, %v245
  %v294 = vpack.c.b16 %v250, %v250
  %v295 = vpack.c.b16 %v251, %v251
  %v296 = vpack.c.b16 %v252, %v252
  %v297 = vpack.c.b16 %v253, %v253
  %v406 = vunpack.c.l.b16 %v57
  %v407 = vunpack.c.l.b16 %v58
  %v408 = vunpack.c.l.b16 %v59
  %v409 = vunpack.c.l.b16 %v60
  %v410 = vunpack.c.l.b16 %v61
  %v411 = vunpack.c.l.b16 %v62
  %v412 = vunpack.c.l.b16 %v63
  %v413 = vunpack.c.l.b16 %v64
  %v414 = vunpack.c.l.b16 %v65
  %v415 = vunpack.c.l.b16 %v66
  %v416 = vunpack.c.l.b16 %v67
  %v417 = vunpack.c.l.b16 %v68
  %v418 = vunpack.c.l.b16 %v69
  %v419 = vunpack.c.l.b16 %v70
  %v420 = vunpack.c.l.b16 %v71
  %v421 = vunpack.c.l.b16 %v72
  %v422 = vunpack.c.l.b16 %v73
  %v423 = vunpack.c.l.b16 %v74
  %v424 = vunpack.c.l.b16 %v75
  %v425 = vunpack.c.l.b16 %v76
  %v426 = vunpack.c.l.b16 %v77
  %v427 = vunpack.c.l.b16 %v78
  %v428 = vunpack.c.l.b16 %v79
  %v429 = vunpack.c.l.b16 %v80
  %v430 = vunpack.c.l.b16 %v81
  %v431 = vunpack.c.l.b16 %v82
  %v432 = vunpack.c.l.b16 %v83
  %v433 = vunpack.c.l.b16 %v84
  %v434 = vunpack.c.l.b16 %v85
  %v435 = vunpack.c.l.b16 %v86
  %v436 = vunpack.c.l.b16 %v87
  %v437 = vunpack.c.l.b16 %v88
  %v438 = vunpack.c.l.b16 %v89
  %v439 = vunpack.c.l.b16 %v90
  %v440 = vunpack.c.l.b16 %v91
  %v441 = vunpack.c.l.b16 %v92
  %v442 = vunpack.c.l.b16 %v93
  %v443 = vunpack.c.l.b16 %v94
  %v444 = vunpack.c.l.b16 %v95
  %v445 = vunpack.c.l.b16 %v96
  %v446 = vunpack.c.l.b16 %v97
  %v447 = vunpack.c.l.b16 %v98
  %v448 = vunpack.c.l.b16 %v99
  %v449 = vunpack.c.l.b16 %v100
  %v450 = vunpack.c.l.b16 %v101
  %v451 = vunpack.c.l.b16 %v102
  %v452 = vunpack.c.l.b16 %v103
  %v453 = vunpack.c.l.b16 %v104
  %v454 = vunpack.c.l.b16 %v105
  %v455 = vunpack.c.l.b16 %v106
  %v456 = vunpack.c.l.b16 %v107
  %v457 = vunpack.c.l.b16 %v108
  %v458 = vunpack.c.l.b16 %v109
  %v459 = vunpack.c.l.b16 %v110
  %v460 = vunpack.c.l.b16 %v111
  %v461 = vunpack.c.l.b16 %v112
  %v462 = vunpack.c.l.b16 %v113
  %v463 = vunpack.c.l.b16 %v114
  %v464 = vunpack.c.l.b16 %v115
  %v465 = vunpack.c.l.b16 %v116
  %v466 = vunpack.c.l.b16 %v117
  %v467 = vunpack.c.l.b16 %v118
  %v468 = vunpack.c.l.b16 %v119
  %v469 = vunpack.c.l.b16 %v120
  %v470 = vpack.c.b16 %v407, %v406
  %v471 = vpack.c.b16 %v409, %v408
  %v472 = vpack.c.b16 %v411, %v410
  %v473 = vpack.c.b16 %v413, %v412
  %v474 = vpack.c.b16 %v415, %v414
  %v475 = vpack.c.b16 %v417, %v416
  %v476 = vpack.c.b16 %v419, %v418
  %v477 = vpack.c.b16 %v421, %v420
  %v478 = vpack.c.b16 %v423, %v422
  %v479 = vpack.c.b16 %v425, %v424
  %v480 = vpack.c.b16 %v427, %v426
  %v481 = vpack.c.b16 %v429, %v428
  %v482 = vpack.c.b16 %v431, %v430
  %v483 = vpack.c.b16 %v433, %v432
  %v484 = vpack.c.b16 %v435, %v434
  %v485 = vpack.c.b16 %v437, %v436
  %v486 = vpack.c.b16 %v439, %v438
  %v487 = vpack.c.b16 %v441, %v440
  %v488 = vpack.c.b16 %v443, %v442
  %v489 = vpack.c.b16 %v445, %v444
  %v490 = vpack.c.b16 %v447, %v446
  %v491 = vpack.c.b16 %v449, %v448
  %v492 = vpack.c.b16 %v451, %v450
  %v493 = vpack.c.b16 %v453, %v452
  %v494 = vpack.c.b16 %v455, %v454
  %v495 = vpack.c.b16 %v457, %v456
  %v496 = vpack.c.b16 %v459, %v458
  %v497 = vpack.c.b16 %v461, %v460
  %v498 = vpack.c.b16 %v463, %v462
  %v499 = vpack.c.b16 %v465, %v464
  %v500 = vpack.c.b16 %v467, %v466
  %v501 = vpack.c.b16 %v469, %v468
  %534 = vmatprep.subr.bf16.mxu0 0
  %535 = vmatpush1.bf16.msra.mxu0 %v470
  %536 = vmatprep.subr.bf16.mxu0 0
  %537 = vmatpush1.bf16.msra.mxu0 %v471
  %538 = vmatprep.subr.bf16.mxu0 0
  %539 = vmatpush1.bf16.msra.mxu0 %v472
  %540 = vmatprep.subr.bf16.mxu0 0
  %541 = vmatpush1.bf16.msra.mxu0 %v473
  %542 = vmatprep.subr.bf16.mxu0 0
  %543 = vmatpush1.bf16.msra.mxu0 %v474
  %544 = vmatprep.subr.bf16.mxu0 0
  %545 = vmatpush1.bf16.msra.mxu0 %v475
  %546 = vmatprep.subr.bf16.mxu0 0
  %547 = vmatpush1.bf16.msra.mxu0 %v476
  %548 = vmatprep.subr.bf16.mxu0 0
  %549 = vmatpush1.bf16.msra.mxu0 %v477
  %550 = vmatprep.subr.bf16.mxu0 0
  %551 = vmatpush1.bf16.msra.mxu0 %v478
  %552 = vmatprep.subr.bf16.mxu0 0
  %553 = vmatpush1.bf16.msra.mxu0 %v479
  %554 = vmatprep.subr.bf16.mxu0 0
  %555 = vmatpush1.bf16.msra.mxu0 %v480
  %556 = vmatprep.subr.bf16.mxu0 0
  %557 = vmatpush1.bf16.msra.mxu0 %v481
  %558 = vmatprep.subr.bf16.mxu0 0
  %559 = vmatpush1.bf16.msra.mxu0 %v482
  %560 = vmatprep.subr.bf16.mxu0 0
  %561 = vmatpush1.bf16.msra.mxu0 %v483
  %562 = vmatprep.subr.bf16.mxu0 0
  %563 = vmatpush1.bf16.msra.mxu0 %v484
  %564 = vmatprep.subr.bf16.mxu0 0
  %565 = vmatpush1.bf16.msra.mxu0 %v485
  %566 = vmatprep.mubr.bf16.mxu0 %v255
  %567 = vmatmul.mubr.bf16.gmra.mrb[0].mxu0 %v254
  %v568 = vpop.f32.mrb[0].mxu0
  %v569 = vadd.f32 %v126, %v568
  %v570 = vpop.f32.mrb[0].mxu0
  %v571 = vpop.f32.mrb[0].mxu0
  %v572 = vadd.f32 %v126, %v571
  %v573 = vpop.f32.mrb[0].mxu0
  %574 = vmatprep.mubr.bf16.mxu0 %v259
  %575 = vmatmul.mubr.bf16.gmra.mrb[0].mxu0 %v258
  %v576 = vpop.f32.mrb[0].mxu0
  %v577 = vadd.f32 %v126, %v576
  %v578 = vpop.f32.mrb[0].mxu0
  %v579 = vpop.f32.mrb[0].mxu0
  %v580 = vadd.f32 %v126, %v579
  %v581 = vpop.f32.mrb[0].mxu0
  %582 = vmatprep.mubr.bf16.mxu0 %v263
  %583 = vmatmul.mubr.bf16.gmra.mrb[0].mxu0 %v262
  %v584 = vpop.f32.mrb[0].mxu0
  %v585 = vadd.f32 %v126, %v584
  %v586 = vpop.f32.mrb[0].mxu0
  %v587 = vpop.f32.mrb[0].mxu0
  %v588 = vadd.f32 %v126, %v587
  %v589 = vpop.f32.mrb[0].mxu0
  %590 = vmatprep.mubr.bf16.mxu0 %v267
  %591 = vmatmul.mubr.bf16.gmra.mrb[0].mxu0 %v266
  %v592 = vpop.f32.mrb[0].mxu0
  %v593 = vadd.f32 %v126, %v592
  %v594 = vpop.f32.mrb[0].mxu0
  %v595 = vpop.f32.mrb[0].mxu0
  %v596 = vadd.f32 %v126, %v595
  %v597 = vpop.f32.mrb[0].mxu0
  %598 = vmatprep.mubr.bf16.mxu0 %v271
  %599 = vmatmul.mubr.bf16.gmra.mrb[0].mxu0 %v270
  %v600 = vpop.f32.mrb[0].mxu0
  %v601 = vadd.f32 %v126, %v600
  %v602 = vpop.f32.mrb[0].mxu0
  %v603 = vpop.f32.mrb[0].mxu0
  %v604 = vadd.f32 %v126, %v603
  %v605 = vpop.f32.mrb[0].mxu0
  %606 = vmatprep.mubr.bf16.mxu0 %v275
  %607 = vmatmul.mubr.bf16.gmra.mrb[0].mxu0 %v274
  %v608 = vpop.f32.mrb[0].mxu0
  %v609 = vadd.f32 %v126, %v608
  %v610 = vpop.f32.mrb[0].mxu0
  %v611 = vpop.f32.mrb[0].mxu0
  %v612 = vadd.f32 %v126, %v611
  %v613 = vpop.f32.mrb[0].mxu0
  %614 = vmatprep.mubr.bf16.mxu0 %v279
  %615 = vmatmul.mubr.bf16.gmra.mrb[0].mxu0 %v278
  %v616 = vpop.f32.mrb[0].mxu0
  %v617 = vadd.f32 %v126, %v616
  %v618 = vpop.f32.mrb[0].mxu0
  %v619 = vpop.f32.mrb[0].mxu0
  %v620 = vadd.f32 %v126, %v619
  %v621 = vpop.f32.mrb[0].mxu0
  %622 = vmatprep.mubr.bf16.mxu0 %v283
  %623 = vmatmul.mubr.bf16.gmra.mrb[0].mxu0 %v282
  %v624 = vpop.f32.mrb[0].mxu0
  %v625 = vadd.f32 %v126, %v624
  %v626 = vpop.f32.mrb[0].mxu0
  %v627 = vpop.f32.mrb[0].mxu0
  %v628 = vadd.f32 %v126, %v627
  %v629 = vpop.f32.mrb[0].mxu0
  %630 = vmatprep.mubr.bf16.mxu0 %v287
  %631 = vmatmul.mubr.bf16.gmra.mrb[0].mxu0 %v286
  %v632 = vpop.f32.mrb[0].mxu0
  %v633 = vadd.f32 %v126, %v632
  %v634 = vpop.f32.mrb[0].mxu0
  %v635 = vpop.f32.mrb[0].mxu0
  %v636 = vadd.f32 %v126, %v635
  %v637 = vpop.f32.mrb[0].mxu0
  %638 = vmatprep.mubr.bf16.mxu0 %v291
  %639 = vmatmul.mubr.bf16.gmra.mrb[0].mxu0 %v290
  %v640 = vpop.f32.mrb[0].mxu0
  %v641 = vadd.f32 %v126, %v640
  %v642 = vpop.f32.mrb[0].mxu0
  %v643 = vpop.f32.mrb[0].mxu0
  %v644 = vadd.f32 %v126, %v643
  %v645 = vpop.f32.mrb[0].mxu0
  %646 = vmatprep.mubr.bf16.mxu0 %v295
  %647 = vmatmul.mubr.bf16.gmra.mrb[0].mxu0 %v294
  %v648 = vpop.f32.mrb[0].mxu0
  %v649 = vadd.f32 %v126, %v648
  %v650 = vpop.f32.mrb[0].mxu0
  %v651 = vpop.f32.mrb[0].mxu0
  %v652 = vpop.f32.mrb[0].mxu0
  %653 = vdwg.mxu0
  %654 = vmatprep.subr.bf16.mxu0 0
  %655 = vmatpush1.bf16.msra.mxu0 %v486
  %656 = vmatprep.subr.bf16.mxu0 0
  %657 = vmatpush1.bf16.msra.mxu0 %v487
  %658 = vmatprep.subr.bf16.mxu0 0
  %659 = vmatpush1.bf16.msra.mxu0 %v488
  %660 = vmatprep.subr.bf16.mxu0 0
  %661 = vmatpush1.bf16.msra.mxu0 %v489
  %662 = vmatprep.subr.bf16.mxu0 0
  %663 = vmatpush1.bf16.msra.mxu0 %v490
  %664 = vmatprep.subr.bf16.mxu0 0
  %665 = vmatpush1.bf16.msra.mxu0 %v491
  %666 = vmatprep.subr.bf16.mxu0 0
  %667 = vmatpush1.bf16.msra.mxu0 %v492
  %668 = vmatprep.subr.bf16.mxu0 0
  %669 = vmatpush1.bf16.msra.mxu0 %v493
  %670 = vmatprep.subr.bf16.mxu0 0
  %671 = vmatpush1.bf16.msra.mxu0 %v494
  %672 = vmatprep.subr.bf16.mxu0 0
  %673 = vmatpush1.bf16.msra.mxu0 %v495
  %674 = vmatprep.subr.bf16.mxu0 0
  %675 = vmatpush1.bf16.msra.mxu0 %v496
  %676 = vmatprep.subr.bf16.mxu0 0
  %677 = vmatpush1.bf16.msra.mxu0 %v497
  %678 = vmatprep.subr.bf16.mxu0 0
  %679 = vmatpush1.bf16.msra.mxu0 %v498
  %680 = vmatprep.subr.bf16.mxu0 0
  %681 = vmatpush1.bf16.msra.mxu0 %v499
  %682 = vmatprep.subr.bf16.mxu0 0
  %683 = vmatpush1.bf16.msra.mxu0 %v500
  %684 = vmatprep.subr.bf16.mxu0 0
  %685 = vmatpush1.bf16.msra.mxu0 %v501
  %686 = vmatprep.mubr.bf16.mxu0 %v257
  %687 = vmatmul.mubr.bf16.gmra.mrb[0].mxu0 %v256
  %v688 = vpop.f32.mrb[0].mxu0
  %v689 = vadd.f32 %v569, %v688
  %v690 = vpop.f32.mrb[0].mxu0
  %v691 = vpop.f32.mrb[0].mxu0
  %v692 = vadd.f32 %v572, %v691
  %v693 = vpop.f32.mrb[0].mxu0
  %694 = vmatprep.mubr.bf16.mxu0 %v261
  %695 = vmatmul.mubr.bf16.gmra.mrb[0].mxu0 %v260
  %v696 = vpop.f32.mrb[0].mxu0
  %v697 = vadd.f32 %v577, %v696
  %v698 = vpop.f32.mrb[0].mxu0
  %v699 = vpop.f32.mrb[0].mxu0
  %v700 = vadd.f32 %v580, %v699
  %v701 = vpop.f32.mrb[0].mxu0
  %702 = vmatprep.mubr.bf16.mxu0 %v265
  %703 = vmatmul.mubr.bf16.gmra.mrb[0].mxu0 %v264
  %v704 = vpop.f32.mrb[0].mxu0
  %v705 = vadd.f32 %v585, %v704
  %v706 = vpop.f32.mrb[0].mxu0
  %v707 = vpop.f32.mrb[0].mxu0
  %v708 = vadd.f32 %v588, %v707
  %v709 = vpop.f32.mrb[0].mxu0
  %710 = vmatprep.mubr.bf16.mxu0 %v269
  %711 = vmatmul.mubr.bf16.gmra.mrb[0].mxu0 %v268
  %v712 = vpop.f32.mrb[0].mxu0
  %v713 = vadd.f32 %v593, %v712
  %v714 = vpop.f32.mrb[0].mxu0
  %v715 = vpop.f32.mrb[0].mxu0
  %v716 = vadd.f32 %v596, %v715
  %v717 = vpop.f32.mrb[0].mxu0
  %718 = vmatprep.mubr.bf16.mxu0 %v273
  %719 = vmatmul.mubr.bf16.gmra.mrb[0].mxu0 %v272
  %v720 = vpop.f32.mrb[0].mxu0
  %v721 = vadd.f32 %v601, %v720
  %v722 = vpop.f32.mrb[0].mxu0
  %v723 = vpop.f32.mrb[0].mxu0
  %v724 = vadd.f32 %v604, %v723
  %v725 = vpop.f32.mrb[0].mxu0
  %726 = vmatprep.mubr.bf16.mxu0 %v277
  %727 = vmatmul.mubr.bf16.gmra.mrb[0].mxu0 %v276
  %v728 = vpop.f32.mrb[0].mxu0
  %v729 = vadd.f32 %v609, %v728
  %v730 = vpop.f32.mrb[0].mxu0
  %v731 = vpop.f32.mrb[0].mxu0
  %v732 = vadd.f32 %v612, %v731
  %v733 = vpop.f32.mrb[0].mxu0
  %734 = vmatprep.mubr.bf16.mxu0 %v281
  %735 = vmatmul.mubr.bf16.gmra.mrb[0].mxu0 %v280
  %v736 = vpop.f32.mrb[0].mxu0
  %v737 = vadd.f32 %v617, %v736
  %v738 = vpop.f32.mrb[0].mxu0
  %v739 = vpop.f32.mrb[0].mxu0
  %v740 = vadd.f32 %v620, %v739
  %v741 = vpop.f32.mrb[0].mxu0
  %742 = vmatprep.mubr.bf16.mxu0 %v285
  %743 = vmatmul.mubr.bf16.gmra.mrb[0].mxu0 %v284
  %v744 = vpop.f32.mrb[0].mxu0
  %v745 = vadd.f32 %v625, %v744
  %v746 = vpop.f32.mrb[0].mxu0
  %v747 = vpop.f32.mrb[0].mxu0
  %v748 = vadd.f32 %v628, %v747
  %v749 = vpop.f32.mrb[0].mxu0
  %750 = vmatprep.mubr.bf16.mxu0 %v289
  %751 = vmatmul.mubr.bf16.gmra.mrb[0].mxu0 %v288
  %v752 = vpop.f32.mrb[0].mxu0
  %v753 = vadd.f32 %v633, %v752
  %v754 = vpop.f32.mrb[0].mxu0
  %v755 = vpop.f32.mrb[0].mxu0
  %v756 = vadd.f32 %v636, %v755
  %v757 = vpop.f32.mrb[0].mxu0
  %758 = vmatprep.mubr.bf16.mxu0 %v293
  %759 = vmatmul.mubr.bf16.gmra.mrb[0].mxu0 %v292
  %v760 = vpop.f32.mrb[0].mxu0
  %v761 = vadd.f32 %v641, %v760
  %v762 = vpop.f32.mrb[0].mxu0
  %v763 = vpop.f32.mrb[0].mxu0
  %v764 = vadd.f32 %v644, %v763
  %v765 = vpop.f32.mrb[0].mxu0
  %766 = vmatprep.mubr.bf16.mxu0 %v297
  %767 = vmatmul.mubr.bf16.gmra.mrb[0].mxu0 %v296
  %v768 = vpop.f32.mrb[0].mxu0
  %v769 = vadd.f32 %v649, %v768
  %v770 = vpop.f32.mrb[0].mxu0
  %v771 = vpop.f32.mrb[0].mxu0
  %v772 = vpop.f32.mrb[0].mxu0
  %773 = vdwg.mxu0
  %v774 = vmax.f32 %v689, 0.0
  %v775 = vmax.f32 %v692, 0.0
  %v776 = vmax.f32 %v697, 0.0
  %v777 = vmax.f32 %v700, 0.0
  %v778 = vmax.f32 %v705, 0.0
  %v779 = vmax.f32 %v708, 0.0
  %v780 = vmax.f32 %v713, 0.0
  %v781 = vmax.f32 %v716, 0.0
  %v782 = vmax.f32 %v721, 0.0
  %v783 = vmax.f32 %v724, 0.0
  %v784 = vmax.f32 %v729, 0.0
  %v785 = vmax.f32 %v732, 0.0
  %v786 = vmax.f32 %v737, 0.0
  %v787 = vmax.f32 %v740, 0.0
  %v788 = vmax.f32 %v745, 0.0
  %v789 = vmax.f32 %v748, 0.0
  %v790 = vmax.f32 %v753, 0.0
  %v791 = vmax.f32 %v756, 0.0
  %v792 = vmax.f32 %v761, 0.0
  %v793 = vmax.f32 %v764, 0.0
  %v794 = vmax.f32 %v769, 0.0
  %v795 = vpack.c.bf16 %v775, %v774
  %v796 = vpack.c.bf16 %v777, %v776
  %v797 = vpack.c.bf16 %v779, %v778
  %v798 = vpack.c.bf16 %v781, %v780
  %v799 = vpack.c.bf16 %v783, %v782
  %v800 = vpack.c.bf16 %v785, %v784
  %v801 = vpack.c.bf16 %v787, %v786
  %v802 = vpack.c.bf16 %v789, %v788
  %v803 = vpack.c.bf16 %v791, %v790
  %v804 = vpack.c.bf16 %v793, %v792
  %v805 = vpack.c.bf16 %v794, %v794
  %v817 = vunpack.c.l.b16 %v795
  %v818 = vunpack.c.h.b16 %v795
  %v819 = vunpack.c.l.b16 %v796
  %v820 = vunpack.c.h.b16 %v796
  %v821 = vunpack.c.l.b16 %v797
  %v822 = vunpack.c.h.b16 %v797
  %v823 = vunpack.c.l.b16 %v798
  %v824 = vunpack.c.h.b16 %v798
  %v825 = vunpack.c.l.b16 %v799
  %v826 = vunpack.c.h.b16 %v799
  %v827 = vunpack.c.l.b16 %v800
  %v828 = vunpack.c.h.b16 %v800
  %v829 = vunpack.c.l.b16 %v801
  %v830 = vunpack.c.h.b16 %v801
  %v831 = vunpack.c.l.b16 %v802
  %v832 = vunpack.c.h.b16 %v802
  %v833 = vunpack.c.l.b16 %v803
  %v834 = vunpack.c.h.b16 %v803
  %v835 = vunpack.c.l.b16 %v804
  %v836 = vunpack.c.h.b16 %v804
  %v837 = vunpack.c.l.b16 %v805
  %v838 = vpack.c.b16 %v817, %v817
  %v839 = vpack.c.b16 %v818, %v818
  %v840 = vpack.c.b16 %v819, %v819
  %v841 = vpack.c.b16 %v820, %v820
  %v842 = vpack.c.b16 %v821, %v821
  %v843 = vpack.c.b16 %v822, %v822
  %v844 = vpack.c.b16 %v823, %v823
  %v845 = vpack.c.b16 %v824, %v824
  %v846 = vpack.c.b16 %v825, %v825
  %v847 = vpack.c.b16 %v826, %v826
  %v848 = vpack.c.b16 %v827, %v827
  %v849 = vpack.c.b16 %v828, %v828
  %v850 = vpack.c.b16 %v829, %v829
  %v851 = vpack.c.b16 %v830, %v830
  %v852 = vpack.c.b16 %v831, %v831
  %v853 = vpack.c.b16 %v832, %v832
  %v854 = vpack.c.b16 %v833, %v833
  %v855 = vpack.c.b16 %v834, %v834
  %v856 = vpack.c.b16 %v835, %v835
  %v857 = vpack.c.b16 %v836, %v836
  %v858 = vpack.c.b16 %v837, %v837
  %vm880 = vcmask 519168
  %881 = vst.msk [vmem:[%s3] sm:$0xf] %vm880, %v838
  %882 = vst.msk [vmem:[%s3 + $0x4] sm:$0xf] %vm880, %v839
  %883 = vst.msk [vmem:[%s3 + $0x8] sm:$0xf] %vm880, %v840
  %884 = vst.msk [vmem:[%s3 + $0xc] sm:$0xf] %vm880, %v841
  %885 = vst.msk [vmem:[%s3 + $0x10] sm:$0xf] %vm880, %v842
  %886 = vst.msk [vmem:[%s3 + $0x14] sm:$0xf] %vm880, %v843
  %887 = vst.msk [vmem:[%s3 + $0x18] sm:$0xf] %vm880, %v844
  %888 = vst.msk [vmem:[%s3 + $0x1c] sm:$0xf] %vm880, %v845
  %889 = vst.msk [vmem:[%s3 + $0x20] sm:$0xf] %vm880, %v846
  %890 = vst.msk [vmem:[%s3 + $0x24] sm:$0xf] %vm880, %v847
  %891 = vst.msk [vmem:[%s3 + $0x28] sm:$0xf] %vm880, %v848
  %892 = vst.msk [vmem:[%s3 + $0x2c] sm:$0xf] %vm880, %v849
  %893 = vst.msk [vmem:[%s3 + $0x30] sm:$0xf] %vm880, %v850
  %894 = vst.msk [vmem:[%s3 + $0x34] sm:$0xf] %vm880, %v851
  %895 = vst.msk [vmem:[%s3 + $0x38] sm:$0xf] %vm880, %v852
  %896 = vst.msk [vmem:[%s3 + $0x3c] sm:$0xf] %vm880, %v853
  %897 = vst.msk [vmem:[%s3 + $0x40] sm:$0xf] %vm880, %v854
  %898 = vst.msk [vmem:[%s3 + $0x44] sm:$0xf] %vm880, %v855
  %899 = vst.msk [vmem:[%s3 + $0x48] sm:$0xf] %vm880, %v856
  %900 = vst.msk [vmem:[%s3 + $0x4c] sm:$0xf] %vm880, %v857
  %vm901 = vcmask 516096
  %902 = vst.msk [vmem:[%s3 + $0x50] sm:$0x1] %vm901, %v858
  // Predicated region
  $region14: #{cnn_policy_forward.5} parent=0 // pred_check
    _
  $region15: #{cnn_policy_forward.5} parent=0 // pred_check_branch
    %904 = sbr.rel (0) target = $region17
  $region16: #{cnn_policy_forward.5} parent=0 // pred_region
    _
  $region17: #{cnn_policy_forward.5} parent=0 // pred_fallthru
    _
  // Predicated region
  $region18: #{cnn_policy_forward.5} parent=0 // pred_check
    _
  $region19: #{cnn_policy_forward.5} parent=0 // pred_check_branch
    %906 = sbr.rel (0) target = $region21
  $region20: #{cnn_policy_forward.5} parent=0 // pred_region
    _
  $region21: #{cnn_policy_forward.5} parent=0 // pred_fallthru
    _

// kernel: cnn_policy_forward.6
$region0: #{cnn_policy_forward.6}
  #allocation0 [shape = 'u32[]', space=smem, size = 0x4, offset = 0x4, fixed_abs, tag = 'smem constant byte address 0x4 - core index']
  #allocation1 [shape = 'u32[144,128]{1,0:T(1,128)}', space=vmem, size = 0x12000, scoped, tag = 'internal scratch']
  %s0 = inlined_call_operand.vmem [shape: bf16[98,576], index: 0, kind: input, shape index: {}]
  %s1 = inlined_call_operand.vmem [shape: bf16[576,32], index: 1, kind: input, shape index: {}]
  %s2 = inlined_call_operand.vmem [shape: f32[1,32], index: 2, kind: input, shape index: {}]
  %s3 = inlined_call_operand.vmem [shape: bf16[98,32], index: 3, kind: output, shape index: {}]
  %s4 = sld [smem:[#allocation0]]
  $region22: #{cnn_policy_forward.6} parent=0
    _
  %s6 = ssub.s32 1, %s4
  %s7 = scalar_select 0, %s6, %s4
  // Predicated region
  $region2: #{cnn_policy_forward.6} parent=0 // pred_check
    _
  $region3: #{cnn_policy_forward.6} parent=0 // pred_check_branch
    %9 = sbr.rel (0) target = $region5
  $region4: #{cnn_policy_forward.6} parent=0 // pred_region
    _
  $region5: #{cnn_policy_forward.6} parent=0 // pred_fallthru
    _
  // Predicated region
  $region6: #{cnn_policy_forward.6} parent=0 // pred_check
    _
  $region7: #{cnn_policy_forward.6} parent=0 // pred_check_branch
    %11 = sbr.rel (0) target = $region9
  $region8: #{cnn_policy_forward.6} parent=0 // pred_region
    _
  $region9: #{cnn_policy_forward.6} parent=0 // pred_fallthru
    _
  // Predicated region
  $region10: #{cnn_policy_forward.6} parent=0 // pred_check
    _
  $region11: #{cnn_policy_forward.6} parent=0 // pred_check_branch
    %13 = sbr.rel (0) target = $region13
  $region12: #{cnn_policy_forward.6} parent=0 // pred_region
    _
  $region13: #{cnn_policy_forward.6} parent=0 // pred_fallthru
    _
  %v15 = vld [vmem:[%s0] sm:$0xff]
  %v16 = vld [vmem:[%s0 + $0x8] sm:$0xff]
  %v17 = vld [vmem:[%s0 + $0x10] sm:$0xf]
  %v18 = vld [vmem:[%s0 + $0x14] sm:$0xff]
  %v19 = vld [vmem:[%s0 + $0x1c] sm:$0xff]
  %v20 = vld [vmem:[%s0 + $0x24] sm:$0xf]
  %v21 = vld [vmem:[%s0 + $0x28] sm:$0xff]
  %v22 = vld [vmem:[%s0 + $0x30] sm:$0xff]
  %v23 = vld [vmem:[%s0 + $0x38] sm:$0xf]
  %v24 = vld [vmem:[%s0 + $0x3c] sm:$0xff]
  %v25 = vld [vmem:[%s0 + $0x44] sm:$0xff]
  %v26 = vld [vmem:[%s0 + $0x4c] sm:$0xf]
  %v27 = vld [vmem:[%s0 + $0x50] sm:$0xff]
  %v28 = vld [vmem:[%s0 + $0x58] sm:$0xff]
  %v29 = vld [vmem:[%s0 + $0x60] sm:$0xf]
  %v30 = vld [vmem:[%s0 + $0x64] sm:$0xff]
  %v31 = vld [vmem:[%s0 + $0x6c] sm:$0xff]
  %v32 = vld [vmem:[%s0 + $0x74] sm:$0xf]
  %v33 = vld [vmem:[%s0 + $0x78] sm:$0xff]
  %v34 = vld [vmem:[%s0 + $0x80] sm:$0xff]
  %v35 = vld [vmem:[%s0 + $0x88] sm:$0xf]
  %v36 = vld [vmem:[%s0 + $0x8c] sm:$0xff]
  %v37 = vld [vmem:[%s0 + $0x94] sm:$0xff]
  %v38 = vld [vmem:[%s0 + $0x9c] sm:$0xf]
  %v39 = vld [vmem:[%s0 + $0xa0] sm:$0xff]
  %v40 = vld [vmem:[%s0 + $0xa8] sm:$0xff]
  %v41 = vld [vmem:[%s0 + $0xb0] sm:$0xf]
  %v42 = vld [vmem:[%s0 + $0xb4] sm:$0xff]
  %v43 = vld [vmem:[%s0 + $0xbc] sm:$0xff]
  %v44 = vld [vmem:[%s0 + $0xc4] sm:$0xf]
  %v45 = vld [vmem:[%s0 + $0xc8] sm:$0xff]
  %v46 = vld [vmem:[%s0 + $0xd0] sm:$0xff]
  %v47 = vld [vmem:[%s0 + $0xd8] sm:$0xf]
  %v48 = vld [vmem:[%s0 + $0xdc] sm:$0xff]
  %v49 = vld [vmem:[%s0 + $0xe4] sm:$0xff]
  %v50 = vld [vmem:[%s0 + $0xec] sm:$0xf]
  %v51 = vld [vmem:[%s0 + $0xf0] sm:$0x11]
  %v52 = vld [vmem:[%s0 + $0xf8] sm:$0x11]
  %v53 = vld [vmem:[%s0 + $0x100] sm:$0x1]
  %v54 = vld [vmem:[%s1] sm:$0xf]
  %v55 = vld [vmem:[%s1 + $0x4] sm:$0xf]
  %v56 = vld [vmem:[%s1 + $0x8] sm:$0xf]
  %v57 = vld [vmem:[%s1 + $0xc] sm:$0xf]
  %v58 = vld [vmem:[%s1 + $0x10] sm:$0xf]
  %v59 = vld [vmem:[%s1 + $0x14] sm:$0xf]
  %v60 = vld [vmem:[%s1 + $0x18] sm:$0xf]
  %v61 = vld [vmem:[%s1 + $0x1c] sm:$0xf]
  %v62 = vld [vmem:[%s1 + $0x20] sm:$0xf]
  %v63 = vld [vmem:[%s1 + $0x24] sm:$0xf]
  %v64 = vld [vmem:[%s1 + $0x28] sm:$0xf]
  %v65 = vld [vmem:[%s1 + $0x2c] sm:$0xf]
  %v66 = vld [vmem:[%s1 + $0x30] sm:$0xf]
  %v67 = vld [vmem:[%s1 + $0x34] sm:$0xf]
  %v68 = vld [vmem:[%s1 + $0x38] sm:$0xf]
  %v69 = vld [vmem:[%s1 + $0x3c] sm:$0xf]
  %v70 = vld [vmem:[%s1 + $0x40] sm:$0xf]
  %v71 = vld [vmem:[%s1 + $0x44] sm:$0xf]
  %v72 = vld [vmem:[%s1 + $0x48] sm:$0xf]
  %v73 = vld [vmem:[%s1 + $0x4c] sm:$0xf]
  %v74 = vld [vmem:[%s1 + $0x50] sm:$0xf]
  %v75 = vld [vmem:[%s1 + $0x54] sm:$0xf]
  %v76 = vld [vmem:[%s1 + $0x58] sm:$0xf]
  %v77 = vld [vmem:[%s1 + $0x5c] sm:$0xf]
  %v78 = vld [vmem:[%s1 + $0x60] sm:$0xf]
  %v79 = vld [vmem:[%s1 + $0x64] sm:$0xf]
  %v80 = vld [vmem:[%s1 + $0x68] sm:$0xf]
  %v81 = vld [vmem:[%s1 + $0x6c] sm:$0xf]
  %v82 = vld [vmem:[%s1 + $0x70] sm:$0xf]
  %v83 = vld [vmem:[%s1 + $0x74] sm:$0xf]
  %v84 = vld [vmem:[%s1 + $0x78] sm:$0xf]
  %v85 = vld [vmem:[%s1 + $0x7c] sm:$0xf]
  %v86 = vld [vmem:[%s1 + $0x80] sm:$0xf]
  %v87 = vld [vmem:[%s1 + $0x84] sm:$0xf]
  %v88 = vld [vmem:[%s1 + $0x88] sm:$0xf]
  %v89 = vld [vmem:[%s1 + $0x8c] sm:$0xf]
  %v90 = vld [vmem:[%s1 + $0x90] sm:$0xf]
  %v91 = vld [vmem:[%s1 + $0x94] sm:$0xf]
  %v92 = vld [vmem:[%s1 + $0x98] sm:$0xf]
  %v93 = vld [vmem:[%s1 + $0x9c] sm:$0xf]
  %v94 = vld [vmem:[%s1 + $0xa0] sm:$0xf]
  %v95 = vld [vmem:[%s1 + $0xa4] sm:$0xf]
  %v96 = vld [vmem:[%s1 + $0xa8] sm:$0xf]
  %v97 = vld [vmem:[%s1 + $0xac] sm:$0xf]
  %v98 = vld [vmem:[%s1 + $0xb0] sm:$0xf]
  %v99 = vld [vmem:[%s1 + $0xb4] sm:$0xf]
  %v100 = vld [vmem:[%s1 + $0xb8] sm:$0xf]
  %v101 = vld [vmem:[%s1 + $0xbc] sm:$0xf]
  %v102 = vld [vmem:[%s1 + $0xc0] sm:$0xf]
  %v103 = vld [vmem:[%s1 + $0xc4] sm:$0xf]
  %v104 = vld [vmem:[%s1 + $0xc8] sm:$0xf]
  %v105 = vld [vmem:[%s1 + $0xcc] sm:$0xf]
  %v106 = vld [vmem:[%s1 + $0xd0] sm:$0xf]
  %v107 = vld [vmem:[%s1 + $0xd4] sm:$0xf]
  %v108 = vld [vmem:[%s1 + $0xd8] sm:$0xf]
  %v109 = vld [vmem:[%s1 + $0xdc] sm:$0xf]
  %v110 = vld [vmem:[%s1 + $0xe0] sm:$0xf]
  %v111 = vld [vmem:[%s1 + $0xe4] sm:$0xf]
  %v112 = vld [vmem:[%s1 + $0xe8] sm:$0xf]
  %v113 = vld [vmem:[%s1 + $0xec] sm:$0xf]
  %v114 = vld [vmem:[%s1 + $0xf0] sm:$0xf]
  %v115 = vld [vmem:[%s1 + $0xf4] sm:$0xf]
  %v116 = vld [vmem:[%s1 + $0xf8] sm:$0xf]
  %v117 = vld [vmem:[%s1 + $0xfc] sm:$0xf]
  %v118 = vld [vmem:[%s1 + $0x100] sm:$0xf]
  %v119 = vld [vmem:[%s1 + $0x104] sm:$0xf]
  %v120 = vld [vmem:[%s1 + $0x108] sm:$0xf]
  %v121 = vld [vmem:[%s1 + $0x10c] sm:$0xf]
  %v122 = vld [vmem:[%s1 + $0x110] sm:$0xf]
  %v123 = vld [vmem:[%s1 + $0x114] sm:$0xf]
  %v124 = vld [vmem:[%s1 + $0x118] sm:$0xf]
  %v125 = vld [vmem:[%s1 + $0x11c] sm:$0xf]
  %v126 = vld [vmem:[%s2] sm:$0x1]
  %v128 = vlaneseq
  %v129 = vshrl.u32 %v128, 7
  %v130 = vsub.s32 0, %v129
  %v131 = vrot.slane %v126, %v130
  %v172 = vunpack.c.l.b16 %v15
  %v173 = vunpack.c.h.b16 %v15
  %v174 = vunpack.c.l.b16 %v16
  %v175 = vunpack.c.h.b16 %v16
  %v176 = vunpack.c.l.b16 %v17
  %v177 = vunpack.c.l.b16 %v18
  %v178 = vunpack.c.h.b16 %v18
  %v179 = vunpack.c.l.b16 %v19
  %v180 = vunpack.c.h.b16 %v19
  %v181 = vunpack.c.l.b16 %v20
  %v182 = vunpack.c.l.b16 %v21
  %v183 = vunpack.c.h.b16 %v21
  %v184 = vunpack.c.l.b16 %v22
  %v185 = vunpack.c.h.b16 %v22
  %v186 = vunpack.c.l.b16 %v23
  %v187 = vunpack.c.l.b16 %v24
  %v188 = vunpack.c.h.b16 %v24
  %v189 = vunpack.c.l.b16 %v25
  %v190 = vunpack.c.h.b16 %v25
  %v191 = vunpack.c.l.b16 %v26
  %v192 = vunpack.c.l.b16 %v27
  %v193 = vunpack.c.h.b16 %v27
  %v194 = vunpack.c.l.b16 %v28
  %v195 = vunpack.c.h.b16 %v28
  %v196 = vunpack.c.l.b16 %v29
  %v197 = vunpack.c.l.b16 %v30
  %v198 = vunpack.c.h.b16 %v30
  %v199 = vunpack.c.l.b16 %v31
  %v200 = vunpack.c.h.b16 %v31
  %v201 = vunpack.c.l.b16 %v32
  %v202 = vunpack.c.l.b16 %v33
  %v203 = vunpack.c.h.b16 %v33
  %v204 = vunpack.c.l.b16 %v34
  %v205 = vunpack.c.h.b16 %v34
  %v206 = vunpack.c.l.b16 %v35
  %v207 = vunpack.c.l.b16 %v36
  %v208 = vunpack.c.h.b16 %v36
  %v209 = vunpack.c.l.b16 %v37
  %v210 = vunpack.c.h.b16 %v37
  %v211 = vunpack.c.l.b16 %v38
  %v212 = vunpack.c.l.b16 %v39
  %v213 = vunpack.c.h.b16 %v39
  %v214 = vunpack.c.l.b16 %v40
  %v215 = vunpack.c.h.b16 %v40
  %v216 = vunpack.c.l.b16 %v41
  %v217 = vunpack.c.l.b16 %v42
  %v218 = vunpack.c.h.b16 %v42
  %v219 = vunpack.c.l.b16 %v43
  %v220 = vunpack.c.h.b16 %v43
  %v221 = vunpack.c.l.b16 %v44
  %v222 = vunpack.c.l.b16 %v45
  %v223 = vunpack.c.h.b16 %v45
  %v224 = vunpack.c.l.b16 %v46
  %v225 = vunpack.c.h.b16 %v46
  %v226 = vunpack.c.l.b16 %v47
  %v227 = vunpack.c.l.b16 %v48
  %v228 = vunpack.c.h.b16 %v48
  %v229 = vunpack.c.l.b16 %v49
  %v230 = vunpack.c.h.b16 %v49
  %v231 = vunpack.c.l.b16 %v50
  %v232 = vunpack.c.l.b16 %v51
  %v233 = vunpack.c.h.b16 %v51
  %v234 = vunpack.c.l.b16 %v52
  %v235 = vunpack.c.h.b16 %v52
  %v236 = vunpack.c.l.b16 %v53
  %v237 = vpack.c.b16 %v177, %v172
  %v238 = vpack.c.b16 %v178, %v173
  %v239 = vpack.c.b16 %v179, %v174
  %v240 = vpack.c.b16 %v180, %v175
  %v241 = vpack.c.b16 %v181, %v176
  %v242 = vpack.c.b16 %v187, %v182
  %v243 = vpack.c.b16 %v188, %v183
  %v244 = vpack.c.b16 %v189, %v184
  %v245 = vpack.c.b16 %v190, %v185
  %v246 = vpack.c.b16 %v191, %v186
  %v247 = vpack.c.b16 %v197, %v192
  %v248 = vpack.c.b16 %v198, %v193
  %v249 = vpack.c.b16 %v199, %v194
  %v250 = vpack.c.b16 %v200, %v195
  %v251 = vpack.c.b16 %v201, %v196
  %v252 = vpack.c.b16 %v207, %v202
  %v253 = vpack.c.b16 %v208, %v203
  %v254 = vpack.c.b16 %v209, %v204
  %v255 = vpack.c.b16 %v210, %v205
  %v256 = vpack.c.b16 %v211, %v206
  %v257 = vpack.c.b16 %v217, %v212
  %v258 = vpack.c.b16 %v218, %v213
  %v259 = vpack.c.b16 %v219, %v214
  %v260 = vpack.c.b16 %v220, %v215
  %v261 = vpack.c.b16 %v221, %v216
  %v262 = vpack.c.b16 %v227, %v222
  %v263 = vpack.c.b16 %v228, %v223
  %v264 = vpack.c.b16 %v229, %v224
  %v265 = vpack.c.b16 %v230, %v225
  %v266 = vpack.c.b16 %v231, %v226
  %v267 = vpack.c.b16 %v232, %v232
  %v268 = vpack.c.b16 %v233, %v233
  %v269 = vpack.c.b16 %v234, %v234
  %v270 = vpack.c.b16 %v235, %v235
  %v271 = vpack.c.b16 %v236, %v236
  %v372 = vunpack.c.l.b16 %v54
  %v373 = vunpack.c.l.b16 %v55
  %v374 = vunpack.c.l.b16 %v56
  %v375 = vunpack.c.l.b16 %v57
  %v376 = vunpack.c.l.b16 %v58
  %v377 = vunpack.c.l.b16 %v59
  %v378 = vunpack.c.l.b16 %v60
  %v379 = vunpack.c.l.b16 %v61
  %v380 = vunpack.c.l.b16 %v62
  %v381 = vunpack.c.l.b16 %v63
  %v382 = vunpack.c.l.b16 %v64
  %v383 = vunpack.c.l.b16 %v65
  %v384 = vunpack.c.l.b16 %v66
  %v385 = vunpack.c.l.b16 %v67
  %v386 = vunpack.c.l.b16 %v68
  %v387 = vunpack.c.l.b16 %v69
  %v388 = vunpack.c.l.b16 %v70
  %v389 = vunpack.c.l.b16 %v71
  %v390 = vunpack.c.l.b16 %v72
  %v391 = vunpack.c.l.b16 %v73
  %v392 = vunpack.c.l.b16 %v74
  %v393 = vunpack.c.l.b16 %v75
  %v394 = vunpack.c.l.b16 %v76
  %v395 = vunpack.c.l.b16 %v77
  %v396 = vunpack.c.l.b16 %v78
  %v397 = vunpack.c.l.b16 %v79
  %v398 = vunpack.c.l.b16 %v80
  %v399 = vunpack.c.l.b16 %v81
  %v400 = vunpack.c.l.b16 %v82
  %v401 = vunpack.c.l.b16 %v83
  %v402 = vunpack.c.l.b16 %v84
  %v403 = vunpack.c.l.b16 %v85
  %v404 = vunpack.c.l.b16 %v86
  %v405 = vunpack.c.l.b16 %v87
  %v406 = vunpack.c.l.b16 %v88
  %v407 = vunpack.c.l.b16 %v89
  %v408 = vunpack.c.l.b16 %v90
  %v409 = vunpack.c.l.b16 %v91
  %v410 = vunpack.c.l.b16 %v92
  %v411 = vunpack.c.l.b16 %v93
  %v412 = vunpack.c.l.b16 %v94
  %v413 = vunpack.c.l.b16 %v95
  %v414 = vunpack.c.l.b16 %v96
  %v415 = vunpack.c.l.b16 %v97
  %v416 = vunpack.c.l.b16 %v98
  %v417 = vunpack.c.l.b16 %v99
  %v418 = vunpack.c.l.b16 %v100
  %v419 = vunpack.c.l.b16 %v101
  %v420 = vunpack.c.l.b16 %v102
  %v421 = vunpack.c.l.b16 %v103
  %v422 = vunpack.c.l.b16 %v104
  %v423 = vunpack.c.l.b16 %v105
  %v424 = vunpack.c.l.b16 %v106
  %v425 = vunpack.c.l.b16 %v107
  %v426 = vunpack.c.l.b16 %v108
  %v427 = vunpack.c.l.b16 %v109
  %v428 = vunpack.c.l.b16 %v110
  %v429 = vunpack.c.l.b16 %v111
  %v430 = vunpack.c.l.b16 %v112
  %v431 = vunpack.c.l.b16 %v113
  %v432 = vunpack.c.l.b16 %v114
  %v433 = vunpack.c.l.b16 %v115
  %v434 = vunpack.c.l.b16 %v116
  %v435 = vunpack.c.l.b16 %v117
  %v436 = vunpack.c.l.b16 %v118
  %v437 = vunpack.c.l.b16 %v119
  %v438 = vunpack.c.l.b16 %v120
  %v439 = vunpack.c.l.b16 %v121
  %v440 = vunpack.c.l.b16 %v122
  %v441 = vunpack.c.l.b16 %v123
  %v442 = vunpack.c.l.b16 %v124
  %v443 = vunpack.c.l.b16 %v125
  %v444 = vpack.c.b16 %v373, %v372
  %v445 = vpack.c.b16 %v375, %v374
  %v446 = vpack.c.b16 %v377, %v376
  %v447 = vpack.c.b16 %v379, %v378
  %v448 = vpack.c.b16 %v381, %v380
  %v449 = vpack.c.b16 %v383, %v382
  %v450 = vpack.c.b16 %v385, %v384
  %v451 = vpack.c.b16 %v387, %v386
  %v452 = vpack.c.b16 %v389, %v388
  %v453 = vpack.c.b16 %v391, %v390
  %v454 = vpack.c.b16 %v393, %v392
  %v455 = vpack.c.b16 %v395, %v394
  %v456 = vpack.c.b16 %v397, %v396
  %v457 = vpack.c.b16 %v399, %v398
  %v458 = vpack.c.b16 %v401, %v400
  %v459 = vpack.c.b16 %v403, %v402
  %v460 = vpack.c.b16 %v405, %v404
  %v461 = vpack.c.b16 %v407, %v406
  %v462 = vpack.c.b16 %v409, %v408
  %v463 = vpack.c.b16 %v411, %v410
  %v464 = vpack.c.b16 %v413, %v412
  %v465 = vpack.c.b16 %v415, %v414
  %v466 = vpack.c.b16 %v417, %v416
  %v467 = vpack.c.b16 %v419, %v418
  %v468 = vpack.c.b16 %v421, %v420
  %v469 = vpack.c.b16 %v423, %v422
  %v470 = vpack.c.b16 %v425, %v424
  %v471 = vpack.c.b16 %v427, %v426
  %v472 = vpack.c.b16 %v429, %v428
  %v473 = vpack.c.b16 %v431, %v430
  %v474 = vpack.c.b16 %v433, %v432
  %v475 = vpack.c.b16 %v435, %v434
  %v476 = vpack.c.b16 %v437, %v436
  %v477 = vpack.c.b16 %v439, %v438
  %v478 = vpack.c.b16 %v441, %v440
  %v479 = vpack.c.b16 %v443, %v442
  %vm516 = vcmask 523264
  %v518 = vsel %vm516, %v241, 0
  %v521 = vsel %vm516, %v246, 0
  %v524 = vsel %vm516, %v251, 0
  %v527 = vsel %vm516, %v256, 0
  %v530 = vsel %vm516, %v261, 0
  %v533 = vsel %vm516, %v266, 0
  %v536 = vsel %vm516, %v271, 0
  %538 = vmatprep.subr.bf16.mxu0 0
  %539 = vmatpush1.bf16.msra.mxu0 %v444
  %540 = vmatprep.subr.bf16.mxu0 0
  %541 = vmatpush1.bf16.msra.mxu0 %v445
  %542 = vmatprep.subr.bf16.mxu0 0
  %543 = vmatpush1.bf16.msra.mxu0 %v446
  %544 = vmatprep.subr.bf16.mxu0 0
  %545 = vmatpush1.bf16.msra.mxu0 %v447
  %546 = vmatprep.subr.bf16.mxu0 0
  %547 = vmatpush1.bf16.msra.mxu0 %v448
  %548 = vmatprep.subr.bf16.mxu0 0
  %549 = vmatpush1.bf16.msra.mxu0 %v449
  %550 = vmatprep.subr.bf16.mxu0 0
  %551 = vmatpush1.bf16.msra.mxu0 %v450
  %552 = vmatprep.subr.bf16.mxu0 0
  %553 = vmatpush1.bf16.msra.mxu0 %v451
  %554 = vmatprep.subr.bf16.mxu0 0
  %555 = vmatpush1.bf16.msra.mxu0 %v452
  %556 = vmatprep.subr.bf16.mxu0 0
  %557 = vmatpush1.bf16.msra.mxu0 %v453
  %558 = vmatprep.subr.bf16.mxu0 0
  %559 = vmatpush1.bf16.msra.mxu0 %v454
  %560 = vmatprep.subr.bf16.mxu0 0
  %561 = vmatpush1.bf16.msra.mxu0 %v455
  %562 = vmatprep.subr.bf16.mxu0 0
  %563 = vmatpush1.bf16.msra.mxu0 %v456
  %564 = vmatprep.subr.bf16.mxu0 0
  %565 = vmatpush1.bf16.msra.mxu0 %v457
  %566 = vmatprep.subr.bf16.mxu0 0
  %567 = vmatpush1.bf16.msra.mxu0 %v458
  %568 = vmatprep.subr.bf16.mxu0 0
  %569 = vmatpush1.bf16.msra.mxu0 %v459
  %570 = vmatprep.mubr.bf16.mxu0 %v238
  %571 = vmatmul.mubr.bf16.gmra.mrb[0].mxu0 %v237
  %v572 = vpop.f32.mrb[0].mxu0
  %v573 = vadd.f32 %v131, %v572
  %v574 = vpop.f32.mrb[0].mxu0
  %v575 = vpop.f32.mrb[0].mxu0
  %v576 = vadd.f32 %v131, %v575
  %v577 = vpop.f32.mrb[0].mxu0
  %578 = vmatprep.mubr.bf16.mxu0 %v243
  %579 = vmatmul.mubr.bf16.gmra.mrb[0].mxu0 %v242
  %v580 = vpop.f32.mrb[0].mxu0
  %v581 = vadd.f32 %v131, %v580
  %v582 = vpop.f32.mrb[0].mxu0
  %v583 = vpop.f32.mrb[0].mxu0
  %v584 = vadd.f32 %v131, %v583
  %v585 = vpop.f32.mrb[0].mxu0
  %586 = vmatprep.mubr.bf16.mxu0 %v248
  %587 = vmatmul.mubr.bf16.gmra.mrb[0].mxu0 %v247
  %v588 = vpop.f32.mrb[0].mxu0
  %v589 = vadd.f32 %v131, %v588
  %v590 = vpop.f32.mrb[0].mxu0
  %v591 = vpop.f32.mrb[0].mxu0
  %v592 = vadd.f32 %v131, %v591
  %v593 = vpop.f32.mrb[0].mxu0
  %594 = vmatprep.mubr.bf16.mxu0 %v253
  %595 = vmatmul.mubr.bf16.gmra.mrb[0].mxu0 %v252
  %v596 = vpop.f32.mrb[0].mxu0
  %v597 = vadd.f32 %v131, %v596
  %v598 = vpop.f32.mrb[0].mxu0
  %v599 = vpop.f32.mrb[0].mxu0
  %v600 = vadd.f32 %v131, %v599
  %v601 = vpop.f32.mrb[0].mxu0
  %602 = vmatprep.mubr.bf16.mxu0 %v258
  %603 = vmatmul.mubr.bf16.gmra.mrb[0].mxu0 %v257
  %v604 = vpop.f32.mrb[0].mxu0
  %v605 = vadd.f32 %v131, %v604
  %v606 = vpop.f32.mrb[0].mxu0
  %v607 = vpop.f32.mrb[0].mxu0
  %v608 = vadd.f32 %v131, %v607
  %v609 = vpop.f32.mrb[0].mxu0
  %610 = vmatprep.mubr.bf16.mxu0 %v263
  %611 = vmatmul.mubr.bf16.gmra.mrb[0].mxu0 %v262
  %v612 = vpop.f32.mrb[0].mxu0
  %v613 = vadd.f32 %v131, %v612
  %v614 = vpop.f32.mrb[0].mxu0
  %v615 = vpop.f32.mrb[0].mxu0
  %v616 = vadd.f32 %v131, %v615
  %v617 = vpop.f32.mrb[0].mxu0
  %618 = vmatprep.mubr.bf16.mxu0 %v268
  %619 = vmatmul.mubr.bf16.gmra.mrb[0].mxu0 %v267
  %v620 = vpop.f32.mrb[0].mxu0
  %v621 = vadd.f32 %v131, %v620
  %v622 = vpop.f32.mrb[0].mxu0
  %v623 = vpop.f32.mrb[0].mxu0
  %v624 = vpop.f32.mrb[0].mxu0
  %625 = vdwg.mxu0
  %626 = vmatprep.subr.bf16.mxu0 0
  %627 = vmatpush1.bf16.msra.mxu0 %v460
  %628 = vmatprep.subr.bf16.mxu0 0
  %629 = vmatpush1.bf16.msra.mxu0 %v461
  %630 = vmatprep.subr.bf16.mxu0 0
  %631 = vmatpush1.bf16.msra.mxu0 %v462
  %632 = vmatprep.subr.bf16.mxu0 0
  %633 = vmatpush1.bf16.msra.mxu0 %v463
  %634 = vmatprep.subr.bf16.mxu0 0
  %635 = vmatpush1.bf16.msra.mxu0 %v464
  %636 = vmatprep.subr.bf16.mxu0 0
  %637 = vmatpush1.bf16.msra.mxu0 %v465
  %638 = vmatprep.subr.bf16.mxu0 0
  %639 = vmatpush1.bf16.msra.mxu0 %v466
  %640 = vmatprep.subr.bf16.mxu0 0
  %641 = vmatpush1.bf16.msra.mxu0 %v467
  %642 = vmatprep.subr.bf16.mxu0 0
  %643 = vmatpush1.bf16.msra.mxu0 %v468
  %644 = vmatprep.subr.bf16.mxu0 0
  %645 = vmatpush1.bf16.msra.mxu0 %v469
  %646 = vmatprep.subr.bf16.mxu0 0
  %647 = vmatpush1.bf16.msra.mxu0 %v470
  %648 = vmatprep.subr.bf16.mxu0 0
  %649 = vmatpush1.bf16.msra.mxu0 %v471
  %650 = vmatprep.subr.bf16.mxu0 0
  %651 = vmatpush1.bf16.msra.mxu0 %v472
  %652 = vmatprep.subr.bf16.mxu0 0
  %653 = vmatpush1.bf16.msra.mxu0 %v473
  %654 = vmatprep.subr.bf16.mxu0 0
  %655 = vmatpush1.bf16.msra.mxu0 %v474
  %656 = vmatprep.subr.bf16.mxu0 0
  %657 = vmatpush1.bf16.msra.mxu0 %v475
  %658 = vmatprep.mubr.bf16.mxu0 %v240
  %659 = vmatmul.mubr.bf16.gmra.mrb[0].mxu0 %v239
  %v660 = vpop.f32.mrb[0].mxu0
  %v661 = vadd.f32 %v573, %v660
  %v662 = vpop.f32.mrb[0].mxu0
  %v663 = vpop.f32.mrb[0].mxu0
  %v664 = vadd.f32 %v576, %v663
  %v665 = vpop.f32.mrb[0].mxu0
  %666 = vmatprep.mubr.bf16.mxu0 %v245
  %667 = vmatmul.mubr.bf16.gmra.mrb[0].mxu0 %v244
  %v668 = vpop.f32.mrb[0].mxu0
  %v669 = vadd.f32 %v581, %v668
  %v670 = vpop.f32.mrb[0].mxu0
  %v671 = vpop.f32.mrb[0].mxu0
  %v672 = vadd.f32 %v584, %v671
  %v673 = vpop.f32.mrb[0].mxu0
  %674 = vmatprep.mubr.bf16.mxu0 %v250
  %675 = vmatmul.mubr.bf16.gmra.mrb[0].mxu0 %v249
  %v676 = vpop.f32.mrb[0].mxu0
  %v677 = vadd.f32 %v589, %v676
  %v678 = vpop.f32.mrb[0].mxu0
  %v679 = vpop.f32.mrb[0].mxu0
  %v680 = vadd.f32 %v592, %v679
  %v681 = vpop.f32.mrb[0].mxu0
  %682 = vmatprep.mubr.bf16.mxu0 %v255
  %683 = vmatmul.mubr.bf16.gmra.mrb[0].mxu0 %v254
  %v684 = vpop.f32.mrb[0].mxu0
  %v685 = vadd.f32 %v597, %v684
  %v686 = vpop.f32.mrb[0].mxu0
  %v687 = vpop.f32.mrb[0].mxu0
  %v688 = vadd.f32 %v600, %v687
  %v689 = vpop.f32.mrb[0].mxu0
  %690 = vmatprep.mubr.bf16.mxu0 %v260
  %691 = vmatmul.mubr.bf16.gmra.mrb[0].mxu0 %v259
  %v692 = vpop.f32.mrb[0].mxu0
  %v693 = vadd.f32 %v605, %v692
  %v694 = vpop.f32.mrb[0].mxu0
  %v695 = vpop.f32.mrb[0].mxu0
  %v696 = vadd.f32 %v608, %v695
  %v697 = vpop.f32.mrb[0].mxu0
  %698 = vmatprep.mubr.bf16.mxu0 %v265
  %699 = vmatmul.mubr.bf16.gmra.mrb[0].mxu0 %v264
  %v700 = vpop.f32.mrb[0].mxu0
  %v701 = vadd.f32 %v613, %v700
  %v702 = vpop.f32.mrb[0].mxu0
  %v703 = vpop.f32.mrb[0].mxu0
  %v704 = vadd.f32 %v616, %v703
  %v705 = vpop.f32.mrb[0].mxu0
  %706 = vmatprep.mubr.bf16.mxu0 %v270
  %707 = vmatmul.mubr.bf16.gmra.mrb[0].mxu0 %v269
  %v708 = vpop.f32.mrb[0].mxu0
  %v709 = vadd.f32 %v621, %v708
  %v710 = vpop.f32.mrb[0].mxu0
  %v711 = vpop.f32.mrb[0].mxu0
  %v712 = vpop.f32.mrb[0].mxu0
  %713 = vdwg.mxu0
  %714 = vmatprep.subr.bf16.mxu0 0
  %715 = vmatpush1.bf16.msra.mxu0 %v476
  %716 = vmatprep.subr.bf16.mxu0 0
  %717 = vmatpush1.bf16.msra.mxu0 %v477
  %718 = vmatprep.subr.bf16.mxu0 0
  %719 = vmatpush1.bf16.msra.mxu0 %v478
  %720 = vmatprep.subr.bf16.mxu0 0
  %721 = vmatpush1.bf16.msra.mxu0 %v479
  %722 = vmatprep.subr.bf16.mxu0 0
  %723 = vmatpush1.bf16.msra.mxu0 0
  %724 = vmatprep.subr.bf16.mxu0 0
  %725 = vmatpush1.bf16.msra.mxu0 0
  %726 = vmatprep.subr.bf16.mxu0 0
  %727 = vmatpush1.bf16.msra.mxu0 0
  %728 = vmatprep.subr.bf16.mxu0 0
  %729 = vmatpush1.bf16.msra.mxu0 0
  %730 = vmatprep.subr.bf16.mxu0 0
  %731 = vmatpush1.bf16.msra.mxu0 0
  %732 = vmatprep.subr.bf16.mxu0 0
  %733 = vmatpush1.bf16.msra.mxu0 0
  %734 = vmatprep.subr.bf16.mxu0 0
  %735 = vmatpush1.bf16.msra.mxu0 0
  %736 = vmatprep.subr.bf16.mxu0 0
  %737 = vmatpush1.bf16.msra.mxu0 0
  %738 = vmatprep.subr.bf16.mxu0 0
  %739 = vmatpush1.bf16.msra.mxu0 0
  %740 = vmatprep.subr.bf16.mxu0 0
  %741 = vmatpush1.bf16.msra.mxu0 0
  %742 = vmatprep.subr.bf16.mxu0 0
  %743 = vmatpush1.bf16.msra.mxu0 0
  %744 = vmatprep.subr.bf16.mxu0 0
  %745 = vmatpush1.bf16.msra.mxu0 0
  %746 = vmatprep.mubr.bf16.mxu0 0
  %747 = vmatmul.mubr.bf16.gmra.mrb[0].mxu0 %v518
  %v748 = vpop.f32.mrb[0].mxu0
  %v749 = vadd.f32 %v661, %v748
  %v750 = vpop.f32.mrb[0].mxu0
  %v751 = vpop.f32.mrb[0].mxu0
  %v752 = vadd.f32 %v664, %v751
  %v753 = vpop.f32.mrb[0].mxu0
  %754 = vmatprep.mubr.bf16.mxu0 0
  %755 = vmatmul.mubr.bf16.gmra.mrb[0].mxu0 %v521
  %v756 = vpop.f32.mrb[0].mxu0
  %v757 = vadd.f32 %v669, %v756
  %v758 = vpop.f32.mrb[0].mxu0
  %v759 = vpop.f32.mrb[0].mxu0
  %v760 = vadd.f32 %v672, %v759
  %v761 = vpop.f32.mrb[0].mxu0
  %762 = vmatprep.mubr.bf16.mxu0 0
  %763 = vmatmul.mubr.bf16.gmra.mrb[0].mxu0 %v524
  %v764 = vpop.f32.mrb[0].mxu0
  %v765 = vadd.f32 %v677, %v764
  %v766 = vpop.f32.mrb[0].mxu0
  %v767 = vpop.f32.mrb[0].mxu0
  %v768 = vadd.f32 %v680, %v767
  %v769 = vpop.f32.mrb[0].mxu0
  %770 = vmatprep.mubr.bf16.mxu0 0
  %771 = vmatmul.mubr.bf16.gmra.mrb[0].mxu0 %v527
  %v772 = vpop.f32.mrb[0].mxu0
  %v773 = vadd.f32 %v685, %v772
  %v774 = vpop.f32.mrb[0].mxu0
  %v775 = vpop.f32.mrb[0].mxu0
  %v776 = vadd.f32 %v688, %v775
  %v777 = vpop.f32.mrb[0].mxu0
  %778 = vmatprep.mubr.bf16.mxu0 0
  %779 = vmatmul.mubr.bf16.gmra.mrb[0].mxu0 %v530
  %v780 = vpop.f32.mrb[0].mxu0
  %v781 = vadd.f32 %v693, %v780
  %v782 = vpop.f32.mrb[0].mxu0
  %v783 = vpop.f32.mrb[0].mxu0
  %v784 = vadd.f32 %v696, %v783
  %v785 = vpop.f32.mrb[0].mxu0
  %786 = vmatprep.mubr.bf16.mxu0 0
  %787 = vmatmul.mubr.bf16.gmra.mrb[0].mxu0 %v533
  %v788 = vpop.f32.mrb[0].mxu0
  %v789 = vadd.f32 %v701, %v788
  %v790 = vpop.f32.mrb[0].mxu0
  %v791 = vpop.f32.mrb[0].mxu0
  %v792 = vadd.f32 %v704, %v791
  %v793 = vpop.f32.mrb[0].mxu0
  %794 = vmatprep.mubr.bf16.mxu0 0
  %795 = vmatmul.mubr.bf16.gmra.mrb[0].mxu0 %v536
  %v796 = vpop.f32.mrb[0].mxu0
  %v797 = vadd.f32 %v709, %v796
  %v798 = vpop.f32.mrb[0].mxu0
  %v799 = vpop.f32.mrb[0].mxu0
  %v800 = vpop.f32.mrb[0].mxu0
  %801 = vdwg.mxu0
  %v802 = vmax.f32 %v749, 0.0
  %v803 = vmax.f32 %v752, 0.0
  %v804 = vmax.f32 %v757, 0.0
  %v805 = vmax.f32 %v760, 0.0
  %v806 = vmax.f32 %v765, 0.0
  %v807 = vmax.f32 %v768, 0.0
  %v808 = vmax.f32 %v773, 0.0
  %v809 = vmax.f32 %v776, 0.0
  %v810 = vmax.f32 %v781, 0.0
  %v811 = vmax.f32 %v784, 0.0
  %v812 = vmax.f32 %v789, 0.0
  %v813 = vmax.f32 %v792, 0.0
  %v814 = vmax.f32 %v797, 0.0
  %v815 = vpack.c.bf16 %v803, %v802
  %v816 = vpack.c.bf16 %v805, %v804
  %v817 = vpack.c.bf16 %v807, %v806
  %v818 = vpack.c.bf16 %v809, %v808
  %v819 = vpack.c.bf16 %v811, %v810
  %v820 = vpack.c.bf16 %v813, %v812
  %v821 = vpack.c.bf16 %v814, %v814
  %v829 = vunpack.c.l.b16 %v815
  %v830 = vunpack.c.h.b16 %v815
  %v831 = vunpack.c.l.b16 %v816
  %v832 = vunpack.c.h.b16 %v816
  %v833 = vunpack.c.l.b16 %v817
  %v834 = vunpack.c.h.b16 %v817
  %v835 = vunpack.c.l.b16 %v818
  %v836 = vunpack.c.h.b16 %v818
  %v837 = vunpack.c.l.b16 %v819
  %v838 = vunpack.c.h.b16 %v819
  %v839 = vunpack.c.l.b16 %v820
  %v840 = vunpack.c.h.b16 %v820
  %v841 = vunpack.c.l.b16 %v821
  %v842 = vpack.c.b16 %v829, %v829
  %v843 = vpack.c.b16 %v830, %v830
  %v844 = vpack.c.b16 %v831, %v831
  %v845 = vpack.c.b16 %v832, %v832
  %v846 = vpack.c.b16 %v833, %v833
  %v847 = vpack.c.b16 %v834, %v834
  %v848 = vpack.c.b16 %v835, %v835
  %v849 = vpack.c.b16 %v836, %v836
  %v850 = vpack.c.b16 %v837, %v837
  %v851 = vpack.c.b16 %v838, %v838
  %v852 = vpack.c.b16 %v839, %v839
  %v853 = vpack.c.b16 %v840, %v840
  %v854 = vpack.c.b16 %v841, %v841
  %vm868 = vcmask 257024
  %869 = vst.msk [vmem:[%s3] sm:$0xf] %vm868, %v842
  %870 = vst.msk [vmem:[%s3 + $0x4] sm:$0xf] %vm868, %v843
  %871 = vst.msk [vmem:[%s3 + $0x8] sm:$0xf] %vm868, %v844
  %872 = vst.msk [vmem:[%s3 + $0xc] sm:$0xf] %vm868, %v845
  %873 = vst.msk [vmem:[%s3 + $0x10] sm:$0xf] %vm868, %v846
  %874 = vst.msk [vmem:[%s3 + $0x14] sm:$0xf] %vm868, %v847
  %875 = vst.msk [vmem:[%s3 + $0x18] sm:$0xf] %vm868, %v848
  %876 = vst.msk [vmem:[%s3 + $0x1c] sm:$0xf] %vm868, %v849
  %877 = vst.msk [vmem:[%s3 + $0x20] sm:$0xf] %vm868, %v850
  %878 = vst.msk [vmem:[%s3 + $0x24] sm:$0xf] %vm868, %v851
  %879 = vst.msk [vmem:[%s3 + $0x28] sm:$0xf] %vm868, %v852
  %880 = vst.msk [vmem:[%s3 + $0x2c] sm:$0xf] %vm868, %v853
  %vm881 = vcmask 253952
  %882 = vst.msk [vmem:[%s3 + $0x30] sm:$0x1] %vm881, %v854
  // Predicated region
  $region14: #{cnn_policy_forward.6} parent=0 // pred_check
    _
  $region15: #{cnn_policy_forward.6} parent=0 // pred_check_branch
    %884 = sbr.rel (0) target = $region17
  $region16: #{cnn_policy_forward.6} parent=0 // pred_region
    _
  $region17: #{cnn_policy_forward.6} parent=0 // pred_fallthru
    _
  // Predicated region
  $region18: #{cnn_policy_forward.6} parent=0 // pred_check
    _
  $region19: #{cnn_policy_forward.6} parent=0 // pred_check_branch
    %886 = sbr.rel (0) target = $region21
  $region20: #{cnn_policy_forward.6} parent=0 // pred_region
    _
  $region21: #{cnn_policy_forward.6} parent=0 // pred_fallthru
    _

// kernel: cnn_policy_forward.7
$region0: #{cnn_policy_forward.7}
  #allocation0 [shape = 'u32[]', space=smem, size = 0x4, offset = 0x4, fixed_abs, tag = 'smem constant byte address 0x4 - core index']
  #allocation1 [shape = 'u32[144,128]{1,0:T(1,128)}', space=vmem, size = 0x12000, scoped, tag = 'internal scratch']
  #allocation2 [shape = 'f32[1,1]{1,0:T(1,128)S(1)}', space=vmem, size = 0x200, scoped, tag = 'scoped memory for cnn_policy_forward.7']
  %s0 = inlined_call_operand.vmem [shape: bf16[2,1568], index: 0, kind: input, shape index: {}]
  %s1 = inlined_call_operand.vmem [shape: bf16[1568,512], index: 1, kind: input, shape index: {}]
  %s2 = inlined_call_operand.vmem [shape: f32[1,512], index: 2, kind: input, shape index: {}]
  %s3 = inlined_call_operand.vmem [shape: f32[1,512], index: 3, kind: input, shape index: {}]
  %s4 = inlined_call_operand.<no memory space> [shape: f32[1,1], index: 4, kind: input, shape index: {}]
  %s5 = inlined_call_operand.hbm [shape: f32[2,512], index: 5, kind: output, shape index: {0}]
  %s6 = inlined_call_operand.vmem [shape: f32[2,1], index: 6, kind: output, shape index: {1}]
  %7 = xla_tuple %s5, %s6
  %s8 = sld [smem:[#allocation0]]
  $region38: #{cnn_policy_forward.7} parent=0
    _
  %s10 = ssub.s32 1, %s8
  %s11 = scalar_select 0, %s10, %s8
  %v12 = vstv %s4
  %13 = vst [vmem:[#allocation2] sm:$0x1] %v12
  $region1: #{cnn_policy_forward.7} parent=0
    #allocation3 [shape = 'u8[4096]{0}', space=vmem, size = 0x1000, scoped, tag = 'output window, operand 0, single buffered']
    #allocation4 [shape = 's32[1]{0}', space=sflag, size = 0x4, scoped, tag = 'scoped memory for cnn_policy_forward.7']
    %14 = vsyncpa [#allocation4], 0
    // Predicated region
    $region2: #{cnn_policy_forward.7} parent=1 // pred_check
      _
    $region3: #{cnn_policy_forward.7} parent=1 // pred_check_branch
      %16 = sbr.rel (0) target = $region5
    $region4: #{cnn_policy_forward.7} parent=1 // pred_region
      _
    $region5: #{cnn_policy_forward.7} parent=1 // pred_fallthru
      _
    // Predicated region
    $region6: #{cnn_policy_forward.7} parent=1 // pred_check
      _
    $region7: #{cnn_policy_forward.7} parent=1 // pred_check_branch
      %18 = sbr.rel (0) target = $region9
    $region8: #{cnn_policy_forward.7} parent=1 // pred_region
      _
    $region9: #{cnn_policy_forward.7} parent=1 // pred_fallthru
      _
    // Predicated region
    $region10: #{cnn_policy_forward.7} parent=1 // pred_check
      _
    $region11: #{cnn_policy_forward.7} parent=1 // pred_check_branch
      %20 = sbr.rel (0) target = $region13
    $region12: #{cnn_policy_forward.7} parent=1 // pred_region
      _
    $region13: #{cnn_policy_forward.7} parent=1 // pred_fallthru
      _
    // Predicated region
    $region14: #{cnn_policy_forward.7} parent=1 // pred_check
      _
    $region15: #{cnn_policy_forward.7} parent=1 // pred_check_branch
      %22 = sbr.rel (0) target = $region17
    $region16: #{cnn_policy_forward.7} parent=1 // pred_region
      _
    $region17: #{cnn_policy_forward.7} parent=1 // pred_fallthru
      _
    // Predicated region
    $region18: #{cnn_policy_forward.7} parent=1 // pred_check
      _
    $region19: #{cnn_policy_forward.7} parent=1 // pred_check_branch
      %24 = sbr.rel (0) target = $region21
    $region20: #{cnn_policy_forward.7} parent=1 // pred_region
      _
    $region21: #{cnn_policy_forward.7} parent=1 // pred_fallthru
      _
    %v26 = vld [vmem:[%s0] sm:$0xff]
    %v27 = vld [vmem:[%s0 + $0x8] sm:$0x1f]
    %v28 = vld [vmem:[%s1] sm:$0xff]
    %v29 = vld [vmem:[%s1 + $0x8] sm:$0xff]
    %v30 = vld [vmem:[%s1 + $0x10] sm:$0xff]
    %v31 = vld [vmem:[%s1 + $0x18] sm:$0xff]
    %v32 = vld [vmem:[%s1 + $0x20] sm:$0xff]
    %v33 = vld [vmem:[%s1 + $0x28] sm:$0xff]
    %v34 = vld [vmem:[%s1 + $0x30] sm:$0xff]
    %v35 = vld [vmem:[%s1 + $0x38] sm:$0xff]
    %v36 = vld [vmem:[%s1 + $0x40] sm:$0xff]
    %v37 = vld [vmem:[%s1 + $0x48] sm:$0xff]
    %v38 = vld [vmem:[%s1 + $0x50] sm:$0xff]
    %v39 = vld [vmem:[%s1 + $0x58] sm:$0xff]
    %v40 = vld [vmem:[%s1 + $0x60] sm:$0xff]
    %v41 = vld [vmem:[%s1 + $0x68] sm:$0xff]
    %v42 = vld [vmem:[%s1 + $0x70] sm:$0xff]
    %v43 = vld [vmem:[%s1 + $0x78] sm:$0xff]
    %v44 = vld [vmem:[%s1 + $0x80] sm:$0xff]
    %v45 = vld [vmem:[%s1 + $0x88] sm:$0xff]
    %v46 = vld [vmem:[%s1 + $0x90] sm:$0xff]
    %v47 = vld [vmem:[%s1 + $0x98] sm:$0xff]
    %v48 = vld [vmem:[%s1 + $0xa0] sm:$0xff]
    %v49 = vld [vmem:[%s1 + $0xa8] sm:$0xff]
    %v50 = vld [vmem:[%s1 + $0xb0] sm:$0xff]
    %v51 = vld [vmem:[%s1 + $0xb8] sm:$0xff]
    %v52 = vld [vmem:[%s1 + $0xc0] sm:$0xff]
    %v53 = vld [vmem:[%s1 + $0xc8] sm:$0xff]
    %v54 = vld [vmem:[%s1 + $0xd0] sm:$0xff]
    %v55 = vld [vmem:[%s1 + $0xd8] sm:$0xff]
    %v56 = vld [vmem:[%s1 + $0xe0] sm:$0xff]
    %v57 = vld [vmem:[%s1 + $0xe8] sm:$0xff]
    %v58 = vld [vmem:[%s1 + $0xf0] sm:$0xff]
    %v59 = vld [vmem:[%s1 + $0xf8] sm:$0xff]
    %v60 = vld [vmem:[%s1 + $0x100] sm:$0xff]
    %v61 = vld [vmem:[%s1 + $0x108] sm:$0xff]
    %v62 = vld [vmem:[%s1 + $0x110] sm:$0xff]
    %v63 = vld [vmem:[%s1 + $0x118] sm:$0xff]
    %v64 = vld [vmem:[%s1 + $0x120] sm:$0xff]
    %v65 = vld [vmem:[%s1 + $0x128] sm:$0xff]
    %v66 = vld [vmem:[%s1 + $0x130] sm:$0xff]
    %v67 = vld [vmem:[%s1 + $0x138] sm:$0xff]
    %v68 = vld [vmem:[%s1 + $0x140] sm:$0xff]
    %v69 = vld [vmem:[%s1 + $0x148] sm:$0xff]
    %v70 = vld [vmem:[%s1 + $0x150] sm:$0xff]
    %v71 = vld [vmem:[%s1 + $0x158] sm:$0xff]
    %v72 = vld [vmem:[%s1 + $0x160] sm:$0xff]
    %v73 = vld [vmem:[%s1 + $0x168] sm:$0xff]
    %v74 = vld [vmem:[%s1 + $0x170] sm:$0xff]
    %v75 = vld [vmem:[%s1 + $0x178] sm:$0xff]
    %v76 = vld [vmem:[%s1 + $0x180] sm:$0xff]
    %v77 = vld [vmem:[%s1 + $0x188] sm:$0xff]
    %v78 = vld [vmem:[%s1 + $0x190] sm:$0xff]
    %v79 = vld [vmem:[%s1 + $0x198] sm:$0xff]
    %v80 = vld [vmem:[%s1 + $0x1a0] sm:$0xff]
    %v81 = vld [vmem:[%s1 + $0x1a8] sm:$0xff]
    %v82 = vld [vmem:[%s1 + $0x1b0] sm:$0xff]
    %v83 = vld [vmem:[%s1 + $0x1b8] sm:$0xff]
    %v84 = vld [vmem:[%s1 + $0x1c0] sm:$0xff]
    %v85 = vld [vmem:[%s1 + $0x1c8] sm:$0xff]
    %v86 = vld [vmem:[%s1 + $0x1d0] sm:$0xff]
    %v87 = vld [vmem:[%s1 + $0x1d8] sm:$0xff]
    %v88 = vld [vmem:[%s1 + $0x1e0] sm:$0xff]
    %v89 = vld [vmem:[%s1 + $0x1e8] sm:$0xff]
    %v90 = vld [vmem:[%s1 + $0x1f0] sm:$0xff]
    %v91 = vld [vmem:[%s1 + $0x1f8] sm:$0xff]
    %v92 = vld [vmem:[%s1 + $0x200] sm:$0xff]
    %v93 = vld [vmem:[%s1 + $0x208] sm:$0xff]
    %v94 = vld [vmem:[%s1 + $0x210] sm:$0xff]
    %v95 = vld [vmem:[%s1 + $0x218] sm:$0xff]
    %v96 = vld [vmem:[%s1 + $0x220] sm:$0xff]
    %v97 = vld [vmem:[%s1 + $0x228] sm:$0xff]
    %v98 = vld [vmem:[%s1 + $0x230] sm:$0xff]
    %v99 = vld [vmem:[%s1 + $0x238] sm:$0xff]
    %v100 = vld [vmem:[%s1 + $0x240] sm:$0xff]
    %v101 = vld [vmem:[%s1 + $0x248] sm:$0xff]
    %v102 = vld [vmem:[%s1 + $0x250] sm:$0xff]
    %v103 = vld [vmem:[%s1 + $0x258] sm:$0xff]
    %v104 = vld [vmem:[%s1 + $0x260] sm:$0xff]
    %v105 = vld [vmem:[%s1 + $0x268] sm:$0xff]
    %v106 = vld [vmem:[%s1 + $0x270] sm:$0xff]
    %v107 = vld [vmem:[%s1 + $0x278] sm:$0xff]
    %v108 = vld [vmem:[%s1 + $0x280] sm:$0xff]
    %v109 = vld [vmem:[%s1 + $0x288] sm:$0xff]
    %v110 = vld [vmem:[%s1 + $0x290] sm:$0xff]
    %v111 = vld [vmem:[%s1 + $0x298] sm:$0xff]
    %v112 = vld [vmem:[%s1 + $0x2a0] sm:$0xff]
    %v113 = vld [vmem:[%s1 + $0x2a8] sm:$0xff]
    %v114 = vld [vmem:[%s1 + $0x2b0] sm:$0xff]
    %v115 = vld [vmem:[%s1 + $0x2b8] sm:$0xff]
    %v116 = vld [vmem:[%s1 + $0x2c0] sm:$0xff]
    %v117 = vld [vmem:[%s1 + $0x2c8] sm:$0xff]
    %v118 = vld [vmem:[%s1 + $0x2d0] sm:$0xff]
    %v119 = vld [vmem:[%s1 + $0x2d8] sm:$0xff]
    %v120 = vld [vmem:[%s1 + $0x2e0] sm:$0xff]
    %v121 = vld [vmem:[%s1 + $0x2e8] sm:$0xff]
    %v122 = vld [vmem:[%s1 + $0x2f0] sm:$0xff]
    %v123 = vld [vmem:[%s1 + $0x2f8] sm:$0xff]
    %v124 = vld [vmem:[%s1 + $0x300] sm:$0xff]
    %v125 = vld [vmem:[%s1 + $0x308] sm:$0xff]
    %v126 = vld [vmem:[%s1 + $0x310] sm:$0xff]
    %v127 = vld [vmem:[%s1 + $0x318] sm:$0xff]
    %v128 = vld [vmem:[%s1 + $0x320] sm:$0xff]
    %v129 = vld [vmem:[%s1 + $0x328] sm:$0xff]
    %v130 = vld [vmem:[%s1 + $0x330] sm:$0xff]
    %v131 = vld [vmem:[%s1 + $0x338] sm:$0xff]
    %v132 = vld [vmem:[%s1 + $0x340] sm:$0xff]
    %v133 = vld [vmem:[%s1 + $0x348] sm:$0xff]
    %v134 = vld [vmem:[%s1 + $0x350] sm:$0xff]
    %v135 = vld [vmem:[%s1 + $0x358] sm:$0xff]
    %v136 = vld [vmem:[%s1 + $0x360] sm:$0xff]
    %v137 = vld [vmem:[%s1 + $0x368] sm:$0xff]
    %v138 = vld [vmem:[%s1 + $0x370] sm:$0xff]
    %v139 = vld [vmem:[%s1 + $0x378] sm:$0xff]
    %v140 = vld [vmem:[%s1 + $0x380] sm:$0xff]
    %v141 = vld [vmem:[%s1 + $0x388] sm:$0xff]
    %v142 = vld [vmem:[%s1 + $0x390] sm:$0xff]
    %v143 = vld [vmem:[%s1 + $0x398] sm:$0xff]
    %v144 = vld [vmem:[%s1 + $0x3a0] sm:$0xff]
    %v145 = vld [vmem:[%s1 + $0x3a8] sm:$0xff]
    %v146 = vld [vmem:[%s1 + $0x3b0] sm:$0xff]
    %v147 = vld [vmem:[%s1 + $0x3b8] sm:$0xff]
    %v148 = vld [vmem:[%s1 + $0x3c0] sm:$0xff]
    %v149 = vld [vmem:[%s1 + $0x3c8] sm:$0xff]
    %v150 = vld [vmem:[%s1 + $0x3d0] sm:$0xff]
    %v151 = vld [vmem:[%s1 + $0x3d8] sm:$0xff]
    %v152 = vld [vmem:[%s1 + $0x3e0] sm:$0xff]
    %v153 = vld [vmem:[%s1 + $0x3e8] sm:$0xff]
    %v154 = vld [vmem:[%s1 + $0x3f0] sm:$0xff]
    %v155 = vld [vmem:[%s1 + $0x3f8] sm:$0xff]
    %v156 = vld [vmem:[%s1 + $0x400] sm:$0xff]
    %v157 = vld [vmem:[%s1 + $0x408] sm:$0xff]
    %v158 = vld [vmem:[%s1 + $0x410] sm:$0xff]
    %v159 = vld [vmem:[%s1 + $0x418] sm:$0xff]
    %v160 = vld [vmem:[%s1 + $0x420] sm:$0xff]
    %v161 = vld [vmem:[%s1 + $0x428] sm:$0xff]
    %v162 = vld [vmem:[%s1 + $0x430] sm:$0xff]
    %v163 = vld [vmem:[%s1 + $0x438] sm:$0xff]
    %v164 = vld [vmem:[%s1 + $0x440] sm:$0xff]
    %v165 = vld [vmem:[%s1 + $0x448] sm:$0xff]
    %v166 = vld [vmem:[%s1 + $0x450] sm:$0xff]
    %v167 = vld [vmem:[%s1 + $0x458] sm:$0xff]
    %v168 = vld [vmem:[%s1 + $0x460] sm:$0xff]
    %v169 = vld [vmem:[%s1 + $0x468] sm:$0xff]
    %v170 = vld [vmem:[%s1 + $0x470] sm:$0xff]
    %v171 = vld [vmem:[%s1 + $0x478] sm:$0xff]
    %v172 = vld [vmem:[%s1 + $0x480] sm:$0xff]
    %v173 = vld [vmem:[%s1 + $0x488] sm:$0xff]
    %v174 = vld [vmem:[%s1 + $0x490] sm:$0xff]
    %v175 = vld [vmem:[%s1 + $0x498] sm:$0xff]
    %v176 = vld [vmem:[%s1 + $0x4a0] sm:$0xff]
    %v177 = vld [vmem:[%s1 + $0x4a8] sm:$0xff]
    %v178 = vld [vmem:[%s1 + $0x4b0] sm:$0xff]
    %v179 = vld [vmem:[%s1 + $0x4b8] sm:$0xff]
    %v180 = vld [vmem:[%s1 + $0x4c0] sm:$0xff]
    %v181 = vld [vmem:[%s1 + $0x4c8] sm:$0xff]
    %v182 = vld [vmem:[%s1 + $0x4d0] sm:$0xff]
    %v183 = vld [vmem:[%s1 + $0x4d8] sm:$0xff]
    %v184 = vld [vmem:[%s1 + $0x4e0] sm:$0xff]
    %v185 = vld [vmem:[%s1 + $0x4e8] sm:$0xff]
    %v186 = vld [vmem:[%s1 + $0x4f0] sm:$0xff]
    %v187 = vld [vmem:[%s1 + $0x4f8] sm:$0xff]
    %v188 = vld [vmem:[%s1 + $0x500] sm:$0xff]
    %v189 = vld [vmem:[%s1 + $0x508] sm:$0xff]
    %v190 = vld [vmem:[%s1 + $0x510] sm:$0xff]
    %v191 = vld [vmem:[%s1 + $0x518] sm:$0xff]
    %v192 = vld [vmem:[%s1 + $0x520] sm:$0xff]
    %v193 = vld [vmem:[%s1 + $0x528] sm:$0xff]
    %v194 = vld [vmem:[%s1 + $0x530] sm:$0xff]
    %v195 = vld [vmem:[%s1 + $0x538] sm:$0xff]
    %v196 = vld [vmem:[%s1 + $0x540] sm:$0xff]
    %v197 = vld [vmem:[%s1 + $0x548] sm:$0xff]
    %v198 = vld [vmem:[%s1 + $0x550] sm:$0xff]
    %v199 = vld [vmem:[%s1 + $0x558] sm:$0xff]
    %v200 = vld [vmem:[%s1 + $0x560] sm:$0xff]
    %v201 = vld [vmem:[%s1 + $0x568] sm:$0xff]
    %v202 = vld [vmem:[%s1 + $0x570] sm:$0xff]
    %v203 = vld [vmem:[%s1 + $0x578] sm:$0xff]
    %v204 = vld [vmem:[%s1 + $0x580] sm:$0xff]
    %v205 = vld [vmem:[%s1 + $0x588] sm:$0xff]
    %v206 = vld [vmem:[%s1 + $0x590] sm:$0xff]
    %v207 = vld [vmem:[%s1 + $0x598] sm:$0xff]
    %v208 = vld [vmem:[%s1 + $0x5a0] sm:$0xff]
    %v209 = vld [vmem:[%s1 + $0x5a8] sm:$0xff]
    %v210 = vld [vmem:[%s1 + $0x5b0] sm:$0xff]
    %v211 = vld [vmem:[%s1 + $0x5b8] sm:$0xff]
    %v212 = vld [vmem:[%s1 + $0x5c0] sm:$0xff]
    %v213 = vld [vmem:[%s1 + $0x5c8] sm:$0xff]
    %v214 = vld [vmem:[%s1 + $0x5d0] sm:$0xff]
    %v215 = vld [vmem:[%s1 + $0x5d8] sm:$0xff]
    %v216 = vld [vmem:[%s1 + $0x5e0] sm:$0xff]
    %v217 = vld [vmem:[%s1 + $0x5e8] sm:$0xff]
    %v218 = vld [vmem:[%s1 + $0x5f0] sm:$0xff]
    %v219 = vld [vmem:[%s1 + $0x5f8] sm:$0xff]
    %v220 = vld [vmem:[%s1 + $0x600] sm:$0xff]
    %v221 = vld [vmem:[%s1 + $0x608] sm:$0xff]
    %v222 = vld [vmem:[%s1 + $0x610] sm:$0xff]
    %v223 = vld [vmem:[%s1 + $0x618] sm:$0xff]
    %v224 = vld [vmem:[%s1 + $0x620] sm:$0xff]
    %v225 = vld [vmem:[%s1 + $0x628] sm:$0xff]
    %v226 = vld [vmem:[%s1 + $0x630] sm:$0xff]
    %v227 = vld [vmem:[%s1 + $0x638] sm:$0xff]
    %v228 = vld [vmem:[%s1 + $0x640] sm:$0xff]
    %v229 = vld [vmem:[%s1 + $0x648] sm:$0xff]
    %v230 = vld [vmem:[%s1 + $0x650] sm:$0xff]
    %v231 = vld [vmem:[%s1 + $0x658] sm:$0xff]
    %v232 = vld [vmem:[%s1 + $0x660] sm:$0xff]
    %v233 = vld [vmem:[%s1 + $0x668] sm:$0xff]
    %v234 = vld [vmem:[%s1 + $0x670] sm:$0xff]
    %v235 = vld [vmem:[%s1 + $0x678] sm:$0xff]
    %v236 = vld [vmem:[%s1 + $0x680] sm:$0xff]
    %v237 = vld [vmem:[%s1 + $0x688] sm:$0xff]
    %v238 = vld [vmem:[%s1 + $0x690] sm:$0xff]
    %v239 = vld [vmem:[%s1 + $0x698] sm:$0xff]
    %v240 = vld [vmem:[%s1 + $0x6a0] sm:$0xff]
    %v241 = vld [vmem:[%s1 + $0x6a8] sm:$0xff]
    %v242 = vld [vmem:[%s1 + $0x6b0] sm:$0xff]
    %v243 = vld [vmem:[%s1 + $0x6b8] sm:$0xff]
    %v244 = vld [vmem:[%s1 + $0x6c0] sm:$0xff]
    %v245 = vld [vmem:[%s1 + $0x6c8] sm:$0xff]
    %v246 = vld [vmem:[%s1 + $0x6d0] sm:$0xff]
    %v247 = vld [vmem:[%s1 + $0x6d8] sm:$0xff]
    %v248 = vld [vmem:[%s1 + $0x6e0] sm:$0xff]
    %v249 = vld [vmem:[%s1 + $0x6e8] sm:$0xff]
    %v250 = vld [vmem:[%s1 + $0x6f0] sm:$0xff]
    %v251 = vld [vmem:[%s1 + $0x6f8] sm:$0xff]
    %v252 = vld [vmem:[%s1 + $0x700] sm:$0xff]
    %v253 = vld [vmem:[%s1 + $0x708] sm:$0xff]
    %v254 = vld [vmem:[%s1 + $0x710] sm:$0xff]
    %v255 = vld [vmem:[%s1 + $0x718] sm:$0xff]
    %v256 = vld [vmem:[%s1 + $0x720] sm:$0xff]
    %v257 = vld [vmem:[%s1 + $0x728] sm:$0xff]
    %v258 = vld [vmem:[%s1 + $0x730] sm:$0xff]
    %v259 = vld [vmem:[%s1 + $0x738] sm:$0xff]
    %v260 = vld [vmem:[%s1 + $0x740] sm:$0xff]
    %v261 = vld [vmem:[%s1 + $0x748] sm:$0xff]
    %v262 = vld [vmem:[%s1 + $0x750] sm:$0xff]
    %v263 = vld [vmem:[%s1 + $0x758] sm:$0xff]
    %v264 = vld [vmem:[%s1 + $0x760] sm:$0xff]
    %v265 = vld [vmem:[%s1 + $0x768] sm:$0xff]
    %v266 = vld [vmem:[%s1 + $0x770] sm:$0xff]
    %v267 = vld [vmem:[%s1 + $0x778] sm:$0xff]
    %v268 = vld [vmem:[%s1 + $0x780] sm:$0xff]
    %v269 = vld [vmem:[%s1 + $0x788] sm:$0xff]
    %v270 = vld [vmem:[%s1 + $0x790] sm:$0xff]
    %v271 = vld [vmem:[%s1 + $0x798] sm:$0xff]
    %v272 = vld [vmem:[%s1 + $0x7a0] sm:$0xff]
    %v273 = vld [vmem:[%s1 + $0x7a8] sm:$0xff]
    %v274 = vld [vmem:[%s1 + $0x7b0] sm:$0xff]
    %v275 = vld [vmem:[%s1 + $0x7b8] sm:$0xff]
    %v276 = vld [vmem:[%s1 + $0x7c0] sm:$0xff]
    %v277 = vld [vmem:[%s1 + $0x7c8] sm:$0xff]
    %v278 = vld [vmem:[%s1 + $0x7d0] sm:$0xff]
    %v279 = vld [vmem:[%s1 + $0x7d8] sm:$0xff]
    %v280 = vld [vmem:[%s1 + $0x7e0] sm:$0xff]
    %v281 = vld [vmem:[%s1 + $0x7e8] sm:$0xff]
    %v282 = vld [vmem:[%s1 + $0x7f0] sm:$0xff]
    %v283 = vld [vmem:[%s1 + $0x7f8] sm:$0xff]
    %v284 = vld [vmem:[%s1 + $0x800] sm:$0xff]
    %v285 = vld [vmem:[%s1 + $0x808] sm:$0xff]
    %v286 = vld [vmem:[%s1 + $0x810] sm:$0xff]
    %v287 = vld [vmem:[%s1 + $0x818] sm:$0xff]
    %v288 = vld [vmem:[%s1 + $0x820] sm:$0xff]
    %v289 = vld [vmem:[%s1 + $0x828] sm:$0xff]
    %v290 = vld [vmem:[%s1 + $0x830] sm:$0xff]
    %v291 = vld [vmem:[%s1 + $0x838] sm:$0xff]
    %v292 = vld [vmem:[%s1 + $0x840] sm:$0xff]
    %v293 = vld [vmem:[%s1 + $0x848] sm:$0xff]
    %v294 = vld [vmem:[%s1 + $0x850] sm:$0xff]
    %v295 = vld [vmem:[%s1 + $0x858] sm:$0xff]
    %v296 = vld [vmem:[%s1 + $0x860] sm:$0xff]
    %v297 = vld [vmem:[%s1 + $0x868] sm:$0xff]
    %v298 = vld [vmem:[%s1 + $0x870] sm:$0xff]
    %v299 = vld [vmem:[%s1 + $0x878] sm:$0xff]
    %v300 = vld [vmem:[%s1 + $0x880] sm:$0xff]
    %v301 = vld [vmem:[%s1 + $0x888] sm:$0xff]
    %v302 = vld [vmem:[%s1 + $0x890] sm:$0xff]
    %v303 = vld [vmem:[%s1 + $0x898] sm:$0xff]
    %v304 = vld [vmem:[%s1 + $0x8a0] sm:$0xff]
    %v305 = vld [vmem:[%s1 + $0x8a8] sm:$0xff]
    %v306 = vld [vmem:[%s1 + $0x8b0] sm:$0xff]
    %v307 = vld [vmem:[%s1 + $0x8b8] sm:$0xff]
    %v308 = vld [vmem:[%s1 + $0x8c0] sm:$0xff]
    %v309 = vld [vmem:[%s1 + $0x8c8] sm:$0xff]
    %v310 = vld [vmem:[%s1 + $0x8d0] sm:$0xff]
    %v311 = vld [vmem:[%s1 + $0x8d8] sm:$0xff]
    %v312 = vld [vmem:[%s1 + $0x8e0] sm:$0xff]
    %v313 = vld [vmem:[%s1 + $0x8e8] sm:$0xff]
    %v314 = vld [vmem:[%s1 + $0x8f0] sm:$0xff]
    %v315 = vld [vmem:[%s1 + $0x8f8] sm:$0xff]
    %v316 = vld [vmem:[%s1 + $0x900] sm:$0xff]
    %v317 = vld [vmem:[%s1 + $0x908] sm:$0xff]
    %v318 = vld [vmem:[%s1 + $0x910] sm:$0xff]
    %v319 = vld [vmem:[%s1 + $0x918] sm:$0xff]
    %v320 = vld [vmem:[%s1 + $0x920] sm:$0xff]
    %v321 = vld [vmem:[%s1 + $0x928] sm:$0xff]
    %v322 = vld [vmem:[%s1 + $0x930] sm:$0xff]
    %v323 = vld [vmem:[%s1 + $0x938] sm:$0xff]
    %v324 = vld [vmem:[%s1 + $0x940] sm:$0xff]
    %v325 = vld [vmem:[%s1 + $0x948] sm:$0xff]
    %v326 = vld [vmem:[%s1 + $0x950] sm:$0xff]
    %v327 = vld [vmem:[%s1 + $0x958] sm:$0xff]
    %v328 = vld [vmem:[%s1 + $0x960] sm:$0xff]
    %v329 = vld [vmem:[%s1 + $0x968] sm:$0xff]
    %v330 = vld [vmem:[%s1 + $0x970] sm:$0xff]
    %v331 = vld [vmem:[%s1 + $0x978] sm:$0xff]
    %v332 = vld [vmem:[%s1 + $0x980] sm:$0xff]
    %v333 = vld [vmem:[%s1 + $0x988] sm:$0xff]
    %v334 = vld [vmem:[%s1 + $0x990] sm:$0xff]
    %v335 = vld [vmem:[%s1 + $0x998] sm:$0xff]
    %v336 = vld [vmem:[%s1 + $0x9a0] sm:$0xff]
    %v337 = vld [vmem:[%s1 + $0x9a8] sm:$0xff]
    %v338 = vld [vmem:[%s1 + $0x9b0] sm:$0xff]
    %v339 = vld [vmem:[%s1 + $0x9b8] sm:$0xff]
    %v340 = vld [vmem:[%s1 + $0x9c0] sm:$0xff]
    %v341 = vld [vmem:[%s1 + $0x9c8] sm:$0xff]
    %v342 = vld [vmem:[%s1 + $0x9d0] sm:$0xff]
    %v343 = vld [vmem:[%s1 + $0x9d8] sm:$0xff]
    %v344 = vld [vmem:[%s1 + $0x9e0] sm:$0xff]
    %v345 = vld [vmem:[%s1 + $0x9e8] sm:$0xff]
    %v346 = vld [vmem:[%s1 + $0x9f0] sm:$0xff]
    %v347 = vld [vmem:[%s1 + $0x9f8] sm:$0xff]
    %v348 = vld [vmem:[%s1 + $0xa00] sm:$0xff]
    %v349 = vld [vmem:[%s1 + $0xa08] sm:$0xff]
    %v350 = vld [vmem:[%s1 + $0xa10] sm:$0xff]
    %v351 = vld [vmem:[%s1 + $0xa18] sm:$0xff]
    %v352 = vld [vmem:[%s1 + $0xa20] sm:$0xff]
    %v353 = vld [vmem:[%s1 + $0xa28] sm:$0xff]
    %v354 = vld [vmem:[%s1 + $0xa30] sm:$0xff]
    %v355 = vld [vmem:[%s1 + $0xa38] sm:$0xff]
    %v356 = vld [vmem:[%s1 + $0xa40] sm:$0xff]
    %v357 = vld [vmem:[%s1 + $0xa48] sm:$0xff]
    %v358 = vld [vmem:[%s1 + $0xa50] sm:$0xff]
    %v359 = vld [vmem:[%s1 + $0xa58] sm:$0xff]
    %v360 = vld [vmem:[%s1 + $0xa60] sm:$0xff]
    %v361 = vld [vmem:[%s1 + $0xa68] sm:$0xff]
    %v362 = vld [vmem:[%s1 + $0xa70] sm:$0xff]
    %v363 = vld [vmem:[%s1 + $0xa78] sm:$0xff]
    %v364 = vld [vmem:[%s1 + $0xa80] sm:$0xff]
    %v365 = vld [vmem:[%s1 + $0xa88] sm:$0xff]
    %v366 = vld [vmem:[%s1 + $0xa90] sm:$0xff]
    %v367 = vld [vmem:[%s1 + $0xa98] sm:$0xff]
    %v368 = vld [vmem:[%s1 + $0xaa0] sm:$0xff]
    %v369 = vld [vmem:[%s1 + $0xaa8] sm:$0xff]
    %v370 = vld [vmem:[%s1 + $0xab0] sm:$0xff]
    %v371 = vld [vmem:[%s1 + $0xab8] sm:$0xff]
    %v372 = vld [vmem:[%s1 + $0xac0] sm:$0xff]
    %v373 = vld [vmem:[%s1 + $0xac8] sm:$0xff]
    %v374 = vld [vmem:[%s1 + $0xad0] sm:$0xff]
    %v375 = vld [vmem:[%s1 + $0xad8] sm:$0xff]
    %v376 = vld [vmem:[%s1 + $0xae0] sm:$0xff]
    %v377 = vld [vmem:[%s1 + $0xae8] sm:$0xff]
    %v378 = vld [vmem:[%s1 + $0xaf0] sm:$0xff]
    %v379 = vld [vmem:[%s1 + $0xaf8] sm:$0xff]
    %v380 = vld [vmem:[%s1 + $0xb00] sm:$0xff]
    %v381 = vld [vmem:[%s1 + $0xb08] sm:$0xff]
    %v382 = vld [vmem:[%s1 + $0xb10] sm:$0xff]
    %v383 = vld [vmem:[%s1 + $0xb18] sm:$0xff]
    %v384 = vld [vmem:[%s1 + $0xb20] sm:$0xff]
    %v385 = vld [vmem:[%s1 + $0xb28] sm:$0xff]
    %v386 = vld [vmem:[%s1 + $0xb30] sm:$0xff]
    %v387 = vld [vmem:[%s1 + $0xb38] sm:$0xff]
    %v388 = vld [vmem:[%s1 + $0xb40] sm:$0xff]
    %v389 = vld [vmem:[%s1 + $0xb48] sm:$0xff]
    %v390 = vld [vmem:[%s1 + $0xb50] sm:$0xff]
    %v391 = vld [vmem:[%s1 + $0xb58] sm:$0xff]
    %v392 = vld [vmem:[%s1 + $0xb60] sm:$0xff]
    %v393 = vld [vmem:[%s1 + $0xb68] sm:$0xff]
    %v394 = vld [vmem:[%s1 + $0xb70] sm:$0xff]
    %v395 = vld [vmem:[%s1 + $0xb78] sm:$0xff]
    %v396 = vld [vmem:[%s1 + $0xb80] sm:$0xff]
    %v397 = vld [vmem:[%s1 + $0xb88] sm:$0xff]
    %v398 = vld [vmem:[%s1 + $0xb90] sm:$0xff]
    %v399 = vld [vmem:[%s1 + $0xb98] sm:$0xff]
    %v400 = vld [vmem:[%s1 + $0xba0] sm:$0xff]
    %v401 = vld [vmem:[%s1 + $0xba8] sm:$0xff]
    %v402 = vld [vmem:[%s1 + $0xbb0] sm:$0xff]
    %v403 = vld [vmem:[%s1 + $0xbb8] sm:$0xff]
    %v404 = vld [vmem:[%s1 + $0xbc0] sm:$0xff]
    %v405 = vld [vmem:[%s1 + $0xbc8] sm:$0xff]
    %v406 = vld [vmem:[%s1 + $0xbd0] sm:$0xff]
    %v407 = vld [vmem:[%s1 + $0xbd8] sm:$0xff]
    %v408 = vld [vmem:[%s1 + $0xbe0] sm:$0xff]
    %v409 = vld [vmem:[%s1 + $0xbe8] sm:$0xff]
    %v410 = vld [vmem:[%s1 + $0xbf0] sm:$0xff]
    %v411 = vld [vmem:[%s1 + $0xbf8] sm:$0xff]
    %v412 = vld [vmem:[%s1 + $0xc00] sm:$0xff]
    %v413 = vld [vmem:[%s1 + $0xc08] sm:$0xff]
    %v414 = vld [vmem:[%s1 + $0xc10] sm:$0xff]
    %v415 = vld [vmem:[%s1 + $0xc18] sm:$0xff]
    %v416 = vld [vmem:[%s1 + $0xc20] sm:$0xff]
    %v417 = vld [vmem:[%s1 + $0xc28] sm:$0xff]
    %v418 = vld [vmem:[%s1 + $0xc30] sm:$0xff]
    %v419 = vld [vmem:[%s1 + $0xc38] sm:$0xff]
    %v420 = vld [vmem:[%s2] sm:$0xf]
    %v422 = vlaneseq
    %v423 = vshrl.u32 %v422, 7
    %v424 = vsub.s32 0, %v423
    %v425 = vrot.slane %v420, %v424
    %v426 = vlaneseq
    %v427 = vshrl.u32 %v426, 7
    %v428 = vsub.s32 1, %v427
    %v429 = vrot.slane %v420, %v428
    %v430 = vlaneseq
    %v431 = vshrl.u32 %v430, 7
    %v432 = vsub.s32 2, %v431
    %v433 = vrot.slane %v420, %v432
    %v434 = vlaneseq
    %v435 = vshrl.u32 %v434, 7
    %v436 = vsub.s32 3, %v435
    %v437 = vrot.slane %v420, %v436
    %v444 = vcombine.high %v26, %v26
    %v446 = vunpack.c.l.s4 1966171168
    %v447 = vunpack.c.0.s8 %v446
    %v448 = vlaneseq
    %v449 = vshrl.u32 %v448, 7
    %v450 = vsub.s32 %v447, %v449
    %v451 = vrot.slane %v26, %v450
    %v453 = vunpack.c.l.s4 1966171168
    %v454 = vunpack.c.0.s8 %v453
    %v455 = vlaneseq
    %v456 = vshrl.u32 %v455, 7
    %v457 = vsub.s32 %v454, %v456
    %v458 = vrot.slane %v444, %v457
    %v459 = vcombine.high %v451, %v451
    %v460 = vcombine.high %v458, %v458
    %v462 = vunpack.c.l.s4 1966171168
    %v463 = vunpack.c.0.s8 %v462
    %v464 = vlaneseq
    %v465 = vshrl.u32 %v464, 7
    %v466 = vsub.s32 %v463, %v465
    %v467 = vrot.slane %v451, %v466
    %v469 = vunpack.c.l.s4 1966171168
    %v470 = vunpack.c.0.s8 %v469
    %v471 = vlaneseq
    %v472 = vshrl.u32 %v471, 7
    %v473 = vsub.s32 %v470, %v472
    %v474 = vrot.slane %v458, %v473
    %v476 = vunpack.c.l.s4 1966171168
    %v477 = vunpack.c.0.s8 %v476
    %v478 = vlaneseq
    %v479 = vshrl.u32 %v478, 7
    %v480 = vsub.s32 %v477, %v479
    %v481 = vrot.slane %v459, %v480
    %v483 = vunpack.c.l.s4 1966171168
    %v484 = vunpack.c.0.s8 %v483
    %v485 = vlaneseq
    %v486 = vshrl.u32 %v485, 7
    %v487 = vsub.s32 %v484, %v486
    %v488 = vrot.slane %v460, %v487
    %v489 = vcombine.high %v467, %v467
    %v490 = vcombine.high %v474, %v474
    %v491 = vcombine.high %v481, %v481
    %v492 = vcombine.high %v488, %v488
    %v493 = vcombine.high %v27, %v27
    %v495 = vunpack.c.l.s4 1966171168
    %v496 = vunpack.c.0.s8 %v495
    %v497 = vlaneseq
    %v498 = vshrl.u32 %v497, 7
    %v499 = vsub.s32 %v496, %v498
    %v500 = vrot.slane %v27, %v499
    %v502 = vunpack.c.l.s4 1966171168
    %v503 = vunpack.c.0.s8 %v502
    %v504 = vlaneseq
    %v505 = vshrl.u32 %v504, 7
    %v506 = vsub.s32 %v503, %v505
    %v507 = vrot.slane %v493, %v506
    %v508 = vcombine.high %v500, %v500
    %v510 = vunpack.c.l.s4 1966171168
    %v511 = vunpack.c.0.s8 %v510
    %v512 = vlaneseq
    %v513 = vshrl.u32 %v512, 7
    %v514 = vsub.s32 %v511, %v513
    %v515 = vrot.slane %v500, %v514
    %v517 = vunpack.c.l.s4 1966171168
    %v518 = vunpack.c.0.s8 %v517
    %v519 = vlaneseq
    %v520 = vshrl.u32 %v519, 7
    %v521 = vsub.s32 %v518, %v520
    %v522 = vrot.slane %v507, %v521
    %v524 = vunpack.c.l.s4 1966171168
    %v525 = vunpack.c.0.s8 %v524
    %v526 = vlaneseq
    %v527 = vshrl.u32 %v526, 7
    %v528 = vsub.s32 %v525, %v527
    %v529 = vrot.slane %v508, %v528
    %v530 = vcombine.high %v515, %v515
    %v531 = vcombine.high %v529, %v529
    %v936 = vunpack.c.l.b16 %v28
    %v937 = vunpack.c.h.b16 %v28
    %v938 = vunpack.c.l.b16 %v29
    %v939 = vunpack.c.h.b16 %v29
    %v940 = vunpack.c.l.b16 %v30
    %v941 = vunpack.c.h.b16 %v30
    %v942 = vunpack.c.l.b16 %v31
    %v943 = vunpack.c.h.b16 %v31
    %v944 = vunpack.c.l.b16 %v32
    %v945 = vunpack.c.h.b16 %v32
    %v946 = vunpack.c.l.b16 %v33
    %v947 = vunpack.c.h.b16 %v33
    %v948 = vunpack.c.l.b16 %v34
    %v949 = vunpack.c.h.b16 %v34
    %v950 = vunpack.c.l.b16 %v35
    %v951 = vunpack.c.h.b16 %v35
    %v952 = vunpack.c.l.b16 %v36
    %v953 = vunpack.c.h.b16 %v36
    %v954 = vunpack.c.l.b16 %v37
    %v955 = vunpack.c.h.b16 %v37
    %v956 = vunpack.c.l.b16 %v38
    %v957 = vunpack.c.h.b16 %v38
    %v958 = vunpack.c.l.b16 %v39
    %v959 = vunpack.c.h.b16 %v39
    %v960 = vunpack.c.l.b16 %v40
    %v961 = vunpack.c.h.b16 %v40
    %v962 = vunpack.c.l.b16 %v41
    %v963 = vunpack.c.h.b16 %v41
    %v964 = vunpack.c.l.b16 %v42
    %v965 = vunpack.c.h.b16 %v42
    %v966 = vunpack.c.l.b16 %v43
    %v967 = vunpack.c.h.b16 %v43
    %v968 = vunpack.c.l.b16 %v44
    %v969 = vunpack.c.h.b16 %v44
    %v970 = vunpack.c.l.b16 %v45
    %v971 = vunpack.c.h.b16 %v45
    %v972 = vunpack.c.l.b16 %v46
    %v973 = vunpack.c.h.b16 %v46
    %v974 = vunpack.c.l.b16 %v47
    %v975 = vunpack.c.h.b16 %v47
    %v976 = vunpack.c.l.b16 %v48
    %v977 = vunpack.c.h.b16 %v48
    %v978 = vunpack.c.l.b16 %v49
    %v979 = vunpack.c.h.b16 %v49
    %v980 = vunpack.c.l.b16 %v50
    %v981 = vunpack.c.h.b16 %v50
    %v982 = vunpack.c.l.b16 %v51
    %v983 = vunpack.c.h.b16 %v51
    %v984 = vunpack.c.l.b16 %v52
    %v985 = vunpack.c.h.b16 %v52
    %v986 = vunpack.c.l.b16 %v53
    %v987 = vunpack.c.h.b16 %v53
    %v988 = vunpack.c.l.b16 %v54
    %v989 = vunpack.c.h.b16 %v54
    %v990 = vunpack.c.l.b16 %v55
    %v991 = vunpack.c.h.b16 %v55
    %v992 = vunpack.c.l.b16 %v56
    %v993 = vunpack.c.h.b16 %v56
    %v994 = vunpack.c.l.b16 %v57
    %v995 = vunpack.c.h.b16 %v57
    %v996 = vunpack.c.l.b16 %v58
    %v997 = vunpack.c.h.b16 %v58
    %v998 = vunpack.c.l.b16 %v59
    %v999 = vunpack.c.h.b16 %v59
    %v1000 = vunpack.c.l.b16 %v60
    %v1001 = vunpack.c.h.b16 %v60
    %v1002 = vunpack.c.l.b16 %v61
    %v1003 = vunpack.c.h.b16 %v61
    %v1004 = vunpack.c.l.b16 %v62
    %v1005 = vunpack.c.h.b16 %v62
    %v1006 = vunpack.c.l.b16 %v63
    %v1007 = vunpack.c.h.b16 %v63
    %v1008 = vunpack.c.l.b16 %v64
    %v1009 = vunpack.c.h.b16 %v64
    %v1010 = vunpack.c.l.b16 %v65
    %v1011 = vunpack.c.h.b16 %v65
    %v1012 = vunpack.c.l.b16 %v66
    %v1013 = vunpack.c.h.b16 %v66
    %v1014 = vunpack.c.l.b16 %v67
    %v1015 = vunpack.c.h.b16 %v67
    %v1016 = vunpack.c.l.b16 %v68
    %v1017 = vunpack.c.h.b16 %v68
    %v1018 = vunpack.c.l.b16 %v69
    %v1019 = vunpack.c.h.b16 %v69
    %v1020 = vunpack.c.l.b16 %v70
    %v1021 = vunpack.c.h.b16 %v70
    %v1022 = vunpack.c.l.b16 %v71
    %v1023 = vunpack.c.h.b16 %v71
    %v1024 = vunpack.c.l.b16 %v72
    %v1025 = vunpack.c.h.b16 %v72
    %v1026 = vunpack.c.l.b16 %v73
    %v1027 = vunpack.c.h.b16 %v73
    %v1028 = vunpack.c.l.b16 %v74
    %v1029 = vunpack.c.h.b16 %v74
    %v1030 = vunpack.c.l.b16 %v75
    %v1031 = vunpack.c.h.b16 %v75
    %v1032 = vunpack.c.l.b16 %v76
    %v1033 = vunpack.c.h.b16 %v76
    %v1034 = vunpack.c.l.b16 %v77
    %v1035 = vunpack.c.h.b16 %v77
    %v1036 = vunpack.c.l.b16 %v78
    %v1037 = vunpack.c.h.b16 %v78
    %v1038 = vunpack.c.l.b16 %v79
    %v1039 = vunpack.c.h.b16 %v79
    %v1040 = vunpack.c.l.b16 %v80
    %v1041 = vunpack.c.h.b16 %v80
    %v1042 = vunpack.c.l.b16 %v81
    %v1043 = vunpack.c.h.b16 %v81
    %v1044 = vunpack.c.l.b16 %v82
    %v1045 = vunpack.c.h.b16 %v82
    %v1046 = vunpack.c.l.b16 %v83
    %v1047 = vunpack.c.h.b16 %v83
    %v1048 = vunpack.c.l.b16 %v84
    %v1049 = vunpack.c.h.b16 %v84
    %v1050 = vunpack.c.l.b16 %v85
    %v1051 = vunpack.c.h.b16 %v85
    %v1052 = vunpack.c.l.b16 %v86
    %v1053 = vunpack.c.h.b16 %v86
    %v1054 = vunpack.c.l.b16 %v87
    %v1055 = vunpack.c.h.b16 %v87
    %v1056 = vunpack.c.l.b16 %v88
    %v1057 = vunpack.c.h.b16 %v88
    %v1058 = vunpack.c.l.b16 %v89
    %v1059 = vunpack.c.h.b16 %v89
    %v1060 = vunpack.c.l.b16 %v90
    %v1061 = vunpack.c.h.b16 %v90
    %v1062 = vunpack.c.l.b16 %v91
    %v1063 = vunpack.c.h.b16 %v91
    %v1064 = vunpack.c.l.b16 %v92
    %v1065 = vunpack.c.h.b16 %v92
    %v1066 = vunpack.c.l.b16 %v93
    %v1067 = vunpack.c.h.b16 %v93
    %v1068 = vunpack.c.l.b16 %v94
    %v1069 = vunpack.c.h.b16 %v94
    %v1070 = vunpack.c.l.b16 %v95
    %v1071 = vunpack.c.h.b16 %v95
    %v1072 = vunpack.c.l.b16 %v96
    %v1073 = vunpack.c.h.b16 %v96
    %v1074 = vunpack.c.l.b16 %v97
    %v1075 = vunpack.c.h.b16 %v97
    %v1076 = vunpack.c.l.b16 %v98
    %v1077 = vunpack.c.h.b16 %v98
    %v1078 = vunpack.c.l.b16 %v99
    %v1079 = vunpack.c.h.b16 %v99
    %v1080 = vunpack.c.l.b16 %v100
    %v1081 = vunpack.c.h.b16 %v100
    %v1082 = vunpack.c.l.b16 %v101
    %v1083 = vunpack.c.h.b16 %v101
    %v1084 = vunpack.c.l.b16 %v102
    %v1085 = vunpack.c.h.b16 %v102
    %v1086 = vunpack.c.l.b16 %v103
    %v1087 = vunpack.c.h.b16 %v103
    %v1088 = vunpack.c.l.b16 %v104
    %v1089 = vunpack.c.h.b16 %v104
    %v1090 = vunpack.c.l.b16 %v105
    %v1091 = vunpack.c.h.b16 %v105
    %v1092 = vunpack.c.l.b16 %v106
    %v1093 = vunpack.c.h.b16 %v106
    %v1094 = vunpack.c.l.b16 %v107
    %v1095 = vunpack.c.h.b16 %v107
    %v1096 = vunpack.c.l.b16 %v108
    %v1097 = vunpack.c.h.b16 %v108
    %v1098 = vunpack.c.l.b16 %v109
    %v1099 = vunpack.c.h.b16 %v109
    %v1100 = vunpack.c.l.b16 %v110
    %v1101 = vunpack.c.h.b16 %v110
    %v1102 = vunpack.c.l.b16 %v111
    %v1103 = vunpack.c.h.b16 %v111
    %v1104 = vunpack.c.l.b16 %v112
    %v1105 = vunpack.c.h.b16 %v112
    %v1106 = vunpack.c.l.b16 %v113
    %v1107 = vunpack.c.h.b16 %v113
    %v1108 = vunpack.c.l.b16 %v114
    %v1109 = vunpack.c.h.b16 %v114
    %v1110 = vunpack.c.l.b16 %v115
    %v1111 = vunpack.c.h.b16 %v115
    %v1112 = vunpack.c.l.b16 %v116
    %v1113 = vunpack.c.h.b16 %v116
    %v1114 = vunpack.c.l.b16 %v117
    %v1115 = vunpack.c.h.b16 %v117
    %v1116 = vunpack.c.l.b16 %v118
    %v1117 = vunpack.c.h.b16 %v118
    %v1118 = vunpack.c.l.b16 %v119
    %v1119 = vunpack.c.h.b16 %v119
    %v1120 = vunpack.c.l.b16 %v120
    %v1121 = vunpack.c.h.b16 %v120
    %v1122 = vunpack.c.l.b16 %v121
    %v1123 = vunpack.c.h.b16 %v121
    %v1124 = vunpack.c.l.b16 %v122
    %v1125 = vunpack.c.h.b16 %v122
    %v1126 = vunpack.c.l.b16 %v123
    %v1127 = vunpack.c.h.b16 %v123
    %v1128 = vunpack.c.l.b16 %v124
    %v1129 = vunpack.c.h.b16 %v124
    %v1130 = vunpack.c.l.b16 %v125
    %v1131 = vunpack.c.h.b16 %v125
    %v1132 = vunpack.c.l.b16 %v126
    %v1133 = vunpack.c.h.b16 %v126
    %v1134 = vunpack.c.l.b16 %v127
    %v1135 = vunpack.c.h.b16 %v127
    %v1136 = vunpack.c.l.b16 %v128
    %v1137 = vunpack.c.h.b16 %v128
    %v1138 = vunpack.c.l.b16 %v129
    %v1139 = vunpack.c.h.b16 %v129
    %v1140 = vunpack.c.l.b16 %v130
    %v1141 = vunpack.c.h.b16 %v130
    %v1142 = vunpack.c.l.b16 %v131
    %v1143 = vunpack.c.h.b16 %v131
    %v1144 = vunpack.c.l.b16 %v132
    %v1145 = vunpack.c.h.b16 %v132
    %v1146 = vunpack.c.l.b16 %v133
    %v1147 = vunpack.c.h.b16 %v133
    %v1148 = vunpack.c.l.b16 %v134
    %v1149 = vunpack.c.h.b16 %v134
    %v1150 = vunpack.c.l.b16 %v135
    %v1151 = vunpack.c.h.b16 %v135
    %v1152 = vunpack.c.l.b16 %v136
    %v1153 = vunpack.c.h.b16 %v136
    %v1154 = vunpack.c.l.b16 %v137
    %v1155 = vunpack.c.h.b16 %v137
    %v1156 = vunpack.c.l.b16 %v138
    %v1157 = vunpack.c.h.b16 %v138
    %v1158 = vunpack.c.l.b16 %v139
    %v1159 = vunpack.c.h.b16 %v139
    %v1160 = vunpack.c.l.b16 %v140
    %v1161 = vunpack.c.h.b16 %v140
    %v1162 = vunpack.c.l.b16 %v141
    %v1163 = vunpack.c.h.b16 %v141
    %v1164 = vunpack.c.l.b16 %v142
    %v1165 = vunpack.c.h.b16 %v142
    %v1166 = vunpack.c.l.b16 %v143
    %v1167 = vunpack.c.h.b16 %v143
    %v1168 = vunpack.c.l.b16 %v144
    %v1169 = vunpack.c.h.b16 %v144
    %v1170 = vunpack.c.l.b16 %v145
    %v1171 = vunpack.c.h.b16 %v145
    %v1172 = vunpack.c.l.b16 %v146
    %v1173 = vunpack.c.h.b16 %v146
    %v1174 = vunpack.c.l.b16 %v147
    %v1175 = vunpack.c.h.b16 %v147
    %v1176 = vunpack.c.l.b16 %v148
    %v1177 = vunpack.c.h.b16 %v148
    %v1178 = vunpack.c.l.b16 %v149
    %v1179 = vunpack.c.h.b16 %v149
    %v1180 = vunpack.c.l.b16 %v150
    %v1181 = vunpack.c.h.b16 %v150
    %v1182 = vunpack.c.l.b16 %v151
    %v1183 = vunpack.c.h.b16 %v151
    %v1184 = vunpack.c.l.b16 %v152
    %v1185 = vunpack.c.h.b16 %v152
    %v1186 = vunpack.c.l.b16 %v153
    %v1187 = vunpack.c.h.b16 %v153
    %v1188 = vunpack.c.l.b16 %v154
    %v1189 = vunpack.c.h.b16 %v154
    %v1190 = vunpack.c.l.b16 %v155
    %v1191 = vunpack.c.h.b16 %v155
    %v1192 = vunpack.c.l.b16 %v156
    %v1193 = vunpack.c.h.b16 %v156
    %v1194 = vunpack.c.l.b16 %v157
    %v1195 = vunpack.c.h.b16 %v157
    %v1196 = vunpack.c.l.b16 %v158
    %v1197 = vunpack.c.h.b16 %v158
    %v1198 = vunpack.c.l.b16 %v159
    %v1199 = vunpack.c.h.b16 %v159
    %v1200 = vunpack.c.l.b16 %v160
    %v1201 = vunpack.c.h.b16 %v160
    %v1202 = vunpack.c.l.b16 %v161
    %v1203 = vunpack.c.h.b16 %v161
    %v1204 = vunpack.c.l.b16 %v162
    %v1205 = vunpack.c.h.b16 %v162
    %v1206 = vunpack.c.l.b16 %v163
    %v1207 = vunpack.c.h.b16 %v163
    %v1208 = vunpack.c.l.b16 %v164
    %v1209 = vunpack.c.h.b16 %v164
    %v1210 = vunpack.c.l.b16 %v165
    %v1211 = vunpack.c.h.b16 %v165
    %v1212 = vunpack.c.l.b16 %v166
    %v1213 = vunpack.c.h.b16 %v166
    %v1214 = vunpack.c.l.b16 %v167
    %v1215 = vunpack.c.h.b16 %v167
    %v1216 = vunpack.c.l.b16 %v168
    %v1217 = vunpack.c.h.b16 %v168
    %v1218 = vunpack.c.l.b16 %v169
    %v1219 = vunpack.c.h.b16 %v169
    %v1220 = vunpack.c.l.b16 %v170
    %v1221 = vunpack.c.h.b16 %v170
    %v1222 = vunpack.c.l.b16 %v171
    %v1223 = vunpack.c.h.b16 %v171
    %v1224 = vunpack.c.l.b16 %v172
    %v1225 = vunpack.c.h.b16 %v172
    %v1226 = vunpack.c.l.b16 %v173
    %v1227 = vunpack.c.h.b16 %v173
    %v1228 = vunpack.c.l.b16 %v174
    %v1229 = vunpack.c.h.b16 %v174
    %v1230 = vunpack.c.l.b16 %v175
    %v1231 = vunpack.c.h.b16 %v175
    %v1232 = vunpack.c.l.b16 %v176
    %v1233 = vunpack.c.h.b16 %v176
    %v1234 = vunpack.c.l.b16 %v177
    %v1235 = vunpack.c.h.b16 %v177
    %v1236 = vunpack.c.l.b16 %v178
    %v1237 = vunpack.c.h.b16 %v178
    %v1238 = vunpack.c.l.b16 %v179
    %v1239 = vunpack.c.h.b16 %v179
    %v1240 = vunpack.c.l.b16 %v180
    %v1241 = vunpack.c.h.b16 %v180
    %v1242 = vunpack.c.l.b16 %v181
    %v1243 = vunpack.c.h.b16 %v181
    %v1244 = vunpack.c.l.b16 %v182
    %v1245 = vunpack.c.h.b16 %v182
    %v1246 = vunpack.c.l.b16 %v183
    %v1247 = vunpack.c.h.b16 %v183
    %v1248 = vunpack.c.l.b16 %v184
    %v1249 = vunpack.c.h.b16 %v184
    %v1250 = vunpack.c.l.b16 %v185
    %v1251 = vunpack.c.h.b16 %v185
    %v1252 = vunpack.c.l.b16 %v186
    %v1253 = vunpack.c.h.b16 %v186
    %v1254 = vunpack.c.l.b16 %v187
    %v1255 = vunpack.c.h.b16 %v187
    %v1256 = vunpack.c.l.b16 %v188
    %v1257 = vunpack.c.h.b16 %v188
    %v1258 = vunpack.c.l.b16 %v189
    %v1259 = vunpack.c.h.b16 %v189
    %v1260 = vunpack.c.l.b16 %v190
    %v1261 = vunpack.c.h.b16 %v190
    %v1262 = vunpack.c.l.b16 %v191
    %v1263 = vunpack.c.h.b16 %v191
    %v1264 = vunpack.c.l.b16 %v192
    %v1265 = vunpack.c.h.b16 %v192
    %v1266 = vunpack.c.l.b16 %v193
    %v1267 = vunpack.c.h.b16 %v193
    %v1268 = vunpack.c.l.b16 %v194
    %v1269 = vunpack.c.h.b16 %v194
    %v1270 = vunpack.c.l.b16 %v195
    %v1271 = vunpack.c.h.b16 %v195
    %v1272 = vunpack.c.l.b16 %v196
    %v1273 = vunpack.c.h.b16 %v196
    %v1274 = vunpack.c.l.b16 %v197
    %v1275 = vunpack.c.h.b16 %v197
    %v1276 = vunpack.c.l.b16 %v198
    %v1277 = vunpack.c.h.b16 %v198
    %v1278 = vunpack.c.l.b16 %v199
    %v1279 = vunpack.c.h.b16 %v199
    %v1280 = vunpack.c.l.b16 %v200
    %v1281 = vunpack.c.h.b16 %v200
    %v1282 = vunpack.c.l.b16 %v201
    %v1283 = vunpack.c.h.b16 %v201
    %v1284 = vunpack.c.l.b16 %v202
    %v1285 = vunpack.c.h.b16 %v202
    %v1286 = vunpack.c.l.b16 %v203
    %v1287 = vunpack.c.h.b16 %v203
    %v1288 = vunpack.c.l.b16 %v204
    %v1289 = vunpack.c.h.b16 %v204
    %v1290 = vunpack.c.l.b16 %v205
    %v1291 = vunpack.c.h.b16 %v205
    %v1292 = vunpack.c.l.b16 %v206
    %v1293 = vunpack.c.h.b16 %v206
    %v1294 = vunpack.c.l.b16 %v207
    %v1295 = vunpack.c.h.b16 %v207
    %v1296 = vunpack.c.l.b16 %v208
    %v1297 = vunpack.c.h.b16 %v208
    %v1298 = vunpack.c.l.b16 %v209
    %v1299 = vunpack.c.h.b16 %v209
    %v1300 = vunpack.c.l.b16 %v210
    %v1301 = vunpack.c.h.b16 %v210
    %v1302 = vunpack.c.l.b16 %v211
    %v1303 = vunpack.c.h.b16 %v211
    %v1304 = vunpack.c.l.b16 %v212
    %v1305 = vunpack.c.h.b16 %v212
    %v1306 = vunpack.c.l.b16 %v213
    %v1307 = vunpack.c.h.b16 %v213
    %v1308 = vunpack.c.l.b16 %v214
    %v1309 = vunpack.c.h.b16 %v214
    %v1310 = vunpack.c.l.b16 %v215
    %v1311 = vunpack.c.h.b16 %v215
    %v1312 = vunpack.c.l.b16 %v216
    %v1313 = vunpack.c.h.b16 %v216
    %v1314 = vunpack.c.l.b16 %v217
    %v1315 = vunpack.c.h.b16 %v217
    %v1316 = vunpack.c.l.b16 %v218
    %v1317 = vunpack.c.h.b16 %v218
    %v1318 = vunpack.c.l.b16 %v219
    %v1319 = vunpack.c.h.b16 %v219
    %v1320 = vunpack.c.l.b16 %v220
    %v1321 = vunpack.c.h.b16 %v220
    %v1322 = vunpack.c.l.b16 %v221
    %v1323 = vunpack.c.h.b16 %v221
    %v1324 = vunpack.c.l.b16 %v222
    %v1325 = vunpack.c.h.b16 %v222
    %v1326 = vunpack.c.l.b16 %v223
    %v1327 = vunpack.c.h.b16 %v223
    %v1328 = vunpack.c.l.b16 %v224
    %v1329 = vunpack.c.h.b16 %v224
    %v1330 = vunpack.c.l.b16 %v225
    %v1331 = vunpack.c.h.b16 %v225
    %v1332 = vunpack.c.l.b16 %v226
    %v1333 = vunpack.c.h.b16 %v226
    %v1334 = vunpack.c.l.b16 %v227
    %v1335 = vunpack.c.h.b16 %v227
    %v1336 = vunpack.c.l.b16 %v228
    %v1337 = vunpack.c.h.b16 %v228
    %v1338 = vunpack.c.l.b16 %v229
    %v1339 = vunpack.c.h.b16 %v229
    %v1340 = vunpack.c.l.b16 %v230
    %v1341 = vunpack.c.h.b16 %v230
    %v1342 = vunpack.c.l.b16 %v231
    %v1343 = vunpack.c.h.b16 %v231
    %v1344 = vunpack.c.l.b16 %v232
    %v1345 = vunpack.c.h.b16 %v232
    %v1346 = vunpack.c.l.b16 %v233
    %v1347 = vunpack.c.h.b16 %v233
    %v1348 = vunpack.c.l.b16 %v234
    %v1349 = vunpack.c.h.b16 %v234
    %v1350 = vunpack.c.l.b16 %v235
    %v1351 = vunpack.c.h.b16 %v235
    %v1352 = vunpack.c.l.b16 %v236
    %v1353 = vunpack.c.h.b16 %v236
    %v1354 = vunpack.c.l.b16 %v237
    %v1355 = vunpack.c.h.b16 %v237
    %v1356 = vunpack.c.l.b16 %v238
    %v1357 = vunpack.c.h.b16 %v238
    %v1358 = vunpack.c.l.b16 %v239
    %v1359 = vunpack.c.h.b16 %v239
    %v1360 = vunpack.c.l.b16 %v240
    %v1361 = vunpack.c.h.b16 %v240
    %v1362 = vunpack.c.l.b16 %v241
    %v1363 = vunpack.c.h.b16 %v241
    %v1364 = vunpack.c.l.b16 %v242
    %v1365 = vunpack.c.h.b16 %v242
    %v1366 = vunpack.c.l.b16 %v243
    %v1367 = vunpack.c.h.b16 %v243
    %v1368 = vunpack.c.l.b16 %v244
    %v1369 = vunpack.c.h.b16 %v244
    %v1370 = vunpack.c.l.b16 %v245
    %v1371 = vunpack.c.h.b16 %v245
    %v1372 = vunpack.c.l.b16 %v246
    %v1373 = vunpack.c.h.b16 %v246
    %v1374 = vunpack.c.l.b16 %v247
    %v1375 = vunpack.c.h.b16 %v247
    %v1376 = vunpack.c.l.b16 %v248
    %v1377 = vunpack.c.h.b16 %v248
    %v1378 = vunpack.c.l.b16 %v249
    %v1379 = vunpack.c.h.b16 %v249
    %v1380 = vunpack.c.l.b16 %v250
    %v1381 = vunpack.c.h.b16 %v250
    %v1382 = vunpack.c.l.b16 %v251
    %v1383 = vunpack.c.h.b16 %v251
    %v1384 = vunpack.c.l.b16 %v252
    %v1385 = vunpack.c.h.b16 %v252
    %v1386 = vunpack.c.l.b16 %v253
    %v1387 = vunpack.c.h.b16 %v253
    %v1388 = vunpack.c.l.b16 %v254
    %v1389 = vunpack.c.h.b16 %v254
    %v1390 = vunpack.c.l.b16 %v255
    %v1391 = vunpack.c.h.b16 %v255
    %v1392 = vunpack.c.l.b16 %v256
    %v1393 = vunpack.c.h.b16 %v256
    %v1394 = vunpack.c.l.b16 %v257
    %v1395 = vunpack.c.h.b16 %v257
    %v1396 = vunpack.c.l.b16 %v258
    %v1397 = vunpack.c.h.b16 %v258
    %v1398 = vunpack.c.l.b16 %v259
    %v1399 = vunpack.c.h.b16 %v259
    %v1400 = vunpack.c.l.b16 %v260
    %v1401 = vunpack.c.h.b16 %v260
    %v1402 = vunpack.c.l.b16 %v261
    %v1403 = vunpack.c.h.b16 %v261
    %v1404 = vunpack.c.l.b16 %v262
    %v1405 = vunpack.c.h.b16 %v262
    %v1406 = vunpack.c.l.b16 %v263
    %v1407 = vunpack.c.h.b16 %v263
    %v1408 = vunpack.c.l.b16 %v264
    %v1409 = vunpack.c.h.b16 %v264
    %v1410 = vunpack.c.l.b16 %v265
    %v1411 = vunpack.c.h.b16 %v265
    %v1412 = vunpack.c.l.b16 %v266
    %v1413 = vunpack.c.h.b16 %v266
    %v1414 = vunpack.c.l.b16 %v267
    %v1415 = vunpack.c.h.b16 %v267
    %v1416 = vunpack.c.l.b16 %v268
    %v1417 = vunpack.c.h.b16 %v268
    %v1418 = vunpack.c.l.b16 %v269
    %v1419 = vunpack.c.h.b16 %v269
    %v1420 = vunpack.c.l.b16 %v270
    %v1421 = vunpack.c.h.b16 %v270
    %v1422 = vunpack.c.l.b16 %v271
    %v1423 = vunpack.c.h.b16 %v271
    %v1424 = vunpack.c.l.b16 %v272
    %v1425 = vunpack.c.h.b16 %v272
    %v1426 = vunpack.c.l.b16 %v273
    %v1427 = vunpack.c.h.b16 %v273
    %v1428 = vunpack.c.l.b16 %v274
    %v1429 = vunpack.c.h.b16 %v274
    %v1430 = vunpack.c.l.b16 %v275
    %v1431 = vunpack.c.h.b16 %v275
    %v1432 = vunpack.c.l.b16 %v276
    %v1433 = vunpack.c.h.b16 %v276
    %v1434 = vunpack.c.l.b16 %v277
    %v1435 = vunpack.c.h.b16 %v277
    %v1436 = vunpack.c.l.b16 %v278
    %v1437 = vunpack.c.h.b16 %v278
    %v1438 = vunpack.c.l.b16 %v279
    %v1439 = vunpack.c.h.b16 %v279
    %v1440 = vunpack.c.l.b16 %v280
    %v1441 = vunpack.c.h.b16 %v280
    %v1442 = vunpack.c.l.b16 %v281
    %v1443 = vunpack.c.h.b16 %v281
    %v1444 = vunpack.c.l.b16 %v282
    %v1445 = vunpack.c.h.b16 %v282
    %v1446 = vunpack.c.l.b16 %v283
    %v1447 = vunpack.c.h.b16 %v283
    %v1448 = vunpack.c.l.b16 %v284
    %v1449 = vunpack.c.h.b16 %v284
    %v1450 = vunpack.c.l.b16 %v285
    %v1451 = vunpack.c.h.b16 %v285
    %v1452 = vunpack.c.l.b16 %v286
    %v1453 = vunpack.c.h.b16 %v286
    %v1454 = vunpack.c.l.b16 %v287
    %v1455 = vunpack.c.h.b16 %v287
    %v1456 = vunpack.c.l.b16 %v288
    %v1457 = vunpack.c.h.b16 %v288
    %v1458 = vunpack.c.l.b16 %v289
    %v1459 = vunpack.c.h.b16 %v289
    %v1460 = vunpack.c.l.b16 %v290
    %v1461 = vunpack.c.h.b16 %v290
    %v1462 = vunpack.c.l.b16 %v291
    %v1463 = vunpack.c.h.b16 %v291
    %v1464 = vunpack.c.l.b16 %v292
    %v1465 = vunpack.c.h.b16 %v292
    %v1466 = vunpack.c.l.b16 %v293
    %v1467 = vunpack.c.h.b16 %v293
    %v1468 = vunpack.c.l.b16 %v294
    %v1469 = vunpack.c.h.b16 %v294
    %v1470 = vunpack.c.l.b16 %v295
    %v1471 = vunpack.c.h.b16 %v295
    %v1472 = vunpack.c.l.b16 %v296
    %v1473 = vunpack.c.h.b16 %v296
    %v1474 = vunpack.c.l.b16 %v297
    %v1475 = vunpack.c.h.b16 %v297
    %v1476 = vunpack.c.l.b16 %v298
    %v1477 = vunpack.c.h.b16 %v298
    %v1478 = vunpack.c.l.b16 %v299
    %v1479 = vunpack.c.h.b16 %v299
    %v1480 = vunpack.c.l.b16 %v300
    %v1481 = vunpack.c.h.b16 %v300
    %v1482 = vunpack.c.l.b16 %v301
    %v1483 = vunpack.c.h.b16 %v301
    %v1484 = vunpack.c.l.b16 %v302
    %v1485 = vunpack.c.h.b16 %v302
    %v1486 = vunpack.c.l.b16 %v303
    %v1487 = vunpack.c.h.b16 %v303
    %v1488 = vunpack.c.l.b16 %v304
    %v1489 = vunpack.c.h.b16 %v304
    %v1490 = vunpack.c.l.b16 %v305
    %v1491 = vunpack.c.h.b16 %v305
    %v1492 = vunpack.c.l.b16 %v306
    %v1493 = vunpack.c.h.b16 %v306
    %v1494 = vunpack.c.l.b16 %v307
    %v1495 = vunpack.c.h.b16 %v307
    %v1496 = vunpack.c.l.b16 %v308
    %v1497 = vunpack.c.h.b16 %v308
    %v1498 = vunpack.c.l.b16 %v309
    %v1499 = vunpack.c.h.b16 %v309
    %v1500 = vunpack.c.l.b16 %v310
    %v1501 = vunpack.c.h.b16 %v310
    %v1502 = vunpack.c.l.b16 %v311
    %v1503 = vunpack.c.h.b16 %v311
    %v1504 = vunpack.c.l.b16 %v312
    %v1505 = vunpack.c.h.b16 %v312
    %v1506 = vunpack.c.l.b16 %v313
    %v1507 = vunpack.c.h.b16 %v313
    %v1508 = vunpack.c.l.b16 %v314
    %v1509 = vunpack.c.h.b16 %v314
    %v1510 = vunpack.c.l.b16 %v315
    %v1511 = vunpack.c.h.b16 %v315
    %v1512 = vunpack.c.l.b16 %v316
    %v1513 = vunpack.c.h.b16 %v316
    %v1514 = vunpack.c.l.b16 %v317
    %v1515 = vunpack.c.h.b16 %v317
    %v1516 = vunpack.c.l.b16 %v318
    %v1517 = vunpack.c.h.b16 %v318
    %v1518 = vunpack.c.l.b16 %v319
    %v1519 = vunpack.c.h.b16 %v319
    %v1520 = vunpack.c.l.b16 %v320
    %v1521 = vunpack.c.h.b16 %v320
    %v1522 = vunpack.c.l.b16 %v321
    %v1523 = vunpack.c.h.b16 %v321
    %v1524 = vunpack.c.l.b16 %v322
    %v1525 = vunpack.c.h.b16 %v322
    %v1526 = vunpack.c.l.b16 %v323
    %v1527 = vunpack.c.h.b16 %v323
    %v1528 = vunpack.c.l.b16 %v324
    %v1529 = vunpack.c.h.b16 %v324
    %v1530 = vunpack.c.l.b16 %v325
    %v1531 = vunpack.c.h.b16 %v325
    %v1532 = vunpack.c.l.b16 %v326
    %v1533 = vunpack.c.h.b16 %v326
    %v1534 = vunpack.c.l.b16 %v327
    %v1535 = vunpack.c.h.b16 %v327
    %v1536 = vunpack.c.l.b16 %v328
    %v1537 = vunpack.c.h.b16 %v328
    %v1538 = vunpack.c.l.b16 %v329
    %v1539 = vunpack.c.h.b16 %v329
    %v1540 = vunpack.c.l.b16 %v330
    %v1541 = vunpack.c.h.b16 %v330
    %v1542 = vunpack.c.l.b16 %v331
    %v1543 = vunpack.c.h.b16 %v331
    %v1544 = vunpack.c.l.b16 %v332
    %v1545 = vunpack.c.h.b16 %v332
    %v1546 = vunpack.c.l.b16 %v333
    %v1547 = vunpack.c.h.b16 %v333
    %v1548 = vunpack.c.l.b16 %v334
    %v1549 = vunpack.c.h.b16 %v334
    %v1550 = vunpack.c.l.b16 %v335
    %v1551 = vunpack.c.h.b16 %v335
    %v1552 = vunpack.c.l.b16 %v336
    %v1553 = vunpack.c.h.b16 %v336
    %v1554 = vunpack.c.l.b16 %v337
    %v1555 = vunpack.c.h.b16 %v337
    %v1556 = vunpack.c.l.b16 %v338
    %v1557 = vunpack.c.h.b16 %v338
    %v1558 = vunpack.c.l.b16 %v339
    %v1559 = vunpack.c.h.b16 %v339
    %v1560 = vunpack.c.l.b16 %v340
    %v1561 = vunpack.c.h.b16 %v340
    %v1562 = vunpack.c.l.b16 %v341
    %v1563 = vunpack.c.h.b16 %v341
    %v1564 = vunpack.c.l.b16 %v342
    %v1565 = vunpack.c.h.b16 %v342
    %v1566 = vunpack.c.l.b16 %v343
    %v1567 = vunpack.c.h.b16 %v343
    %v1568 = vunpack.c.l.b16 %v344
    %v1569 = vunpack.c.h.b16 %v344
    %v1570 = vunpack.c.l.b16 %v345
    %v1571 = vunpack.c.h.b16 %v345
    %v1572 = vunpack.c.l.b16 %v346
    %v1573 = vunpack.c.h.b16 %v346
    %v1574 = vunpack.c.l.b16 %v347
    %v1575 = vunpack.c.h.b16 %v347
    %v1576 = vunpack.c.l.b16 %v348
    %v1577 = vunpack.c.h.b16 %v348
    %v1578 = vunpack.c.l.b16 %v349
    %v1579 = vunpack.c.h.b16 %v349
    %v1580 = vunpack.c.l.b16 %v350
    %v1581 = vunpack.c.h.b16 %v350
    %v1582 = vunpack.c.l.b16 %v351
    %v1583 = vunpack.c.h.b16 %v351
    %v1584 = vunpack.c.l.b16 %v352
    %v1585 = vunpack.c.h.b16 %v352
    %v1586 = vunpack.c.l.b16 %v353
    %v1587 = vunpack.c.h.b16 %v353
    %v1588 = vunpack.c.l.b16 %v354
    %v1589 = vunpack.c.h.b16 %v354
    %v1590 = vunpack.c.l.b16 %v355
    %v1591 = vunpack.c.h.b16 %v355
    %v1592 = vunpack.c.l.b16 %v356
    %v1593 = vunpack.c.h.b16 %v356
    %v1594 = vunpack.c.l.b16 %v357
    %v1595 = vunpack.c.h.b16 %v357
    %v1596 = vunpack.c.l.b16 %v358
    %v1597 = vunpack.c.h.b16 %v358
    %v1598 = vunpack.c.l.b16 %v359
    %v1599 = vunpack.c.h.b16 %v359
    %v1600 = vunpack.c.l.b16 %v360
    %v1601 = vunpack.c.h.b16 %v360
    %v1602 = vunpack.c.l.b16 %v361
    %v1603 = vunpack.c.h.b16 %v361
    %v1604 = vunpack.c.l.b16 %v362
    %v1605 = vunpack.c.h.b16 %v362
    %v1606 = vunpack.c.l.b16 %v363
    %v1607 = vunpack.c.h.b16 %v363
    %v1608 = vunpack.c.l.b16 %v364
    %v1609 = vunpack.c.h.b16 %v364
    %v1610 = vunpack.c.l.b16 %v365
    %v1611 = vunpack.c.h.b16 %v365
    %v1612 = vunpack.c.l.b16 %v366
    %v1613 = vunpack.c.h.b16 %v366
    %v1614 = vunpack.c.l.b16 %v367
    %v1615 = vunpack.c.h.b16 %v367
    %v1616 = vunpack.c.l.b16 %v368
    %v1617 = vunpack.c.h.b16 %v368
    %v1618 = vunpack.c.l.b16 %v369
    %v1619 = vunpack.c.h.b16 %v369
    %v1620 = vunpack.c.l.b16 %v370
    %v1621 = vunpack.c.h.b16 %v370
    %v1622 = vunpack.c.l.b16 %v371
    %v1623 = vunpack.c.h.b16 %v371
    %v1624 = vunpack.c.l.b16 %v372
    %v1625 = vunpack.c.h.b16 %v372
    %v1626 = vunpack.c.l.b16 %v373
    %v1627 = vunpack.c.h.b16 %v373
    %v1628 = vunpack.c.l.b16 %v374
    %v1629 = vunpack.c.h.b16 %v374
    %v1630 = vunpack.c.l.b16 %v375
    %v1631 = vunpack.c.h.b16 %v375
    %v1632 = vunpack.c.l.b16 %v376
    %v1633 = vunpack.c.h.b16 %v376
    %v1634 = vunpack.c.l.b16 %v377
    %v1635 = vunpack.c.h.b16 %v377
    %v1636 = vunpack.c.l.b16 %v378
    %v1637 = vunpack.c.h.b16 %v378
    %v1638 = vunpack.c.l.b16 %v379
    %v1639 = vunpack.c.h.b16 %v379
    %v1640 = vunpack.c.l.b16 %v380
    %v1641 = vunpack.c.h.b16 %v380
    %v1642 = vunpack.c.l.b16 %v381
    %v1643 = vunpack.c.h.b16 %v381
    %v1644 = vunpack.c.l.b16 %v382
    %v1645 = vunpack.c.h.b16 %v382
    %v1646 = vunpack.c.l.b16 %v383
    %v1647 = vunpack.c.h.b16 %v383
    %v1648 = vunpack.c.l.b16 %v384
    %v1649 = vunpack.c.h.b16 %v384
    %v1650 = vunpack.c.l.b16 %v385
    %v1651 = vunpack.c.h.b16 %v385
    %v1652 = vunpack.c.l.b16 %v386
    %v1653 = vunpack.c.h.b16 %v386
    %v1654 = vunpack.c.l.b16 %v387
    %v1655 = vunpack.c.h.b16 %v387
    %v1656 = vunpack.c.l.b16 %v388
    %v1657 = vunpack.c.h.b16 %v388
    %v1658 = vunpack.c.l.b16 %v389
    %v1659 = vunpack.c.h.b16 %v389
    %v1660 = vunpack.c.l.b16 %v390
    %v1661 = vunpack.c.h.b16 %v390
    %v1662 = vunpack.c.l.b16 %v391
    %v1663 = vunpack.c.h.b16 %v391
    %v1664 = vunpack.c.l.b16 %v392
    %v1665 = vunpack.c.h.b16 %v392
    %v1666 = vunpack.c.l.b16 %v393
    %v1667 = vunpack.c.h.b16 %v393
    %v1668 = vunpack.c.l.b16 %v394
    %v1669 = vunpack.c.h.b16 %v394
    %v1670 = vunpack.c.l.b16 %v395
    %v1671 = vunpack.c.h.b16 %v395
    %v1672 = vunpack.c.l.b16 %v396
    %v1673 = vunpack.c.h.b16 %v396
    %v1674 = vunpack.c.l.b16 %v397
    %v1675 = vunpack.c.h.b16 %v397
    %v1676 = vunpack.c.l.b16 %v398
    %v1677 = vunpack.c.h.b16 %v398
    %v1678 = vunpack.c.l.b16 %v399
    %v1679 = vunpack.c.h.b16 %v399
    %v1680 = vunpack.c.l.b16 %v400
    %v1681 = vunpack.c.h.b16 %v400
    %v1682 = vunpack.c.l.b16 %v401
    %v1683 = vunpack.c.h.b16 %v401
    %v1684 = vunpack.c.l.b16 %v402
    %v1685 = vunpack.c.h.b16 %v402
    %v1686 = vunpack.c.l.b16 %v403
    %v1687 = vunpack.c.h.b16 %v403
    %v1688 = vunpack.c.l.b16 %v404
    %v1689 = vunpack.c.h.b16 %v404
    %v1690 = vunpack.c.l.b16 %v405
    %v1691 = vunpack.c.h.b16 %v405
    %v1692 = vunpack.c.l.b16 %v406
    %v1693 = vunpack.c.h.b16 %v406
    %v1694 = vunpack.c.l.b16 %v407
    %v1695 = vunpack.c.h.b16 %v407
    %v1696 = vunpack.c.l.b16 %v408
    %v1697 = vunpack.c.h.b16 %v408
    %v1698 = vunpack.c.l.b16 %v409
    %v1699 = vunpack.c.h.b16 %v409
    %v1700 = vunpack.c.l.b16 %v410
    %v1701 = vunpack.c.h.b16 %v410
    %v1702 = vunpack.c.l.b16 %v411
    %v1703 = vunpack.c.h.b16 %v411
    %v1704 = vunpack.c.l.b16 %v412
    %v1705 = vunpack.c.h.b16 %v412
    %v1706 = vunpack.c.l.b16 %v413
    %v1707 = vunpack.c.h.b16 %v413
    %v1708 = vunpack.c.l.b16 %v414
    %v1709 = vunpack.c.h.b16 %v414
    %v1710 = vunpack.c.l.b16 %v415
    %v1711 = vunpack.c.h.b16 %v415
    %v1712 = vunpack.c.l.b16 %v416
    %v1713 = vunpack.c.h.b16 %v416
    %v1714 = vunpack.c.l.b16 %v417
    %v1715 = vunpack.c.h.b16 %v417
    %v1716 = vunpack.c.l.b16 %v418
    %v1717 = vunpack.c.h.b16 %v418
    %v1718 = vunpack.c.l.b16 %v419
    %v1719 = vunpack.c.h.b16 %v419
    %v1720 = vpack.c.b16 %v940, %v936
    %v1721 = vpack.c.b16 %v941, %v937
    %v1722 = vpack.c.b16 %v942, %v938
    %v1723 = vpack.c.b16 %v943, %v939
    %v1724 = vpack.c.b16 %v948, %v944
    %v1725 = vpack.c.b16 %v949, %v945
    %v1726 = vpack.c.b16 %v950, %v946
    %v1727 = vpack.c.b16 %v951, %v947
    %v1728 = vpack.c.b16 %v956, %v952
    %v1729 = vpack.c.b16 %v957, %v953
    %v1730 = vpack.c.b16 %v958, %v954
    %v1731 = vpack.c.b16 %v959, %v955
    %v1732 = vpack.c.b16 %v964, %v960
    %v1733 = vpack.c.b16 %v965, %v961
    %v1734 = vpack.c.b16 %v966, %v962
    %v1735 = vpack.c.b16 %v967, %v963
    %v1736 = vpack.c.b16 %v972, %v968
    %v1737 = vpack.c.b16 %v973, %v969
    %v1738 = vpack.c.b16 %v974, %v970
    %v1739 = vpack.c.b16 %v975, %v971
    %v1740 = vpack.c.b16 %v980, %v976
    %v1741 = vpack.c.b16 %v981, %v977
    %v1742 = vpack.c.b16 %v982, %v978
    %v1743 = vpack.c.b16 %v983, %v979
    %v1744 = vpack.c.b16 %v988, %v984
    %v1745 = vpack.c.b16 %v989, %v985
    %v1746 = vpack.c.b16 %v990, %v986
    %v1747 = vpack.c.b16 %v991, %v987
    %v1748 = vpack.c.b16 %v996, %v992
    %v1749 = vpack.c.b16 %v997, %v993
    %v1750 = vpack.c.b16 %v998, %v994
    %v1751 = vpack.c.b16 %v999, %v995
    %v1752 = vpack.c.b16 %v1004, %v1000
    %v1753 = vpack.c.b16 %v1005, %v1001
    %v1754 = vpack.c.b16 %v1006, %v1002
    %v1755 = vpack.c.b16 %v1007, %v1003
    %v1756 = vpack.c.b16 %v1012, %v1008
    %v1757 = vpack.c.b16 %v1013, %v1009
    %v1758 = vpack.c.b16 %v1014, %v1010
    %v1759 = vpack.c.b16 %v1015, %v1011
    %v1760 = vpack.c.b16 %v1020, %v1016
    %v1761 = vpack.c.b16 %v1021, %v1017
    %v1762 = vpack.c.b16 %v1022, %v1018
    %v1763 = vpack.c.b16 %v1023, %v1019
    %v1764 = vpack.c.b16 %v1028, %v1024
    %v1765 = vpack.c.b16 %v1029, %v1025
    %v1766 = vpack.c.b16 %v1030, %v1026
    %v1767 = vpack.c.b16 %v1031, %v1027
    %v1768 = vpack.c.b16 %v1036, %v1032
    %v1769 = vpack.c.b16 %v1037, %v1033
    %v1770 = vpack.c.b16 %v1038, %v1034
    %v1771 = vpack.c.b16 %v1039, %v1035
    %v1772 = vpack.c.b16 %v1044, %v1040
    %v1773 = vpack.c.b16 %v1045, %v1041
    %v1774 = vpack.c.b16 %v1046, %v1042
    %v1775 = vpack.c.b16 %v1047, %v1043
    %v1776 = vpack.c.b16 %v1052, %v1048
    %v1777 = vpack.c.b16 %v1053, %v1049
    %v1778 = vpack.c.b16 %v1054, %v1050
    %v1779 = vpack.c.b16 %v1055, %v1051
    %v1780 = vpack.c.b16 %v1060, %v1056
    %v1781 = vpack.c.b16 %v1061, %v1057
    %v1782 = vpack.c.b16 %v1062, %v1058
    %v1783 = vpack.c.b16 %v1063, %v1059
    %v1784 = vpack.c.b16 %v1068, %v1064
    %v1785 = vpack.c.b16 %v1069, %v1065
    %v1786 = vpack.c.b16 %v1070, %v1066
    %v1787 = vpack.c.b16 %v1071, %v1067
    %v1788 = vpack.c.b16 %v1076, %v1072
    %v1789 = vpack.c.b16 %v1077, %v1073
    %v1790 = vpack.c.b16 %v1078, %v1074
    %v1791 = vpack.c.b16 %v1079, %v1075
    %v1792 = vpack.c.b16 %v1084, %v1080
    %v1793 = vpack.c.b16 %v1085, %v1081
    %v1794 = vpack.c.b16 %v1086, %v1082
    %v1795 = vpack.c.b16 %v1087, %v1083
    %v1796 = vpack.c.b16 %v1092, %v1088
    %v1797 = vpack.c.b16 %v1093, %v1089
    %v1798 = vpack.c.b16 %v1094, %v1090
    %v1799 = vpack.c.b16 %v1095, %v1091
    %v1800 = vpack.c.b16 %v1100, %v1096
    %v1801 = vpack.c.b16 %v1101, %v1097
    %v1802 = vpack.c.b16 %v1102, %v1098
    %v1803 = vpack.c.b16 %v1103, %v1099
    %v1804 = vpack.c.b16 %v1108, %v1104
    %v1805 = vpack.c.b16 %v1109, %v1105
    %v1806 = vpack.c.b16 %v1110, %v1106
    %v1807 = vpack.c.b16 %v1111, %v1107
    %v1808 = vpack.c.b16 %v1116, %v1112
    %v1809 = vpack.c.b16 %v1117, %v1113
    %v1810 = vpack.c.b16 %v1118, %v1114
    %v1811 = vpack.c.b16 %v1119, %v1115
    %v1812 = vpack.c.b16 %v1124, %v1120
    %v1813 = vpack.c.b16 %v1125, %v1121
    %v1814 = vpack.c.b16 %v1126, %v1122
    %v1815 = vpack.c.b16 %v1127, %v1123
    %v1816 = vpack.c.b16 %v1132, %v1128
    %v1817 = vpack.c.b16 %v1133, %v1129
    %v1818 = vpack.c.b16 %v1134, %v1130
    %v1819 = vpack.c.b16 %v1135, %v1131
    %v1820 = vpack.c.b16 %v1140, %v1136
    %v1821 = vpack.c.b16 %v1141, %v1137
    %v1822 = vpack.c.b16 %v1142, %v1138
    %v1823 = vpack.c.b16 %v1143, %v1139
    %v1824 = vpack.c.b16 %v1148, %v1144
    %v1825 = vpack.c.b16 %v1149, %v1145
    %v1826 = vpack.c.b16 %v1150, %v1146
    %v1827 = vpack.c.b16 %v1151, %v1147
    %v1828 = vpack.c.b16 %v1156, %v1152
    %v1829 = vpack.c.b16 %v1157, %v1153
    %v1830 = vpack.c.b16 %v1158, %v1154
    %v1831 = vpack.c.b16 %v1159, %v1155
    %v1832 = vpack.c.b16 %v1164, %v1160
    %v1833 = vpack.c.b16 %v1165, %v1161
    %v1834 = vpack.c.b16 %v1166, %v1162
    %v1835 = vpack.c.b16 %v1167, %v1163
    %v1836 = vpack.c.b16 %v1172, %v1168
    %v1837 = vpack.c.b16 %v1173, %v1169
    %v1838 = vpack.c.b16 %v1174, %v1170
    %v1839 = vpack.c.b16 %v1175, %v1171
    %v1840 = vpack.c.b16 %v1180, %v1176
    %v1841 = vpack.c.b16 %v1181, %v1177
    %v1842 = vpack.c.b16 %v1182, %v1178
    %v1843 = vpack.c.b16 %v1183, %v1179
    %v1844 = vpack.c.b16 %v1188, %v1184
    %v1845 = vpack.c.b16 %v1189, %v1185
    %v1846 = vpack.c.b16 %v1190, %v1186
    %v1847 = vpack.c.b16 %v1191, %v1187
    %v1848 = vpack.c.b16 %v1196, %v1192
    %v1849 = vpack.c.b16 %v1197, %v1193
    %v1850 = vpack.c.b16 %v1198, %v1194
    %v1851 = vpack.c.b16 %v1199, %v1195
    %v1852 = vpack.c.b16 %v1204, %v1200
    %v1853 = vpack.c.b16 %v1205, %v1201
    %v1854 = vpack.c.b16 %v1206, %v1202
    %v1855 = vpack.c.b16 %v1207, %v1203
    %v1856 = vpack.c.b16 %v1212, %v1208
    %v1857 = vpack.c.b16 %v1213, %v1209
    %v1858 = vpack.c.b16 %v1214, %v1210
    %v1859 = vpack.c.b16 %v1215, %v1211
    %v1860 = vpack.c.b16 %v1220, %v1216
    %v1861 = vpack.c.b16 %v1221, %v1217
    %v1862 = vpack.c.b16 %v1222, %v1218
    %v1863 = vpack.c.b16 %v1223, %v1219
    %v1864 = vpack.c.b16 %v1228, %v1224
    %v1865 = vpack.c.b16 %v1229, %v1225
    %v1866 = vpack.c.b16 %v1230, %v1226
    %v1867 = vpack.c.b16 %v1231, %v1227
    %v1868 = vpack.c.b16 %v1236, %v1232
    %v1869 = vpack.c.b16 %v1237, %v1233
    %v1870 = vpack.c.b16 %v1238, %v1234
    %v1871 = vpack.c.b16 %v1239, %v1235
    %v1872 = vpack.c.b16 %v1244, %v1240
    %v1873 = vpack.c.b16 %v1245, %v1241
    %v1874 = vpack.c.b16 %v1246, %v1242
    %v1875 = vpack.c.b16 %v1247, %v1243
    %v1876 = vpack.c.b16 %v1252, %v1248
    %v1877 = vpack.c.b16 %v1253, %v1249
    %v1878 = vpack.c.b16 %v1254, %v1250
    %v1879 = vpack.c.b16 %v1255, %v1251
    %v1880 = vpack.c.b16 %v1260, %v1256
    %v1881 = vpack.c.b16 %v1261, %v1257
    %v1882 = vpack.c.b16 %v1262, %v1258
    %v1883 = vpack.c.b16 %v1263, %v1259
    %v1884 = vpack.c.b16 %v1268, %v1264
    %v1885 = vpack.c.b16 %v1269, %v1265
    %v1886 = vpack.c.b16 %v1270, %v1266
    %v1887 = vpack.c.b16 %v1271, %v1267
    %v1888 = vpack.c.b16 %v1276, %v1272
    %v1889 = vpack.c.b16 %v1277, %v1273
    %v1890 = vpack.c.b16 %v1278, %v1274
    %v1891 = vpack.c.b16 %v1279, %v1275
    %v1892 = vpack.c.b16 %v1284, %v1280
    %v1893 = vpack.c.b16 %v1285, %v1281
    %v1894 = vpack.c.b16 %v1286, %v1282
    %v1895 = vpack.c.b16 %v1287, %v1283
    %v1896 = vpack.c.b16 %v1292, %v1288
    %v1897 = vpack.c.b16 %v1293, %v1289
    %v1898 = vpack.c.b16 %v1294, %v1290
    %v1899 = vpack.c.b16 %v1295, %v1291
    %v1900 = vpack.c.b16 %v1300, %v1296
    %v1901 = vpack.c.b16 %v1301, %v1297
    %v1902 = vpack.c.b16 %v1302, %v1298
    %v1903 = vpack.c.b16 %v1303, %v1299
    %v1904 = vpack.c.b16 %v1308, %v1304
    %v1905 = vpack.c.b16 %v1309, %v1305
    %v1906 = vpack.c.b16 %v1310, %v1306
    %v1907 = vpack.c.b16 %v1311, %v1307
    %v1908 = vpack.c.b16 %v1316, %v1312
    %v1909 = vpack.c.b16 %v1317, %v1313
    %v1910 = vpack.c.b16 %v1318, %v1314
    %v1911 = vpack.c.b16 %v1319, %v1315
    %v1912 = vpack.c.b16 %v1324, %v1320
    %v1913 = vpack.c.b16 %v1325, %v1321
    %v1914 = vpack.c.b16 %v1326, %v1322
    %v1915 = vpack.c.b16 %v1327, %v1323
    %v1916 = vpack.c.b16 %v1332, %v1328
    %v1917 = vpack.c.b16 %v1333, %v1329
    %v1918 = vpack.c.b16 %v1334, %v1330
    %v1919 = vpack.c.b16 %v1335, %v1331
    %v1920 = vpack.c.b16 %v1340, %v1336
    %v1921 = vpack.c.b16 %v1341, %v1337
    %v1922 = vpack.c.b16 %v1342, %v1338
    %v1923 = vpack.c.b16 %v1343, %v1339
    %v1924 = vpack.c.b16 %v1348, %v1344
    %v1925 = vpack.c.b16 %v1349, %v1345
    %v1926 = vpack.c.b16 %v1350, %v1346
    %v1927 = vpack.c.b16 %v1351, %v1347
    %v1928 = vpack.c.b16 %v1356, %v1352
    %v1929 = vpack.c.b16 %v1357, %v1353
    %v1930 = vpack.c.b16 %v1358, %v1354
    %v1931 = vpack.c.b16 %v1359, %v1355
    %v1932 = vpack.c.b16 %v1364, %v1360
    %v1933 = vpack.c.b16 %v1365, %v1361
    %v1934 = vpack.c.b16 %v1366, %v1362
    %v1935 = vpack.c.b16 %v1367, %v1363
    %v1936 = vpack.c.b16 %v1372, %v1368
    %v1937 = vpack.c.b16 %v1373, %v1369
    %v1938 = vpack.c.b16 %v1374, %v1370
    %v1939 = vpack.c.b16 %v1375, %v1371
    %v1940 = vpack.c.b16 %v1380, %v1376
    %v1941 = vpack.c.b16 %v1381, %v1377
    %v1942 = vpack.c.b16 %v1382, %v1378
    %v1943 = vpack.c.b16 %v1383, %v1379
    %v1944 = vpack.c.b16 %v1388, %v1384
    %v1945 = vpack.c.b16 %v1389, %v1385
    %v1946 = vpack.c.b16 %v1390, %v1386
    %v1947 = vpack.c.b16 %v1391, %v1387
    %v1948 = vpack.c.b16 %v1396, %v1392
    %v1949 = vpack.c.b16 %v1397, %v1393
    %v1950 = vpack.c.b16 %v1398, %v1394
    %v1951 = vpack.c.b16 %v1399, %v1395
    %v1952 = vpack.c.b16 %v1404, %v1400
    %v1953 = vpack.c.b16 %v1405, %v1401
    %v1954 = vpack.c.b16 %v1406, %v1402
    %v1955 = vpack.c.b16 %v1407, %v1403
    %v1956 = vpack.c.b16 %v1412, %v1408
    %v1957 = vpack.c.b16 %v1413, %v1409
    %v1958 = vpack.c.b16 %v1414, %v1410
    %v1959 = vpack.c.b16 %v1415, %v1411
    %v1960 = vpack.c.b16 %v1420, %v1416
    %v1961 = vpack.c.b16 %v1421, %v1417
    %v1962 = vpack.c.b16 %v1422, %v1418
    %v1963 = vpack.c.b16 %v1423, %v1419
    %v1964 = vpack.c.b16 %v1428, %v1424
    %v1965 = vpack.c.b16 %v1429, %v1425
    %v1966 = vpack.c.b16 %v1430, %v1426
    %v1967 = vpack.c.b16 %v1431, %v1427
    %v1968 = vpack.c.b16 %v1436, %v1432
    %v1969 = vpack.c.b16 %v1437, %v1433
    %v1970 = vpack.c.b16 %v1438, %v1434
    %v1971 = vpack.c.b16 %v1439, %v1435
    %v1972 = vpack.c.b16 %v1444, %v1440
    %v1973 = vpack.c.b16 %v1445, %v1441
    %v1974 = vpack.c.b16 %v1446, %v1442
    %v1975 = vpack.c.b16 %v1447, %v1443
    %v1976 = vpack.c.b16 %v1452, %v1448
    %v1977 = vpack.c.b16 %v1453, %v1449
    %v1978 = vpack.c.b16 %v1454, %v1450
    %v1979 = vpack.c.b16 %v1455, %v1451
    %v1980 = vpack.c.b16 %v1460, %v1456
    %v1981 = vpack.c.b16 %v1461, %v1457
    %v1982 = vpack.c.b16 %v1462, %v1458
    %v1983 = vpack.c.b16 %v1463, %v1459
    %v1984 = vpack.c.b16 %v1468, %v1464
    %v1985 = vpack.c.b16 %v1469, %v1465
    %v1986 = vpack.c.b16 %v1470, %v1466
    %v1987 = vpack.c.b16 %v1471, %v1467
    %v1988 = vpack.c.b16 %v1476, %v1472
    %v1989 = vpack.c.b16 %v1477, %v1473
    %v1990 = vpack.c.b16 %v1478, %v1474
    %v1991 = vpack.c.b16 %v1479, %v1475
    %v1992 = vpack.c.b16 %v1484, %v1480
    %v1993 = vpack.c.b16 %v1485, %v1481
    %v1994 = vpack.c.b16 %v1486, %v1482
    %v1995 = vpack.c.b16 %v1487, %v1483
    %v1996 = vpack.c.b16 %v1492, %v1488
    %v1997 = vpack.c.b16 %v1493, %v1489
    %v1998 = vpack.c.b16 %v1494, %v1490
    %v1999 = vpack.c.b16 %v1495, %v1491
    %v2000 = vpack.c.b16 %v1500, %v1496
    %v2001 = vpack.c.b16 %v1501, %v1497
    %v2002 = vpack.c.b16 %v1502, %v1498
    %v2003 = vpack.c.b16 %v1503, %v1499
    %v2004 = vpack.c.b16 %v1508, %v1504
    %v2005 = vpack.c.b16 %v1509, %v1505
    %v2006 = vpack.c.b16 %v1510, %v1506
    %v2007 = vpack.c.b16 %v1511, %v1507
    %v2008 = vpack.c.b16 %v1516, %v1512
    %v2009 = vpack.c.b16 %v1517, %v1513
    %v2010 = vpack.c.b16 %v1518, %v1514
    %v2011 = vpack.c.b16 %v1519, %v1515
    %v2012 = vpack.c.b16 %v1524, %v1520
    %v2013 = vpack.c.b16 %v1525, %v1521
    %v2014 = vpack.c.b16 %v1526, %v1522
    %v2015 = vpack.c.b16 %v1527, %v1523
    %v2016 = vpack.c.b16 %v1532, %v1528
    %v2017 = vpack.c.b16 %v1533, %v1529
    %v2018 = vpack.c.b16 %v1534, %v1530
    %v2019 = vpack.c.b16 %v1535, %v1531
    %v2020 = vpack.c.b16 %v1540, %v1536
    %v2021 = vpack.c.b16 %v1541, %v1537
    %v2022 = vpack.c.b16 %v1542, %v1538
    %v2023 = vpack.c.b16 %v1543, %v1539
    %v2024 = vpack.c.b16 %v1548, %v1544
    %v2025 = vpack.c.b16 %v1549, %v1545
    %v2026 = vpack.c.b16 %v1550, %v1546
    %v2027 = vpack.c.b16 %v1551, %v1547
    %v2028 = vpack.c.b16 %v1556, %v1552
    %v2029 = vpack.c.b16 %v1557, %v1553
    %v2030 = vpack.c.b16 %v1558, %v1554
    %v2031 = vpack.c.b16 %v1559, %v1555
    %v2032 = vpack.c.b16 %v1564, %v1560
    %v2033 = vpack.c.b16 %v1565, %v1561
    %v2034 = vpack.c.b16 %v1566, %v1562
    %v2035 = vpack.c.b16 %v1567, %v1563
    %v2036 = vpack.c.b16 %v1572, %v1568
    %v2037 = vpack.c.b16 %v1573, %v1569
    %v2038 = vpack.c.b16 %v1574, %v1570
    %v2039 = vpack.c.b16 %v1575, %v1571
    %v2040 = vpack.c.b16 %v1580, %v1576
    %v2041 = vpack.c.b16 %v1581, %v1577
    %v2042 = vpack.c.b16 %v1582, %v1578
    %v2043 = vpack.c.b16 %v1583, %v1579
    %v2044 = vpack.c.b16 %v1588, %v1584
    %v2045 = vpack.c.b16 %v1589, %v1585
    %v2046 = vpack.c.b16 %v1590, %v1586
    %v2047 = vpack.c.b16 %v1591, %v1587
    %v2048 = vpack.c.b16 %v1596, %v1592
    %v2049 = vpack.c.b16 %v1597, %v1593
    %v2050 = vpack.c.b16 %v1598, %v1594
    %v2051 = vpack.c.b16 %v1599, %v1595
    %v2052 = vpack.c.b16 %v1604, %v1600
    %v2053 = vpack.c.b16 %v1605, %v1601
    %v2054 = vpack.c.b16 %v1606, %v1602
    %v2055 = vpack.c.b16 %v1607, %v1603
    %v2056 = vpack.c.b16 %v1612, %v1608
    %v2057 = vpack.c.b16 %v1613, %v1609
    %v2058 = vpack.c.b16 %v1614, %v1610
    %v2059 = vpack.c.b16 %v1615, %v1611
    %v2060 = vpack.c.b16 %v1620, %v1616
    %v2061 = vpack.c.b16 %v1621, %v1617
    %v2062 = vpack.c.b16 %v1622, %v1618
    %v2063 = vpack.c.b16 %v1623, %v1619
    %v2064 = vpack.c.b16 %v1628, %v1624
    %v2065 = vpack.c.b16 %v1629, %v1625
    %v2066 = vpack.c.b16 %v1630, %v1626
    %v2067 = vpack.c.b16 %v1631, %v1627
    %v2068 = vpack.c.b16 %v1636, %v1632
    %v2069 = vpack.c.b16 %v1637, %v1633
    %v2070 = vpack.c.b16 %v1638, %v1634
    %v2071 = vpack.c.b16 %v1639, %v1635
    %v2072 = vpack.c.b16 %v1644, %v1640
    %v2073 = vpack.c.b16 %v1645, %v1641
    %v2074 = vpack.c.b16 %v1646, %v1642
    %v2075 = vpack.c.b16 %v1647, %v1643
    %v2076 = vpack.c.b16 %v1652, %v1648
    %v2077 = vpack.c.b16 %v1653, %v1649
    %v2078 = vpack.c.b16 %v1654, %v1650
    %v2079 = vpack.c.b16 %v1655, %v1651
    %v2080 = vpack.c.b16 %v1660, %v1656
    %v2081 = vpack.c.b16 %v1661, %v1657
    %v2082 = vpack.c.b16 %v1662, %v1658
    %v2083 = vpack.c.b16 %v1663, %v1659
    %v2084 = vpack.c.b16 %v1668, %v1664
    %v2085 = vpack.c.b16 %v1669, %v1665
    %v2086 = vpack.c.b16 %v1670, %v1666
    %v2087 = vpack.c.b16 %v1671, %v1667
    %v2088 = vpack.c.b16 %v1676, %v1672
    %v2089 = vpack.c.b16 %v1677, %v1673
    %v2090 = vpack.c.b16 %v1678, %v1674
    %v2091 = vpack.c.b16 %v1679, %v1675
    %v2092 = vpack.c.b16 %v1684, %v1680
    %v2093 = vpack.c.b16 %v1685, %v1681
    %v2094 = vpack.c.b16 %v1686, %v1682
    %v2095 = vpack.c.b16 %v1687, %v1683
    %v2096 = vpack.c.b16 %v1692, %v1688
    %v2097 = vpack.c.b16 %v1693, %v1689
    %v2098 = vpack.c.b16 %v1694, %v1690
    %v2099 = vpack.c.b16 %v1695, %v1691
    %v2100 = vpack.c.b16 %v1700, %v1696
    %v2101 = vpack.c.b16 %v1701, %v1697
    %v2102 = vpack.c.b16 %v1702, %v1698
    %v2103 = vpack.c.b16 %v1703, %v1699
    %v2104 = vpack.c.b16 %v1708, %v1704
    %v2105 = vpack.c.b16 %v1709, %v1705
    %v2106 = vpack.c.b16 %v1710, %v1706
    %v2107 = vpack.c.b16 %v1711, %v1707
    %v2108 = vpack.c.b16 %v1716, %v1712
    %v2109 = vpack.c.b16 %v1717, %v1713
    %v2110 = vpack.c.b16 %v1718, %v1714
    %v2111 = vpack.c.b16 %v1719, %v1715
    %vm2504 = vcmask 261120
    %v2506 = vsel %vm2504, %v522, 0
    %2508 = vmatprep.subr.bf16.mxu0 %v1721
    %2509 = vmatpush1.bf16.msra.mxu0 %v1720
    %2510 = vmatprep.subr.bf16.mxu0 %v1725
    %2511 = vmatpush1.bf16.msra.mxu0 %v1724
    %2512 = vmatprep.subr.bf16.mxu0 %v1729
    %2513 = vmatpush1.bf16.msra.mxu0 %v1728
    %2514 = vmatprep.subr.bf16.mxu0 %v1733
    %2515 = vmatpush1.bf16.msra.mxu0 %v1732
    %2516 = vmatprep.subr.bf16.mxu0 %v1737
    %2517 = vmatpush1.bf16.msra.mxu0 %v1736
    %2518 = vmatprep.subr.bf16.mxu0 %v1741
    %2519 = vmatpush1.bf16.msra.mxu0 %v1740
    %2520 = vmatprep.subr.bf16.mxu0 %v1745
    %2521 = vmatpush1.bf16.msra.mxu0 %v1744
    %2522 = vmatprep.subr.bf16.mxu0 %v1749
    %2523 = vmatpush1.bf16.msra.mxu0 %v1748
    %2524 = vmatprep.subr.bf16.mxu0 %v1753
    %2525 = vmatpush1.bf16.msra.mxu0 %v1752
    %2526 = vmatprep.subr.bf16.mxu0 %v1757
    %2527 = vmatpush1.bf16.msra.mxu0 %v1756
    %2528 = vmatprep.subr.bf16.mxu0 %v1761
    %2529 = vmatpush1.bf16.msra.mxu0 %v1760
    %2530 = vmatprep.subr.bf16.mxu0 %v1765
    %2531 = vmatpush1.bf16.msra.mxu0 %v1764
    %2532 = vmatprep.subr.bf16.mxu0 %v1769
    %2533 = vmatpush1.bf16.msra.mxu0 %v1768
    %2534 = vmatprep.subr.bf16.mxu0 %v1773
    %2535 = vmatpush1.bf16.msra.mxu0 %v1772
    %2536 = vmatprep.subr.bf16.mxu0 %v1777
    %2537 = vmatpush1.bf16.msra.mxu0 %v1776
    %2538 = vmatprep.subr.bf16.mxu0 %v1781
    %2539 = vmatpush1.bf16.msra.mxu0 %v1780
    %2540 = vmatprep.mubr.bf16.mxu0 %v481
    %2541 = vmatmul.mubr.bf16.gmra.mrb[0].mxu0 %v467
    %v2542 = vpop.f32.mrb[0].mxu0
    %v2543 = vadd.f32 %v425, %v2542
    %v2544 = vpop.f32.mrb[0].mxu0
    %v2545 = vadd.f32 %v429, %v2544
    %v2546 = vpop.f32.mrb[0].mxu0
    %v2547 = vpop.f32.mrb[0].mxu0
    %2548 = vdwg.mxu0
    %2549 = vmatprep.subr.bf16.mxu0 %v1785
    %2550 = vmatpush1.bf16.msra.mxu0 %v1784
    %2551 = vmatprep.subr.bf16.mxu0 %v1789
    %2552 = vmatpush1.bf16.msra.mxu0 %v1788
    %2553 = vmatprep.subr.bf16.mxu0 %v1793
    %2554 = vmatpush1.bf16.msra.mxu0 %v1792
    %2555 = vmatprep.subr.bf16.mxu0 %v1797
    %2556 = vmatpush1.bf16.msra.mxu0 %v1796
    %2557 = vmatprep.subr.bf16.mxu0 %v1801
    %2558 = vmatpush1.bf16.msra.mxu0 %v1800
    %2559 = vmatprep.subr.bf16.mxu0 %v1805
    %2560 = vmatpush1.bf16.msra.mxu0 %v1804
    %2561 = vmatprep.subr.bf16.mxu0 %v1809
    %2562 = vmatpush1.bf16.msra.mxu0 %v1808
    %2563 = vmatprep.subr.bf16.mxu0 %v1813
    %2564 = vmatpush1.bf16.msra.mxu0 %v1812
    %2565 = vmatprep.subr.bf16.mxu0 %v1817
    %2566 = vmatpush1.bf16.msra.mxu0 %v1816
    %2567 = vmatprep.subr.bf16.mxu0 %v1821
    %2568 = vmatpush1.bf16.msra.mxu0 %v1820
    %2569 = vmatprep.subr.bf16.mxu0 %v1825
    %2570 = vmatpush1.bf16.msra.mxu0 %v1824
    %2571 = vmatprep.subr.bf16.mxu0 %v1829
    %2572 = vmatpush1.bf16.msra.mxu0 %v1828
    %2573 = vmatprep.subr.bf16.mxu0 %v1833
    %2574 = vmatpush1.bf16.msra.mxu0 %v1832
    %2575 = vmatprep.subr.bf16.mxu0 %v1837
    %2576 = vmatpush1.bf16.msra.mxu0 %v1836
    %2577 = vmatprep.subr.bf16.mxu0 %v1841
    %2578 = vmatpush1.bf16.msra.mxu0 %v1840
    %2579 = vmatprep.subr.bf16.mxu0 %v1845
    %2580 = vmatpush1.bf16.msra.mxu0 %v1844
    %2581 = vmatprep.mubr.bf16.mxu0 %v491
    %2582 = vmatmul.mubr.bf16.gmra.mrb[0].mxu0 %v489
    %v2583 = vpop.f32.mrb[0].mxu0
    %v2584 = vadd.f32 %v2543, %v2583
    %v2585 = vpop.f32.mrb[0].mxu0
    %v2586 = vadd.f32 %v2545, %v2585
    %v2587 = vpop.f32.mrb[0].mxu0
    %v2588 = vpop.f32.mrb[0].mxu0
    %2589 = vdwg.mxu0
    %2590 = vmatprep.subr.bf16.mxu0 %v1849
    %2591 = vmatpush1.bf16.msra.mxu0 %v1848
    %2592 = vmatprep.subr.bf16.mxu0 %v1853
    %2593 = vmatpush1.bf16.msra.mxu0 %v1852
    %2594 = vmatprep.subr.bf16.mxu0 %v1857
    %2595 = vmatpush1.bf16.msra.mxu0 %v1856
    %2596 = vmatprep.subr.bf16.mxu0 %v1861
    %2597 = vmatpush1.bf16.msra.mxu0 %v1860
    %2598 = vmatprep.subr.bf16.mxu0 %v1865
    %2599 = vmatpush1.bf16.msra.mxu0 %v1864
    %2600 = vmatprep.subr.bf16.mxu0 %v1869
    %2601 = vmatpush1.bf16.msra.mxu0 %v1868
    %2602 = vmatprep.subr.bf16.mxu0 %v1873
    %2603 = vmatpush1.bf16.msra.mxu0 %v1872
    %2604 = vmatprep.subr.bf16.mxu0 %v1877
    %2605 = vmatpush1.bf16.msra.mxu0 %v1876
    %2606 = vmatprep.subr.bf16.mxu0 %v1881
    %2607 = vmatpush1.bf16.msra.mxu0 %v1880
    %2608 = vmatprep.subr.bf16.mxu0 %v1885
    %2609 = vmatpush1.bf16.msra.mxu0 %v1884
    %2610 = vmatprep.subr.bf16.mxu0 %v1889
    %2611 = vmatpush1.bf16.msra.mxu0 %v1888
    %2612 = vmatprep.subr.bf16.mxu0 %v1893
    %2613 = vmatpush1.bf16.msra.mxu0 %v1892
    %2614 = vmatprep.subr.bf16.mxu0 %v1897
    %2615 = vmatpush1.bf16.msra.mxu0 %v1896
    %2616 = vmatprep.subr.bf16.mxu0 %v1901
    %2617 = vmatpush1.bf16.msra.mxu0 %v1900
    %2618 = vmatprep.subr.bf16.mxu0 %v1905
    %2619 = vmatpush1.bf16.msra.mxu0 %v1904
    %2620 = vmatprep.subr.bf16.mxu0 %v1909
    %2621 = vmatpush1.bf16.msra.mxu0 %v1908
    %2622 = vmatprep.mubr.bf16.mxu0 %v488
    %2623 = vmatmul.mubr.bf16.gmra.mrb[0].mxu0 %v474
    %v2624 = vpop.f32.mrb[0].mxu0
    %v2625 = vadd.f32 %v2584, %v2624
    %v2626 = vpop.f32.mrb[0].mxu0
    %v2627 = vadd.f32 %v2586, %v2626
    %v2628 = vpop.f32.mrb[0].mxu0
    %v2629 = vpop.f32.mrb[0].mxu0
    %2630 = vdwg.mxu0
    %2631 = vmatprep.subr.bf16.mxu0 %v1913
    %2632 = vmatpush1.bf16.msra.mxu0 %v1912
    %2633 = vmatprep.subr.bf16.mxu0 %v1917
    %2634 = vmatpush1.bf16.msra.mxu0 %v1916
    %2635 = vmatprep.subr.bf16.mxu0 %v1921
    %2636 = vmatpush1.bf16.msra.mxu0 %v1920
    %2637 = vmatprep.subr.bf16.mxu0 %v1925
    %2638 = vmatpush1.bf16.msra.mxu0 %v1924
    %2639 = vmatprep.subr.bf16.mxu0 %v1929
    %2640 = vmatpush1.bf16.msra.mxu0 %v1928
    %2641 = vmatprep.subr.bf16.mxu0 %v1933
    %2642 = vmatpush1.bf16.msra.mxu0 %v1932
    %2643 = vmatprep.subr.bf16.mxu0 %v1937
    %2644 = vmatpush1.bf16.msra.mxu0 %v1936
    %2645 = vmatprep.subr.bf16.mxu0 %v1941
    %2646 = vmatpush1.bf16.msra.mxu0 %v1940
    %2647 = vmatprep.subr.bf16.mxu0 %v1945
    %2648 = vmatpush1.bf16.msra.mxu0 %v1944
    %2649 = vmatprep.subr.bf16.mxu0 %v1949
    %2650 = vmatpush1.bf16.msra.mxu0 %v1948
    %2651 = vmatprep.subr.bf16.mxu0 %v1953
    %2652 = vmatpush1.bf16.msra.mxu0 %v1952
    %2653 = vmatprep.subr.bf16.mxu0 %v1957
    %2654 = vmatpush1.bf16.msra.mxu0 %v1956
    %2655 = vmatprep.subr.bf16.mxu0 %v1961
    %2656 = vmatpush1.bf16.msra.mxu0 %v1960
    %2657 = vmatprep.subr.bf16.mxu0 %v1965
    %2658 = vmatpush1.bf16.msra.mxu0 %v1964
    %2659 = vmatprep.subr.bf16.mxu0 %v1969
    %2660 = vmatpush1.bf16.msra.mxu0 %v1968
    %2661 = vmatprep.subr.bf16.mxu0 %v1973
    %2662 = vmatpush1.bf16.msra.mxu0 %v1972
    %2663 = vmatprep.mubr.bf16.mxu0 %v492
    %2664 = vmatmul.mubr.bf16.gmra.mrb[0].mxu0 %v490
    %v2665 = vpop.f32.mrb[0].mxu0
    %v2666 = vadd.f32 %v2625, %v2665
    %v2667 = vpop.f32.mrb[0].mxu0
    %v2668 = vadd.f32 %v2627, %v2667
    %v2669 = vpop.f32.mrb[0].mxu0
    %v2670 = vpop.f32.mrb[0].mxu0
    %2671 = vdwg.mxu0
    %2672 = vmatprep.subr.bf16.mxu0 %v1977
    %2673 = vmatpush1.bf16.msra.mxu0 %v1976
    %2674 = vmatprep.subr.bf16.mxu0 %v1981
    %2675 = vmatpush1.bf16.msra.mxu0 %v1980
    %2676 = vmatprep.subr.bf16.mxu0 %v1985
    %2677 = vmatpush1.bf16.msra.mxu0 %v1984
    %2678 = vmatprep.subr.bf16.mxu0 %v1989
    %2679 = vmatpush1.bf16.msra.mxu0 %v1988
    %2680 = vmatprep.subr.bf16.mxu0 %v1993
    %2681 = vmatpush1.bf16.msra.mxu0 %v1992
    %2682 = vmatprep.subr.bf16.mxu0 %v1997
    %2683 = vmatpush1.bf16.msra.mxu0 %v1996
    %2684 = vmatprep.subr.bf16.mxu0 %v2001
    %2685 = vmatpush1.bf16.msra.mxu0 %v2000
    %2686 = vmatprep.subr.bf16.mxu0 %v2005
    %2687 = vmatpush1.bf16.msra.mxu0 %v2004
    %2688 = vmatprep.subr.bf16.mxu0 %v2009
    %2689 = vmatpush1.bf16.msra.mxu0 %v2008
    %2690 = vmatprep.subr.bf16.mxu0 %v2013
    %2691 = vmatpush1.bf16.msra.mxu0 %v2012
    %2692 = vmatprep.subr.bf16.mxu0 %v2017
    %2693 = vmatpush1.bf16.msra.mxu0 %v2016
    %2694 = vmatprep.subr.bf16.mxu0 %v2021
    %2695 = vmatpush1.bf16.msra.mxu0 %v2020
    %2696 = vmatprep.subr.bf16.mxu0 %v2025
    %2697 = vmatpush1.bf16.msra.mxu0 %v2024
    %2698 = vmatprep.subr.bf16.mxu0 %v2029
    %2699 = vmatpush1.bf16.msra.mxu0 %v2028
    %2700 = vmatprep.subr.bf16.mxu0 %v2033
    %2701 = vmatpush1.bf16.msra.mxu0 %v2032
    %2702 = vmatprep.subr.bf16.mxu0 %v2037
    %2703 = vmatpush1.bf16.msra.mxu0 %v2036
    %2704 = vmatprep.mubr.bf16.mxu0 %v529
    %2705 = vmatmul.mubr.bf16.gmra.mrb[0].mxu0 %v515
    %v2706 = vpop.f32.mrb[0].mxu0
    %v2707 = vadd.f32 %v2666, %v2706
    %v2708 = vpop.f32.mrb[0].mxu0
    %v2709 = vadd.f32 %v2668, %v2708
    %v2710 = vpop.f32.mrb[0].mxu0
    %v2711 = vpop.f32.mrb[0].mxu0
    %2712 = vdwg.mxu0
    %2713 = vmatprep.subr.bf16.mxu0 %v2041
    %2714 = vmatpush1.bf16.msra.mxu0 %v2040
    %2715 = vmatprep.subr.bf16.mxu0 %v2045
    %2716 = vmatpush1.bf16.msra.mxu0 %v2044
    %2717 = vmatprep.subr.bf16.mxu0 %v2049
    %2718 = vmatpush1.bf16.msra.mxu0 %v2048
    %2719 = vmatprep.subr.bf16.mxu0 %v2053
    %2720 = vmatpush1.bf16.msra.mxu0 %v2052
    %2721 = vmatprep.subr.bf16.mxu0 %v2057
    %2722 = vmatpush1.bf16.msra.mxu0 %v2056
    %2723 = vmatprep.subr.bf16.mxu0 %v2061
    %2724 = vmatpush1.bf16.msra.mxu0 %v2060
    %2725 = vmatprep.subr.bf16.mxu0 %v2065
    %2726 = vmatpush1.bf16.msra.mxu0 %v2064
    %2727 = vmatprep.subr.bf16.mxu0 %v2069
    %2728 = vmatpush1.bf16.msra.mxu0 %v2068
    %2729 = vmatprep.subr.bf16.mxu0 %v2073
    %2730 = vmatpush1.bf16.msra.mxu0 %v2072
    %2731 = vmatprep.subr.bf16.mxu0 %v2077
    %2732 = vmatpush1.bf16.msra.mxu0 %v2076
    %2733 = vmatprep.subr.bf16.mxu0 %v2081
    %2734 = vmatpush1.bf16.msra.mxu0 %v2080
    %2735 = vmatprep.subr.bf16.mxu0 %v2085
    %2736 = vmatpush1.bf16.msra.mxu0 %v2084
    %2737 = vmatprep.subr.bf16.mxu0 %v2089
    %2738 = vmatpush1.bf16.msra.mxu0 %v2088
    %2739 = vmatprep.subr.bf16.mxu0 %v2093
    %2740 = vmatpush1.bf16.msra.mxu0 %v2092
    %2741 = vmatprep.subr.bf16.mxu0 %v2097
    %2742 = vmatpush1.bf16.msra.mxu0 %v2096
    %2743 = vmatprep.subr.bf16.mxu0 %v2101
    %2744 = vmatpush1.bf16.msra.mxu0 %v2100
    %2745 = vmatprep.mubr.bf16.mxu0 %v531
    %2746 = vmatmul.mubr.bf16.gmra.mrb[0].mxu0 %v530
    %v2747 = vpop.f32.mrb[0].mxu0
    %v2748 = vadd.f32 %v2707, %v2747
    %v2749 = vpop.f32.mrb[0].mxu0
    %v2750 = vadd.f32 %v2709, %v2749
    %v2751 = vpop.f32.mrb[0].mxu0
    %v2752 = vpop.f32.mrb[0].mxu0
    %2753 = vdwg.mxu0
    %2754 = vmatprep.subr.bf16.mxu0 %v2105
    %2755 = vmatpush1.bf16.msra.mxu0 %v2104
    %2756 = vmatprep.subr.bf16.mxu0 %v2109
    %2757 = vmatpush1.bf16.msra.mxu0 %v2108
    %2758 = vmatprep.subr.bf16.mxu0 0
    %2759 = vmatpush1.bf16.msra.mxu0 0
    %2760 = vmatprep.subr.bf16.mxu0 0
    %2761 = vmatpush1.bf16.msra.mxu0 0
    %2762 = vmatprep.subr.bf16.mxu0 0
    %2763 = vmatpush1.bf16.msra.mxu0 0
    %2764 = vmatprep.subr.bf16.mxu0 0
    %2765 = vmatpush1.bf16.msra.mxu0 0
    %2766 = vmatprep.subr.bf16.mxu0 0
    %2767 = vmatpush1.bf16.msra.mxu0 0
    %2768 = vmatprep.subr.bf16.mxu0 0
    %2769 = vmatpush1.bf16.msra.mxu0 0
    %2770 = vmatprep.subr.bf16.mxu0 0
    %2771 = vmatpush1.bf16.msra.mxu0 0
    %2772 = vmatprep.subr.bf16.mxu0 0
    %2773 = vmatpush1.bf16.msra.mxu0 0
    %2774 = vmatprep.subr.bf16.mxu0 0
    %2775 = vmatpush1.bf16.msra.mxu0 0
    %2776 = vmatprep.subr.bf16.mxu0 0
    %2777 = vmatpush1.bf16.msra.mxu0 0
    %2778 = vmatprep.subr.bf16.mxu0 0
    %2779 = vmatpush1.bf16.msra.mxu0 0
    %2780 = vmatprep.subr.bf16.mxu0 0
    %2781 = vmatpush1.bf16.msra.mxu0 0
    %2782 = vmatprep.subr.bf16.mxu0 0
    %2783 = vmatpush1.bf16.msra.mxu0 0
    %2784 = vmatprep.subr.bf16.mxu0 0
    %2785 = vmatpush1.bf16.msra.mxu0 0
    %2786 = vmatprep.mubr.bf16.mxu0 0
    %2787 = vmatmul.mubr.bf16.gmra.mrb[0].mxu0 %v2506
    %v2788 = vpop.f32.mrb[0].mxu0
    %v2789 = vadd.f32 %v2748, %v2788
    %v2790 = vpop.f32.mrb[0].mxu0
    %v2791 = vadd.f32 %v2750, %v2790
    %v2792 = vpop.f32.mrb[0].mxu0
    %v2793 = vpop.f32.mrb[0].mxu0
    %2794 = vdwg.mxu0
    %2795 = vmatprep.subr.bf16.mxu0 %v1723
    %2796 = vmatpush1.bf16.msra.mxu0 %v1722
    %2797 = vmatprep.subr.bf16.mxu0 %v1727
    %2798 = vmatpush1.bf16.msra.mxu0 %v1726
    %2799 = vmatprep.subr.bf16.mxu0 %v1731
    %2800 = vmatpush1.bf16.msra.mxu0 %v1730
    %2801 = vmatprep.subr.bf16.mxu0 %v1735
    %2802 = vmatpush1.bf16.msra.mxu0 %v1734
    %2803 = vmatprep.subr.bf16.mxu0 %v1739
    %2804 = vmatpush1.bf16.msra.mxu0 %v1738
    %2805 = vmatprep.subr.bf16.mxu0 %v1743
    %2806 = vmatpush1.bf16.msra.mxu0 %v1742
    %2807 = vmatprep.subr.bf16.mxu0 %v1747
    %2808 = vmatpush1.bf16.msra.mxu0 %v1746
    %2809 = vmatprep.subr.bf16.mxu0 %v1751
    %2810 = vmatpush1.bf16.msra.mxu0 %v1750
    %2811 = vmatprep.subr.bf16.mxu0 %v1755
    %2812 = vmatpush1.bf16.msra.mxu0 %v1754
    %2813 = vmatprep.subr.bf16.mxu0 %v1759
    %2814 = vmatpush1.bf16.msra.mxu0 %v1758
    %2815 = vmatprep.subr.bf16.mxu0 %v1763
    %2816 = vmatpush1.bf16.msra.mxu0 %v1762
    %2817 = vmatprep.subr.bf16.mxu0 %v1767
    %2818 = vmatpush1.bf16.msra.mxu0 %v1766
    %2819 = vmatprep.subr.bf16.mxu0 %v1771
    %2820 = vmatpush1.bf16.msra.mxu0 %v1770
    %2821 = vmatprep.subr.bf16.mxu0 %v1775
    %2822 = vmatpush1.bf16.msra.mxu0 %v1774
    %2823 = vmatprep.subr.bf16.mxu0 %v1779
    %2824 = vmatpush1.bf16.msra.mxu0 %v1778
    %2825 = vmatprep.subr.bf16.mxu0 %v1783
    %2826 = vmatpush1.bf16.msra.mxu0 %v1782
    %2827 = vmatprep.mubr.bf16.mxu0 %v481
    %2828 = vmatmul.mubr.bf16.gmra.mrb[0].mxu0 %v467
    %v2829 = vpop.f32.mrb[0].mxu0
    %v2830 = vadd.f32 %v433, %v2829
    %v2831 = vpop.f32.mrb[0].mxu0
    %v2832 = vadd.f32 %v437, %v2831
    %v2833 = vpop.f32.mrb[0].mxu0
    %v2834 = vpop.f32.mrb[0].mxu0
    %2835 = vdwg.mxu0
    %2836 = vmatprep.subr.bf16.mxu0 %v1787
    %2837 = vmatpush1.bf16.msra.mxu0 %v1786
    %2838 = vmatprep.subr.bf16.mxu0 %v1791
    %2839 = vmatpush1.bf16.msra.mxu0 %v1790
    %2840 = vmatprep.subr.bf16.mxu0 %v1795
    %2841 = vmatpush1.bf16.msra.mxu0 %v1794
    %2842 = vmatprep.subr.bf16.mxu0 %v1799
    %2843 = vmatpush1.bf16.msra.mxu0 %v1798
    %2844 = vmatprep.subr.bf16.mxu0 %v1803
    %2845 = vmatpush1.bf16.msra.mxu0 %v1802
    %2846 = vmatprep.subr.bf16.mxu0 %v1807
    %2847 = vmatpush1.bf16.msra.mxu0 %v1806
    %2848 = vmatprep.subr.bf16.mxu0 %v1811
    %2849 = vmatpush1.bf16.msra.mxu0 %v1810
    %2850 = vmatprep.subr.bf16.mxu0 %v1815
    %2851 = vmatpush1.bf16.msra.mxu0 %v1814
    %2852 = vmatprep.subr.bf16.mxu0 %v1819
    %2853 = vmatpush1.bf16.msra.mxu0 %v1818
    %2854 = vmatprep.subr.bf16.mxu0 %v1823
    %2855 = vmatpush1.bf16.msra.mxu0 %v1822
    %2856 = vmatprep.subr.bf16.mxu0 %v1827
    %2857 = vmatpush1.bf16.msra.mxu0 %v1826
    %2858 = vmatprep.subr.bf16.mxu0 %v1831
    %2859 = vmatpush1.bf16.msra.mxu0 %v1830
    %2860 = vmatprep.subr.bf16.mxu0 %v1835
    %2861 = vmatpush1.bf16.msra.mxu0 %v1834
    %2862 = vmatprep.subr.bf16.mxu0 %v1839
    %2863 = vmatpush1.bf16.msra.mxu0 %v1838
    %2864 = vmatprep.subr.bf16.mxu0 %v1843
    %2865 = vmatpush1.bf16.msra.mxu0 %v1842
    %2866 = vmatprep.subr.bf16.mxu0 %v1847
    %2867 = vmatpush1.bf16.msra.mxu0 %v1846
    %2868 = vmatprep.mubr.bf16.mxu0 %v491
    %2869 = vmatmul.mubr.bf16.gmra.mrb[0].mxu0 %v489
    %v2870 = vpop.f32.mrb[0].mxu0
    %v2871 = vadd.f32 %v2830, %v2870
    %v2872 = vpop.f32.mrb[0].mxu0
    %v2873 = vadd.f32 %v2832, %v2872
    %v2874 = vpop.f32.mrb[0].mxu0
    %v2875 = vpop.f32.mrb[0].mxu0
    %2876 = vdwg.mxu0
    %2877 = vmatprep.subr.bf16.mxu0 %v1851
    %2878 = vmatpush1.bf16.msra.mxu0 %v1850
    %2879 = vmatprep.subr.bf16.mxu0 %v1855
    %2880 = vmatpush1.bf16.msra.mxu0 %v1854
    %2881 = vmatprep.subr.bf16.mxu0 %v1859
    %2882 = vmatpush1.bf16.msra.mxu0 %v1858
    %2883 = vmatprep.subr.bf16.mxu0 %v1863
    %2884 = vmatpush1.bf16.msra.mxu0 %v1862
    %2885 = vmatprep.subr.bf16.mxu0 %v1867
    %2886 = vmatpush1.bf16.msra.mxu0 %v1866
    %2887 = vmatprep.subr.bf16.mxu0 %v1871
    %2888 = vmatpush1.bf16.msra.mxu0 %v1870
    %2889 = vmatprep.subr.bf16.mxu0 %v1875
    %2890 = vmatpush1.bf16.msra.mxu0 %v1874
    %2891 = vmatprep.subr.bf16.mxu0 %v1879
    %2892 = vmatpush1.bf16.msra.mxu0 %v1878
    %2893 = vmatprep.subr.bf16.mxu0 %v1883
    %2894 = vmatpush1.bf16.msra.mxu0 %v1882
    %2895 = vmatprep.subr.bf16.mxu0 %v1887
    %2896 = vmatpush1.bf16.msra.mxu0 %v1886
    %2897 = vmatprep.subr.bf16.mxu0 %v1891
    %2898 = vmatpush1.bf16.msra.mxu0 %v1890
    %2899 = vmatprep.subr.bf16.mxu0 %v1895
    %2900 = vmatpush1.bf16.msra.mxu0 %v1894
    %2901 = vmatprep.subr.bf16.mxu0 %v1899
    %2902 = vmatpush1.bf16.msra.mxu0 %v1898
    %2903 = vmatprep.subr.bf16.mxu0 %v1903
    %2904 = vmatpush1.bf16.msra.mxu0 %v1902
    %2905 = vmatprep.subr.bf16.mxu0 %v1907
    %2906 = vmatpush1.bf16.msra.mxu0 %v1906
    %2907 = vmatprep.subr.bf16.mxu0 %v1911
    %2908 = vmatpush1.bf16.msra.mxu0 %v1910
    %2909 = vmatprep.mubr.bf16.mxu0 %v488
    %2910 = vmatmul.mubr.bf16.gmra.mrb[0].mxu0 %v474
    %v2911 = vpop.f32.mrb[0].mxu0
    %v2912 = vadd.f32 %v2871, %v2911
    %v2913 = vpop.f32.mrb[0].mxu0
    %v2914 = vadd.f32 %v2873, %v2913
    %v2915 = vpop.f32.mrb[0].mxu0
    %v2916 = vpop.f32.mrb[0].mxu0
    %2917 = vdwg.mxu0
    %2918 = vmatprep.subr.bf16.mxu0 %v1915
    %2919 = vmatpush1.bf16.msra.mxu0 %v1914
    %2920 = vmatprep.subr.bf16.mxu0 %v1919
    %2921 = vmatpush1.bf16.msra.mxu0 %v1918
    %2922 = vmatprep.subr.bf16.mxu0 %v1923
    %2923 = vmatpush1.bf16.msra.mxu0 %v1922
    %2924 = vmatprep.subr.bf16.mxu0 %v1927
    %2925 = vmatpush1.bf16.msra.mxu0 %v1926
    %2926 = vmatprep.subr.bf16.mxu0 %v1931
    %2927 = vmatpush1.bf16.msra.mxu0 %v1930
    %2928 = vmatprep.subr.bf16.mxu0 %v1935
    %2929 = vmatpush1.bf16.msra.mxu0 %v1934
    %2930 = vmatprep.subr.bf16.mxu0 %v1939
    %2931 = vmatpush1.bf16.msra.mxu0 %v1938
    %2932 = vmatprep.subr.bf16.mxu0 %v1943
    %2933 = vmatpush1.bf16.msra.mxu0 %v1942
    %2934 = vmatprep.subr.bf16.mxu0 %v1947
    %2935 = vmatpush1.bf16.msra.mxu0 %v1946
    %2936 = vmatprep.subr.bf16.mxu0 %v1951
    %2937 = vmatpush1.bf16.msra.mxu0 %v1950
    %2938 = vmatprep.subr.bf16.mxu0 %v1955
    %2939 = vmatpush1.bf16.msra.mxu0 %v1954
    %2940 = vmatprep.subr.bf16.mxu0 %v1959
    %2941 = vmatpush1.bf16.msra.mxu0 %v1958
    %2942 = vmatprep.subr.bf16.mxu0 %v1963
    %2943 = vmatpush1.bf16.msra.mxu0 %v1962
    %2944 = vmatprep.subr.bf16.mxu0 %v1967
    %2945 = vmatpush1.bf16.msra.mxu0 %v1966
    %2946 = vmatprep.subr.bf16.mxu0 %v1971
    %2947 = vmatpush1.bf16.msra.mxu0 %v1970
    %2948 = vmatprep.subr.bf16.mxu0 %v1975
    %2949 = vmatpush1.bf16.msra.mxu0 %v1974
    %2950 = vmatprep.mubr.bf16.mxu0 %v492
    %2951 = vmatmul.mubr.bf16.gmra.mrb[0].mxu0 %v490
    %v2952 = vpop.f32.mrb[0].mxu0
    %v2953 = vadd.f32 %v2912, %v2952
    %v2954 = vpop.f32.mrb[0].mxu0
    %v2955 = vadd.f32 %v2914, %v2954
    %v2956 = vpop.f32.mrb[0].mxu0
    %v2957 = vpop.f32.mrb[0].mxu0
    %2958 = vdwg.mxu0
    %2959 = vmatprep.subr.bf16.mxu0 %v1979
    %2960 = vmatpush1.bf16.msra.mxu0 %v1978
    %2961 = vmatprep.subr.bf16.mxu0 %v1983
    %2962 = vmatpush1.bf16.msra.mxu0 %v1982
    %2963 = vmatprep.subr.bf16.mxu0 %v1987
    %2964 = vmatpush1.bf16.msra.mxu0 %v1986
    %2965 = vmatprep.subr.bf16.mxu0 %v1991
    %2966 = vmatpush1.bf16.msra.mxu0 %v1990
    %2967 = vmatprep.subr.bf16.mxu0 %v1995
    %2968 = vmatpush1.bf16.msra.mxu0 %v1994
    %2969 = vmatprep.subr.bf16.mxu0 %v1999
    %2970 = vmatpush1.bf16.msra.mxu0 %v1998
    %2971 = vmatprep.subr.bf16.mxu0 %v2003
    %2972 = vmatpush1.bf16.msra.mxu0 %v2002
    %2973 = vmatprep.subr.bf16.mxu0 %v2007
    %2974 = vmatpush1.bf16.msra.mxu0 %v2006
    %2975 = vmatprep.subr.bf16.mxu0 %v2011
    %2976 = vmatpush1.bf16.msra.mxu0 %v2010
    %2977 = vmatprep.subr.bf16.mxu0 %v2015
    %2978 = vmatpush1.bf16.msra.mxu0 %v2014
    %2979 = vmatprep.subr.bf16.mxu0 %v2019
    %2980 = vmatpush1.bf16.msra.mxu0 %v2018
    %2981 = vmatprep.subr.bf16.mxu0 %v2023
    %2982 = vmatpush1.bf16.msra.mxu0 %v2022
    %2983 = vmatprep.subr.bf16.mxu0 %v2027
    %2984 = vmatpush1.bf16.msra.mxu0 %v2026
    %2985 = vmatprep.subr.bf16.mxu0 %v2031
    %2986 = vmatpush1.bf16.msra.mxu0 %v2030
    %2987 = vmatprep.subr.bf16.mxu0 %v2035
    %2988 = vmatpush1.bf16.msra.mxu0 %v2034
    %2989 = vmatprep.subr.bf16.mxu0 %v2039
    %2990 = vmatpush1.bf16.msra.mxu0 %v2038
    %2991 = vmatprep.mubr.bf16.mxu0 %v529
    %2992 = vmatmul.mubr.bf16.gmra.mrb[0].mxu0 %v515
    %v2993 = vpop.f32.mrb[0].mxu0
    %v2994 = vadd.f32 %v2953, %v2993
    %v2995 = vpop.f32.mrb[0].mxu0
    %v2996 = vadd.f32 %v2955, %v2995
    %v2997 = vpop.f32.mrb[0].mxu0
    %v2998 = vpop.f32.mrb[0].mxu0
    %2999 = vdwg.mxu0
    %3000 = vmatprep.subr.bf16.mxu0 %v2043
    %3001 = vmatpush1.bf16.msra.mxu0 %v2042
    %3002 = vmatprep.subr.bf16.mxu0 %v2047
    %3003 = vmatpush1.bf16.msra.mxu0 %v2046
    %3004 = vmatprep.subr.bf16.mxu0 %v2051
    %3005 = vmatpush1.bf16.msra.mxu0 %v2050
    %3006 = vmatprep.subr.bf16.mxu0 %v2055
    %3007 = vmatpush1.bf16.msra.mxu0 %v2054
    %3008 = vmatprep.subr.bf16.mxu0 %v2059
    %3009 = vmatpush1.bf16.msra.mxu0 %v2058
    %3010 = vmatprep.subr.bf16.mxu0 %v2063
    %3011 = vmatpush1.bf16.msra.mxu0 %v2062
    %3012 = vmatprep.subr.bf16.mxu0 %v2067
    %3013 = vmatpush1.bf16.msra.mxu0 %v2066
    %3014 = vmatprep.subr.bf16.mxu0 %v2071
    %3015 = vmatpush1.bf16.msra.mxu0 %v2070
    %3016 = vmatprep.subr.bf16.mxu0 %v2075
    %3017 = vmatpush1.bf16.msra.mxu0 %v2074
    %3018 = vmatprep.subr.bf16.mxu0 %v2079
    %3019 = vmatpush1.bf16.msra.mxu0 %v2078
    %3020 = vmatprep.subr.bf16.mxu0 %v2083
    %3021 = vmatpush1.bf16.msra.mxu0 %v2082
    %3022 = vmatprep.subr.bf16.mxu0 %v2087
    %3023 = vmatpush1.bf16.msra.mxu0 %v2086
    %3024 = vmatprep.subr.bf16.mxu0 %v2091
    %3025 = vmatpush1.bf16.msra.mxu0 %v2090
    %3026 = vmatprep.subr.bf16.mxu0 %v2095
    %3027 = vmatpush1.bf16.msra.mxu0 %v2094
    %3028 = vmatprep.subr.bf16.mxu0 %v2099
    %3029 = vmatpush1.bf16.msra.mxu0 %v2098
    %3030 = vmatprep.subr.bf16.mxu0 %v2103
    %3031 = vmatpush1.bf16.msra.mxu0 %v2102
    %3032 = vmatprep.mubr.bf16.mxu0 %v531
    %3033 = vmatmul.mubr.bf16.gmra.mrb[0].mxu0 %v530
    %v3034 = vpop.f32.mrb[0].mxu0
    %v3035 = vadd.f32 %v2994, %v3034
    %v3036 = vpop.f32.mrb[0].mxu0
    %v3037 = vadd.f32 %v2996, %v3036
    %v3038 = vpop.f32.mrb[0].mxu0
    %v3039 = vpop.f32.mrb[0].mxu0
    %3040 = vdwg.mxu0
    %3041 = vmatprep.subr.bf16.mxu0 %v2107
    %3042 = vmatpush1.bf16.msra.mxu0 %v2106
    %3043 = vmatprep.subr.bf16.mxu0 %v2111
    %3044 = vmatpush1.bf16.msra.mxu0 %v2110
    %3045 = vmatprep.subr.bf16.mxu0 0
    %3046 = vmatpush1.bf16.msra.mxu0 0
    %3047 = vmatprep.subr.bf16.mxu0 0
    %3048 = vmatpush1.bf16.msra.mxu0 0
    %3049 = vmatprep.subr.bf16.mxu0 0
    %3050 = vmatpush1.bf16.msra.mxu0 0
    %3051 = vmatprep.subr.bf16.mxu0 0
    %3052 = vmatpush1.bf16.msra.mxu0 0
    %3053 = vmatprep.subr.bf16.mxu0 0
    %3054 = vmatpush1.bf16.msra.mxu0 0
    %3055 = vmatprep.subr.bf16.mxu0 0
    %3056 = vmatpush1.bf16.msra.mxu0 0
    %3057 = vmatprep.subr.bf16.mxu0 0
    %3058 = vmatpush1.bf16.msra.mxu0 0
    %3059 = vmatprep.subr.bf16.mxu0 0
    %3060 = vmatpush1.bf16.msra.mxu0 0
    %3061 = vmatprep.subr.bf16.mxu0 0
    %3062 = vmatpush1.bf16.msra.mxu0 0
    %3063 = vmatprep.subr.bf16.mxu0 0
    %3064 = vmatpush1.bf16.msra.mxu0 0
    %3065 = vmatprep.subr.bf16.mxu0 0
    %3066 = vmatpush1.bf16.msra.mxu0 0
    %3067 = vmatprep.subr.bf16.mxu0 0
    %3068 = vmatpush1.bf16.msra.mxu0 0
    %3069 = vmatprep.subr.bf16.mxu0 0
    %3070 = vmatpush1.bf16.msra.mxu0 0
    %3071 = vmatprep.subr.bf16.mxu0 0
    %3072 = vmatpush1.bf16.msra.mxu0 0
    %3073 = vmatprep.mubr.bf16.mxu0 0
    %3074 = vmatmul.mubr.bf16.gmra.mrb[0].mxu0 %v2506
    %v3075 = vpop.f32.mrb[0].mxu0
    %v3076 = vadd.f32 %v3035, %v3075
    %v3077 = vpop.f32.mrb[0].mxu0
    %v3078 = vadd.f32 %v3037, %v3077
    %v3079 = vpop.f32.mrb[0].mxu0
    %v3080 = vpop.f32.mrb[0].mxu0
    %3081 = vdwg.mxu0
    %v3082 = vmax.f32 %v2789, 0.0
    %v3083 = vmax.f32 %v2791, 0.0
    %v3084 = vmax.f32 %v3076, 0.0
    %v3085 = vmax.f32 %v3078, 0.0
    %v3090 = vcombine.low %v3082, %v3083
    %v3091 = vcombine.low %v3084, %v3085
    %v3093 = vunpack.c.l.s4 1983009808
    %v3094 = vunpack.c.0.s8 %v3093
    %v3095 = vlaneseq
    %v3096 = vshrl.u32 %v3095, 7
    %v3097 = vsub.s32 %v3094, %v3096
    %v3098 = vrot.slane %v3090, %v3097
    %v3100 = vunpack.c.l.s4 1983009808
    %v3101 = vunpack.c.0.s8 %v3100
    %v3102 = vlaneseq
    %v3103 = vshrl.u32 %v3102, 7
    %v3104 = vsub.s32 %v3101, %v3103
    %v3105 = vrot.slane %v3091, %v3104
    %v3106 = vcombine.low %v3098, %v3105
    %3108 = vst [vmem:[#allocation3] sm:$0xff] %v3106
    %v3109 = vld [vmem:[%s3] sm:$0xf]
    %v3111 = vlaneseq
    %v3112 = vshrl.u32 %v3111, 7
    %v3113 = vsub.s32 0, %v3112
    %v3114 = vrot.slane %v3109, %v3113
    %v3115 = vlaneseq
    %v3116 = vshrl.u32 %v3115, 7
    %v3117 = vsub.s32 1, %v3116
    %v3118 = vrot.slane %v3109, %v3117
    %v3119 = vlaneseq
    %v3120 = vshrl.u32 %v3119, 7
    %v3121 = vsub.s32 2, %v3120
    %v3122 = vrot.slane %v3109, %v3121
    %v3123 = vlaneseq
    %v3124 = vshrl.u32 %v3123, 7
    %v3125 = vsub.s32 3, %v3124
    %v3126 = vrot.slane %v3109, %v3125
    %v3131 = vmul.f32 %v3082, %v3114
    %v3132 = vmul.f32 %v3083, %v3118
    %v3133 = vmul.f32 %v3084, %v3122
    %v3134 = vmul.f32 %v3085, %v3126
    %vm3135 = vcmask 1041408
    %v3136 = vsel %vm3135, %v3131, 0.0
    %v3137 = vsel %vm3135, %v3132, 0.0
    %v3138 = vadd.f32 %v3136, %v3137
    %v3139 = vsel %vm3135, %v3133, 0.0
    %v3140 = vadd.f32 %v3138, %v3139
    %v3141 = vsel %vm3135, %v3134, 0.0
    %v3142 = vadd.f32 %v3140, %v3141
    %3143 = vadd.xlane.f32.xlu0 %v3142
    %v3144 = vpop.xlane.xlu0 %3143
    %v3145 = vld [vmem:[#allocation2] sm:$0x1]
    %v3147 = vlaneseq
    %v3148 = vshrl.u32 %v3147, 7
    %v3149 = vsub.s32 0, %v3148
    %v3150 = vrot.slane %v3145, %v3149
    %v3152 = vadd.f32 %v3144, %v3150
    %vm3153 = vcmask 1024
    %3154 = vst.msk [vmem:[%s6] sm:$0x3] %vm3153, %v3152
    // Predicated region
    $region22: #{cnn_policy_forward.7} parent=1 // pred_check
      _
    $region23: #{cnn_policy_forward.7} parent=1 // pred_check_branch
      %3156 = sbr.rel (0) target = $region25
    $region24: #{cnn_policy_forward.7} parent=1 // pred_region
      %s3158 = ssub.s32 128, 128
      %3159 = vsyncadd [#allocation4], %s3158
      %s3161 = sshll.u32 [#allocation3], 4
      %s3162 = int_to_ptr.vmem [resolvable:$true] %s3161
      %3164 = dma.vmem_to_hbm [thread:$0]  %s3162, 128, %s5, [#allocation4]
    $region25: #{cnn_policy_forward.7} parent=1 // pred_fallthru
      _
    // Predicated region
    $region26: #{cnn_policy_forward.7} parent=1 // pred_check
      _
    $region27: #{cnn_policy_forward.7} parent=1 // pred_check_branch
      %3166 = sbr.rel (0) target = $region29
    $region28: #{cnn_policy_forward.7} parent=1 // pred_region
      _
    $region29: #{cnn_policy_forward.7} parent=1 // pred_fallthru
      _
    // Predicated region
    $region30: #{cnn_policy_forward.7} parent=1 // pred_check
      _
    $region31: #{cnn_policy_forward.7} parent=1 // pred_check_branch
      %3168 = sbr.rel (0) target = $region33
    $region32: #{cnn_policy_forward.7} parent=1 // pred_region
      %3169 = dma.done [#allocation4], 128
    $region33: #{cnn_policy_forward.7} parent=1 // pred_fallthru
      _
    // Predicated region
    $region34: #{cnn_policy_forward.7} parent=1 // pred_check
      _
    $region35: #{cnn_policy_forward.7} parent=1 // pred_check_branch
      %3171 = sbr.rel (0) target = $region37
    $region36: #{cnn_policy_forward.7} parent=1 // pred_region
      _
    $region37: #{cnn_policy_forward.7} parent=1 // pred_fallthru
      _
    %3172 = vsyncpa [#allocation4], 1

</llo_original>
